<compile_context>
chip_gen: v7x
topology: tpu7x:2x2x1
jax: 0.10.0
libtpu: 0.0.40
codegen_flags: <defaults>
</compile_context>

<pallas_src>
import jax
import jax.numpy as jnp
from jax import lax
from jax.experimental import pallas as pl
from jax.experimental.pallas import tpu as pltpu


# ----------------------------------------------------------------------------
# Fused kernel: one grid step == B_TILE batch elements.
# ----------------------------------------------------------------------------
def _make_kernel(B_TILE):
    f32 = jnp.float32
    bf16 = jnp.bfloat16

    def kernel(a1_ref,             # [B_TILE*144, 25] bf16; row = b*144 + oh*12 + ow
               w1c_ref, b1_ref,    # [25, 6] bf16, [1, 6] f32
               w2b_ref, b2_ref,    # [25, 6, 12] bf16 (tap-major), [1, 12] f32
               wf1b_ref, bf1_ref,  # [16, 12, 120] bf16 (per-(p,q) blocks), [1, 120] f32
               wf2_ref, bf2_ref,   # [120, 60] bf16, [1, 60] f32
               wf3_ref, bf3_ref,   # [60, 10] bf16, [1, 10] f32
               o_ref,              # [B_TILE, 10] f32
               h1_scr,             # VMEM (160, 6) f32: per-image conv1 grid + pad
               h2_scr,             # VMEM (96, 12) f32: per-image conv2 grid (12-wide rows)
               pool_scr):          # VMEM (16*B_TILE, 12) f32: pooled, row = pq*B_TILE + b
        # Zero the h1 padding rows once per step: the shifted conv2 slices read up
        # to row 147; those rows only feed pool-unused outputs (zeroed for
        # determinism, not correctness).
        h1_scr[pl.ds(144, 16), :] = jnp.zeros((16, 6), f32)

        def per_image(b, carry):
            # ---- conv1 (+bias, ReLU); max_pool2d(kernel_size=1) is the identity --
            base = pl.multiple_of(b * 144, 16)
            a1 = a1_ref[pl.ds(base, 144), :]                              # [144, 25]
            h1 = jnp.dot(a1, w1c_ref[...], preferred_element_type=f32) + b1_ref[...]
            h1_scr[pl.ds(0, 144), :] = jnp.maximum(h1, 0.0)               # [144, 6]

            # ---- conv2 (+bias, ReLU): 25 contiguous shifted-slice matmuls --------
            # acc row r = oh*12 + ow is the conv2 output at (oh, ow); rows with
            # ow >= 8 are junk (row wrap / pad reads) and are never read below.
            acc = jnp.zeros((96, 12), f32)
            for t in range(25):
                off = (t // 5) * 12 + (t % 5)                             # ky*12 + kx
                lhs = h1_scr[pl.ds(off, 96), :].astype(bf16)              # [96, 6]
                acc = acc + jnp.dot(lhs, w2b_ref[t], preferred_element_type=f32)
            h2_scr[...] = jnp.maximum(acc + b2_ref[...], 0.0)             # [96, 12]

            # ---- 2x2 max pool -> pool_scr row (p*4+q)*B_TILE + b ------------------
            for p in range(4):
                for q in range(4):
                    r = 24 * p + 2 * q
                    v = jnp.maximum(
                        jnp.maximum(h2_scr[pl.ds(r, 1), :],
                                    h2_scr[pl.ds(r + 1, 1), :]),
                        jnp.maximum(h2_scr[pl.ds(r + 12, 1), :],
                                    h2_scr[pl.ds(r + 13, 1), :]))         # [1, 12]
                    pool_scr[pl.ds((p * 4 + q) * B_TILE + b, 1), :] = v
            return carry

        lax.fori_loop(0, B_TILE, per_image, 0)

        # ---- fc1 as 16 batched matmuls (M = B_TILE) over the (p,q) blocks --------
        accf = jnp.zeros((B_TILE, 120), f32)
        for pq in range(16):
            lhs = pool_scr[pl.ds(pq * B_TILE, B_TILE), :].astype(bf16)    # [B_TILE, 12]
            accf = accf + jnp.dot(lhs, wf1b_ref[pq], preferred_element_type=f32)
        h3 = jnp.maximum(accf + bf1_ref[...], 0.0)                        # [B_TILE, 120]
        h4 = jnp.maximum(
            jnp.dot(h3.astype(bf16), wf2_ref[...], preferred_element_type=f32)
            + bf2_ref[...], 0.0)                                          # [B_TILE, 60]
        # 10-lane output write is masked, but it happens once per B_TILE images.
        o_ref[...] = (jnp.dot(h4.astype(bf16), wf3_ref[...],
                              preferred_element_type=f32) + bf3_ref[...])

    return kernel


# ----------------------------------------------------------------------------
# One-time weight relayout / bf16 cast (done at init, not per forward).
# ----------------------------------------------------------------------------
def prepare_params(p):
    bf16 = jnp.bfloat16
    f32 = jnp.float32
    return {
        # conv1: rows = ky*5 + kx
        "w1c": p["conv1_w"].reshape(6, 25).T.astype(bf16),                    # [25, 6]
        "b1":  p["conv1_b"].reshape(1, 6).astype(f32),
        # conv2: [tap, c_in, c_out] with tap = ky*5 + kx
        "w2b": p["conv2_w"].transpose(2, 3, 1, 0).reshape(25, 6, 12).astype(bf16),
        "b2":  p["conv2_b"].reshape(1, 12).astype(f32),
        # fc1 split into 16 per-(p,q) blocks: wf1b[p*4+q][c, o] = fc1_w[o, c*16 + p*4+q]
        "wf1b": p["fc1_w"].reshape(120, 12, 16).transpose(2, 1, 0).astype(bf16),
        "bf1": p["fc1_b"].reshape(1, 120).astype(f32),
        "wf2": p["fc2_w"].T.astype(bf16),                                     # [120, 60]
        "bf2": p["fc2_b"].reshape(1, 60).astype(f32),
        "wf3": p["out_w"].T.astype(bf16),                                     # [60, 10]
        "bf3": p["out_b"].reshape(1, 10).astype(f32),
    }


_W_ORDER = ("w1c", "b1", "w2b", "b2", "wf1b", "bf1", "wf2", "bf2", "wf3", "bf3")


def _full_spec(arr):
    nd = arr.ndim
    return pl.BlockSpec(arr.shape, lambda i, _nd=nd: (0,) * _nd)


# ----------------------------------------------------------------------------
# Jitted forward: im2col glue + single fused, batch-blocked pallas_call.
# ----------------------------------------------------------------------------
@jax.jit
def network_forward(x, w):
    """x: [B, 1, 16, 16] float32 NCHW; w: output of prepare_params()."""
    B = x.shape[0]
    # Tile choice: >=8 (sublane alignment), <=64, and for B > 8 at most half the
    # padded batch so the grid keeps >=2 steps (both v7x TCs busy).
    if B <= 8:
        b_tile = 8
    else:
        bp2 = 1 << (B - 1).bit_length()
        b_tile = max(8, min(64, bp2 // 2))
    b_pad = pl.cdiv(B, b_tile) * b_tile
    if b_pad != B:
        x = jnp.pad(x, ((0, b_pad - B), (0, 0), (0, 0), (0, 0)))

    xs = x[:, 0]                                                     # [b_pad, 16, 16]
    # im2col for conv1 (layout glue, fused by XLA under jit); feature = ky*5 + kx.
    cols = [xs[:, ky:ky + 12, kx:kx + 12] for ky in range(5) for kx in range(5)]
    a1 = jnp.stack(cols, axis=-1).reshape(b_pad * 144, 25).astype(jnp.bfloat16)

    out = pl.pallas_call(
        _make_kernel(b_tile),
        out_shape=jax.ShapeDtypeStruct((b_pad, 10), jnp.float32),
        grid=(b_pad // b_tile,),
        in_specs=[pl.BlockSpec((b_tile * 144, 25), lambda i: (i, 0))]
                 + [_full_spec(w[k]) for k in _W_ORDER],
        out_specs=pl.BlockSpec((b_tile, 10), lambda i: (i, 0)),
        scratch_shapes=[pltpu.VMEM((160, 6), jnp.float32),
                        pltpu.VMEM((96, 12), jnp.float32),
                        pltpu.VMEM((16 * b_tile, 12), jnp.float32)],
        compiler_params=pltpu.CompilerParams(
            dimension_semantics=("parallel",)),     # batch axis shards across TCs
    )(a1, *(w[k] for k in _W_ORDER))
    return out[:B]


# ----------------------------------------------------------------------------
# Params + independent pure-JAX reference (lax conv, HIGHEST precision).
# ----------------------------------------------------------------------------
def init_params(key):
    ks = jax.random.split(key, 10)
    s = 0.1
    return {
        "conv1_w": s * jax.random.normal(ks[0], (6, 1, 5, 5), jnp.float32),
        "conv1_b": s * jax.random.normal(ks[1], (6,), jnp.float32),
        "conv2_w": s * jax.random.normal(ks[2], (12, 6, 5, 5), jnp.float32),
        "conv2_b": s * jax.random.normal(ks[3], (12,), jnp.float32),
        "fc1_w":   s * jax.random.normal(ks[4], (120, 192), jnp.float32),
        "fc1_b":   s * jax.random.normal(ks[5], (120,), jnp.float32),
        "fc2_w":   s * jax.random.normal(ks[6], (60, 120), jnp.float32),
        "fc2_b":   s * jax.random.normal(ks[7], (60,), jnp.float32),
        "out_w":   s * jax.random.normal(ks[8], (10, 60), jnp.float32),
        "out_b":   s * jax.random.normal(ks[9], (10,), jnp.float32),
    }


def reference_forward(x, p):
    hp = lax.Precision.HIGHEST
    dn = ("NCHW", "OIHW", "NCHW")
    B = x.shape[0]
    t = lax.conv_general_dilated(x, p["conv1_w"], (1, 1), "VALID",
                                 dimension_numbers=dn, precision=hp)
    t = jnp.maximum(t + p["conv1_b"][None, :, None, None], 0.0)     # pool(k=1) = identity
    t = lax.conv_general_dilated(t, p["conv2_w"], (1, 1), "VALID",
                                 dimension_numbers=dn, precision=hp)
    t = jnp.maximum(t + p["conv2_b"][None, :, None, None], 0.0)     # [B,12,8,8]
    t = t.reshape(B, 12, 4, 2, 4, 2).max(axis=(3, 5)).reshape(B, 192)
    t = jnp.maximum(jnp.dot(t, p["fc1_w"].T, precision=hp) + p["fc1_b"], 0.0)
    t = jnp.maximum(jnp.dot(t, p["fc2_w"].T, precision=hp) + p["fc2_b"], 0.0)
    return jnp.dot(t, p["out_w"].T, precision=hp) + p["out_b"]


if __name__ == "__main__":
    key = jax.random.PRNGKey(0)
    pkey, xkey, xkey2 = jax.random.split(key, 3)
    params = init_params(pkey)
    weights = prepare_params(params)

    # fc1 = Linear(12*4*4, 120) implies 16x16 spatial input (see header note).
    x = jax.random.normal(xkey, (2, 1, 16, 16), jnp.float32)
    out = jax.block_until_ready(network_forward(x, weights))
    ref = jax.block_until_ready(reference_forward(x, params))
    assert out.shape == (2, 10), out.shape
    # bf16 weights/activations on the MXU vs a HIGHEST-precision f32 reference.
    assert bool(jnp.allclose(out, ref, rtol=1e-2, atol=3e-2)), "mismatch vs reference (B=2)"

    # Exercise batch padding + a multi-step 'parallel' grid (B=100 -> tiles of 64).
    xb = jax.random.normal(xkey2, (100, 1, 16, 16), jnp.float32)
    outb = jax.block_until_ready(network_forward(xb, weights))
    refb = jax.block_until_ready(reference_forward(xb, params))
    assert outb.shape == (100, 10), outb.shape
    assert bool(jnp.allclose(outb, refb, rtol=1e-2, atol=3e-2)), "mismatch vs reference (B=100)"

    print("KERNEL_OK")
</pallas_src>

<mosaic_0001>
module attributes {stable_mosaic.version = 11 : i64} {
  func.func @kernel(%arg0: i32, %arg1: memref<1152x25xbf16, #tpu.memory_space<vmem>>, %arg2: memref<25x6xbf16, #tpu.memory_space<vmem>>, %arg3: memref<1x6xf32, #tpu.memory_space<vmem>>, %arg4: memref<25x6x12xbf16, #tpu.memory_space<vmem>>, %arg5: memref<1x12xf32, #tpu.memory_space<vmem>>, %arg6: memref<16x12x120xbf16, #tpu.memory_space<vmem>>, %arg7: memref<1x120xf32, #tpu.memory_space<vmem>>, %arg8: memref<120x60xbf16, #tpu.memory_space<vmem>>, %arg9: memref<1x60xf32, #tpu.memory_space<vmem>>, %arg10: memref<60x10xbf16, #tpu.memory_space<vmem>>, %arg11: memref<1x10xf32, #tpu.memory_space<vmem>>, %arg12: memref<8x10xf32, #tpu.memory_space<vmem>>, %arg13: memref<160x6xf32, #tpu.memory_space<vmem>>, %arg14: memref<96x12xf32, #tpu.memory_space<vmem>>, %arg15: memref<128x12xf32, #tpu.memory_space<vmem>>) attributes {dimension_semantics = [#tpu.dimension_semantics<parallel>], iteration_bounds = array<i64: 1>, scalar_prefetch = 0 : i64, scratch_operands = 3 : i64, tpu.core_type = #tpu.core_type<tc>, window_params = [{transform_indices = @transform_0, window_bounds = array<i64: 1152, 25>}, {pipeline_mode = #tpu.pipeline_mode<synchronous>, transform_indices = @transform_1, window_bounds = array<i64: 25, 6>}, {pipeline_mode = #tpu.pipeline_mode<synchronous>, transform_indices = @transform_2, window_bounds = array<i64: 1, 6>}, {pipeline_mode = #tpu.pipeline_mode<synchronous>, transform_indices = @transform_3, window_bounds = array<i64: 25, 6, 12>}, {pipeline_mode = #tpu.pipeline_mode<synchronous>, transform_indices = @transform_4, window_bounds = array<i64: 1, 12>}, {pipeline_mode = #tpu.pipeline_mode<synchronous>, transform_indices = @transform_5, window_bounds = array<i64: 16, 12, 120>}, {pipeline_mode = #tpu.pipeline_mode<synchronous>, transform_indices = @transform_6, window_bounds = array<i64: 1, 120>}, {pipeline_mode = #tpu.pipeline_mode<synchronous>, transform_indices = @transform_7, window_bounds = array<i64: 120, 60>}, {pipeline_mode = #tpu.pipeline_mode<synchronous>, transform_indices = @transform_8, window_bounds = array<i64: 1, 60>}, {pipeline_mode = #tpu.pipeline_mode<synchronous>, transform_indices = @transform_9, window_bounds = array<i64: 60, 10>}, {pipeline_mode = #tpu.pipeline_mode<synchronous>, transform_indices = @transform_10, window_bounds = array<i64: 1, 10>}, {transform_indices = @transform_11, window_bounds = array<i64: 8, 10>}]} {
    %cst = arith.constant 0.000000e+00 : f32
    %0 = vector.broadcast %cst : f32 to vector<16x6xf32>
    %c144 = arith.constant 144 : index
    %c0 = arith.constant 0 : index
    %1 = vector.load %arg13[%c144, %c0] : memref<160x6xf32, #tpu.memory_space<vmem>>, vector<16x6xf32>
    tpu.vector_store %arg13[%c144, %c0], %0 {strides = array<i32>} : memref<160x6xf32, #tpu.memory_space<vmem>>, vector<16x6xf32>,
    %c0_i32 = arith.constant 0 : i32
    %c8_i32 = arith.constant 8 : i32
    %2 = arith.addi %c0_i32, %c8_i32 : i32
    %c1_i32 = arith.constant 1 : i32
    scf.for %arg16 = %c0_i32 to %2 step %c1_i32  : i32 {
      %c144_i32 = arith.constant 144 : i32
      %120 = arith.muli %arg16, %c144_i32 : i32
      %121 = tpu.assume_multiple %120, 16 : i32
      %122 = arith.index_cast %121 : i32 to index
      %c0_85 = arith.constant 0 : index
      %123 = vector.load %arg1[%122, %c0_85] : memref<1152x25xbf16, #tpu.memory_space<vmem>>, vector<144x25xbf16>
      %c0_86 = arith.constant 0 : index
      %c0_87 = arith.constant 0 : index
      %124 = vector.load %arg2[%c0_86, %c0_87] : memref<25x6xbf16, #tpu.memory_space<vmem>>, vector<25x6xbf16>
      %cst_88 = arith.constant dense<0.000000e+00> : vector<144x6xf32>
      %125 = tpu.matmul %123, %124, %cst_88 {dimension_numbers = #tpu.dot_dimension_numbers<[1], [0], [0], [1], [0, 0, 1, 1], [], []>} : vector<144x25xbf16>, vector<25x6xbf16>, vector<144x6xf32> -> vector<144x6xf32>
      %c0_89 = arith.constant 0 : index
      %c0_90 = arith.constant 0 : index
      %126 = vector.load %arg3[%c0_89, %c0_90] : memref<1x6xf32, #tpu.memory_space<vmem>>, vector<1x6xf32>
      %127 = vector.broadcast %126 : vector<1x6xf32> to vector<144x6xf32>
      %128 = arith.addf %125, %127 : vector<144x6xf32>
      %cst_91 = arith.constant 0.000000e+00 : f32
      %129 = vector.broadcast %cst_91 : f32 to vector<144x6xf32>
      %130 = arith.maximumf %128, %129 : vector<144x6xf32>
      %c0_92 = arith.constant 0 : index
      %c0_93 = arith.constant 0 : index
      %131 = vector.load %arg13[%c0_92, %c0_93] : memref<160x6xf32, #tpu.memory_space<vmem>>, vector<144x6xf32>
      tpu.vector_store %arg13[%c0_92, %c0_93], %130 {strides = array<i32>} : memref<160x6xf32, #tpu.memory_space<vmem>>, vector<144x6xf32>,
      %cst_94 = arith.constant 0.000000e+00 : f32
      %132 = vector.broadcast %cst_94 : f32 to vector<96x12xf32>
      %c0_95 = arith.constant 0 : index
      %c0_96 = arith.constant 0 : index
      %133 = vector.load %arg13[%c0_95, %c0_96] : memref<160x6xf32, #tpu.memory_space<vmem>>, vector<96x6xf32>
      %134 = arith.truncf %133 : vector<96x6xf32> to vector<96x6xbf16>
      %c0_97 = arith.constant 0 : index
      %c0_98 = arith.constant 0 : index
      %c0_99 = arith.constant 0 : index
      %135 = vector.load %arg4[%c0_97, %c0_98, %c0_99] : memref<25x6x12xbf16, #tpu.memory_space<vmem>>, vector<1x6x12xbf16>
      %136 = vector.shape_cast %135 : vector<1x6x12xbf16> to vector<6x12xbf16>
      %cst_100 = arith.constant dense<0.000000e+00> : vector<96x12xf32>
      %137 = tpu.matmul %134, %136, %cst_100 {dimension_numbers = #tpu.dot_dimension_numbers<[1], [0], [0], [1], [0, 0, 1, 1], [], []>} : vector<96x6xbf16>, vector<6x12xbf16>, vector<96x12xf32> -> vector<96x12xf32>
      %138 = arith.addf %132, %137 : vector<96x12xf32>
      %c1_101 = arith.constant 1 : index
      %c0_102 = arith.constant 0 : index
      %139 = vector.load %arg13[%c1_101, %c0_102] : memref<160x6xf32, #tpu.memory_space<vmem>>, vector<96x6xf32>
      %140 = arith.truncf %139 : vector<96x6xf32> to vector<96x6xbf16>
      %c1_103 = arith.constant 1 : index
      %c0_104 = arith.constant 0 : index
      %c0_105 = arith.constant 0 : index
      %141 = vector.load %arg4[%c1_103, %c0_104, %c0_105] : memref<25x6x12xbf16, #tpu.memory_space<vmem>>, vector<1x6x12xbf16>
      %142 = vector.shape_cast %141 : vector<1x6x12xbf16> to vector<6x12xbf16>
      %cst_106 = arith.constant dense<0.000000e+00> : vector<96x12xf32>
      %143 = tpu.matmul %140, %142, %cst_106 {dimension_numbers = #tpu.dot_dimension_numbers<[1], [0], [0], [1], [0, 0, 1, 1], [], []>} : vector<96x6xbf16>, vector<6x12xbf16>, vector<96x12xf32> -> vector<96x12xf32>
      %144 = arith.addf %138, %143 : vector<96x12xf32>
      %c2_107 = arith.constant 2 : index
      %c0_108 = arith.constant 0 : index
      %145 = vector.load %arg13[%c2_107, %c0_108] : memref<160x6xf32, #tpu.memory_space<vmem>>, vector<96x6xf32>
      %146 = arith.truncf %145 : vector<96x6xf32> to vector<96x6xbf16>
      %c2_109 = arith.constant 2 : index
      %c0_110 = arith.constant 0 : index
      %c0_111 = arith.constant 0 : index
      %147 = vector.load %arg4[%c2_109, %c0_110, %c0_111] : memref<25x6x12xbf16, #tpu.memory_space<vmem>>, vector<1x6x12xbf16>
      %148 = vector.shape_cast %147 : vector<1x6x12xbf16> to vector<6x12xbf16>
      %cst_112 = arith.constant dense<0.000000e+00> : vector<96x12xf32>
      %149 = tpu.matmul %146, %148, %cst_112 {dimension_numbers = #tpu.dot_dimension_numbers<[1], [0], [0], [1], [0, 0, 1, 1], [], []>} : vector<96x6xbf16>, vector<6x12xbf16>, vector<96x12xf32> -> vector<96x12xf32>
      %150 = arith.addf %144, %149 : vector<96x12xf32>
      %c3_113 = arith.constant 3 : index
      %c0_114 = arith.constant 0 : index
      %151 = vector.load %arg13[%c3_113, %c0_114] : memref<160x6xf32, #tpu.memory_space<vmem>>, vector<96x6xf32>
      %152 = arith.truncf %151 : vector<96x6xf32> to vector<96x6xbf16>
      %c3_115 = arith.constant 3 : index
      %c0_116 = arith.constant 0 : index
      %c0_117 = arith.constant 0 : index
      %153 = vector.load %arg4[%c3_115, %c0_116, %c0_117] : memref<25x6x12xbf16, #tpu.memory_space<vmem>>, vector<1x6x12xbf16>
      %154 = vector.shape_cast %153 : vector<1x6x12xbf16> to vector<6x12xbf16>
      %cst_118 = arith.constant dense<0.000000e+00> : vector<96x12xf32>
      %155 = tpu.matmul %152, %154, %cst_118 {dimension_numbers = #tpu.dot_dimension_numbers<[1], [0], [0], [1], [0, 0, 1, 1], [], []>} : vector<96x6xbf16>, vector<6x12xbf16>, vector<96x12xf32> -> vector<96x12xf32>
      %156 = arith.addf %150, %155 : vector<96x12xf32>
      %c4_119 = arith.constant 4 : index
      %c0_120 = arith.constant 0 : index
      %157 = vector.load %arg13[%c4_119, %c0_120] : memref<160x6xf32, #tpu.memory_space<vmem>>, vector<96x6xf32>
      %158 = arith.truncf %157 : vector<96x6xf32> to vector<96x6xbf16>
      %c4_121 = arith.constant 4 : index
      %c0_122 = arith.constant 0 : index
      %c0_123 = arith.constant 0 : index
      %159 = vector.load %arg4[%c4_121, %c0_122, %c0_123] : memref<25x6x12xbf16, #tpu.memory_space<vmem>>, vector<1x6x12xbf16>
      %160 = vector.shape_cast %159 : vector<1x6x12xbf16> to vector<6x12xbf16>
      %cst_124 = arith.constant dense<0.000000e+00> : vector<96x12xf32>
      %161 = tpu.matmul %158, %160, %cst_124 {dimension_numbers = #tpu.dot_dimension_numbers<[1], [0], [0], [1], [0, 0, 1, 1], [], []>} : vector<96x6xbf16>, vector<6x12xbf16>, vector<96x12xf32> -> vector<96x12xf32>
      %162 = arith.addf %156, %161 : vector<96x12xf32>
      %c12_125 = arith.constant 12 : index
      %c0_126 = arith.constant 0 : index
      %163 = vector.load %arg13[%c12_125, %c0_126] : memref<160x6xf32, #tpu.memory_space<vmem>>, vector<96x6xf32>
      %164 = arith.truncf %163 : vector<96x6xf32> to vector<96x6xbf16>
      %c5_127 = arith.constant 5 : index
      %c0_128 = arith.constant 0 : index
      %c0_129 = arith.constant 0 : index
      %165 = vector.load %arg4[%c5_127, %c0_128, %c0_129] : memref<25x6x12xbf16, #tpu.memory_space<vmem>>, vector<1x6x12xbf16>
      %166 = vector.shape_cast %165 : vector<1x6x12xbf16> to vector<6x12xbf16>
      %cst_130 = arith.constant dense<0.000000e+00> : vector<96x12xf32>
      %167 = tpu.matmul %164, %166, %cst_130 {dimension_numbers = #tpu.dot_dimension_numbers<[1], [0], [0], [1], [0, 0, 1, 1], [], []>} : vector<96x6xbf16>, vector<6x12xbf16>, vector<96x12xf32> -> vector<96x12xf32>
      %168 = arith.addf %162, %167 : vector<96x12xf32>
      %c13_131 = arith.constant 13 : index
      %c0_132 = arith.constant 0 : index
      %169 = vector.load %arg13[%c13_131, %c0_132] : memref<160x6xf32, #tpu.memory_space<vmem>>, vector<96x6xf32>
      %170 = arith.truncf %169 : vector<96x6xf32> to vector<96x6xbf16>
      %c6_133 = arith.constant 6 : index
      %c0_134 = arith.constant 0 : index
      %c0_135 = arith.constant 0 : index
      %171 = vector.load %arg4[%c6_133, %c0_134, %c0_135] : memref<25x6x12xbf16, #tpu.memory_space<vmem>>, vector<1x6x12xbf16>
      %172 = vector.shape_cast %171 : vector<1x6x12xbf16> to vector<6x12xbf16>
      %cst_136 = arith.constant dense<0.000000e+00> : vector<96x12xf32>
      %173 = tpu.matmul %170, %172, %cst_136 {dimension_numbers = #tpu.dot_dimension_numbers<[1], [0], [0], [1], [0, 0, 1, 1], [], []>} : vector<96x6xbf16>, vector<6x12xbf16>, vector<96x12xf32> -> vector<96x12xf32>
      %174 = arith.addf %168, %173 : vector<96x12xf32>
      %c14_137 = arith.constant 14 : index
      %c0_138 = arith.constant 0 : index
      %175 = vector.load %arg13[%c14_137, %c0_138] : memref<160x6xf32, #tpu.memory_space<vmem>>, vector<96x6xf32>
      %176 = arith.truncf %175 : vector<96x6xf32> to vector<96x6xbf16>
      %c7_139 = arith.constant 7 : index
      %c0_140 = arith.constant 0 : index
      %c0_141 = arith.constant 0 : index
      %177 = vector.load %arg4[%c7_139, %c0_140, %c0_141] : memref<25x6x12xbf16, #tpu.memory_space<vmem>>, vector<1x6x12xbf16>
      %178 = vector.shape_cast %177 : vector<1x6x12xbf16> to vector<6x12xbf16>
      %cst_142 = arith.constant dense<0.000000e+00> : vector<96x12xf32>
      %179 = tpu.matmul %176, %178, %cst_142 {dimension_numbers = #tpu.dot_dimension_numbers<[1], [0], [0], [1], [0, 0, 1, 1], [], []>} : vector<96x6xbf16>, vector<6x12xbf16>, vector<96x12xf32> -> vector<96x12xf32>
      %180 = arith.addf %174, %179 : vector<96x12xf32>
      %c15_143 = arith.constant 15 : index
      %c0_144 = arith.constant 0 : index
      %181 = vector.load %arg13[%c15_143, %c0_144] : memref<160x6xf32, #tpu.memory_space<vmem>>, vector<96x6xf32>
      %182 = arith.truncf %181 : vector<96x6xf32> to vector<96x6xbf16>
      %c8_145 = arith.constant 8 : index
      %c0_146 = arith.constant 0 : index
      %c0_147 = arith.constant 0 : index
      %183 = vector.load %arg4[%c8_145, %c0_146, %c0_147] : memref<25x6x12xbf16, #tpu.memory_space<vmem>>, vector<1x6x12xbf16>
      %184 = vector.shape_cast %183 : vector<1x6x12xbf16> to vector<6x12xbf16>
      %cst_148 = arith.constant dense<0.000000e+00> : vector<96x12xf32>
      %185 = tpu.matmul %182, %184, %cst_148 {dimension_numbers = #tpu.dot_dimension_numbers<[1], [0], [0], [1], [0, 0, 1, 1], [], []>} : vector<96x6xbf16>, vector<6x12xbf16>, vector<96x12xf32> -> vector<96x12xf32>
      %186 = arith.addf %180, %185 : vector<96x12xf32>
      %c16_149 = arith.constant 16 : index
      %c0_150 = arith.constant 0 : index
      %187 = vector.load %arg13[%c16_149, %c0_150] : memref<160x6xf32, #tpu.memory_space<vmem>>, vector<96x6xf32>
      %188 = arith.truncf %187 : vector<96x6xf32> to vector<96x6xbf16>
      %c9_151 = arith.constant 9 : index
      %c0_152 = arith.constant 0 : index
      %c0_153 = arith.constant 0 : index
      %189 = vector.load %arg4[%c9_151, %c0_152, %c0_153] : memref<25x6x12xbf16, #tpu.memory_space<vmem>>, vector<1x6x12xbf16>
      %190 = vector.shape_cast %189 : vector<1x6x12xbf16> to vector<6x12xbf16>
      %cst_154 = arith.constant dense<0.000000e+00> : vector<96x12xf32>
      %191 = tpu.matmul %188, %190, %cst_154 {dimension_numbers = #tpu.dot_dimension_numbers<[1], [0], [0], [1], [0, 0, 1, 1], [], []>} : vector<96x6xbf16>, vector<6x12xbf16>, vector<96x12xf32> -> vector<96x12xf32>
      %192 = arith.addf %186, %191 : vector<96x12xf32>
      %c24_155 = arith.constant 24 : index
      %c0_156 = arith.constant 0 : index
      %193 = vector.load %arg13[%c24_155, %c0_156] : memref<160x6xf32, #tpu.memory_space<vmem>>, vector<96x6xf32>
      %194 = arith.truncf %193 : vector<96x6xf32> to vector<96x6xbf16>
      %c10_157 = arith.constant 10 : index
      %c0_158 = arith.constant 0 : index
      %c0_159 = arith.constant 0 : index
      %195 = vector.load %arg4[%c10_157, %c0_158, %c0_159] : memref<25x6x12xbf16, #tpu.memory_space<vmem>>, vector<1x6x12xbf16>
      %196 = vector.shape_cast %195 : vector<1x6x12xbf16> to vector<6x12xbf16>
      %cst_160 = arith.constant dense<0.000000e+00> : vector<96x12xf32>
      %197 = tpu.matmul %194, %196, %cst_160 {dimension_numbers = #tpu.dot_dimension_numbers<[1], [0], [0], [1], [0, 0, 1, 1], [], []>} : vector<96x6xbf16>, vector<6x12xbf16>, vector<96x12xf32> -> vector<96x12xf32>
      %198 = arith.addf %192, %197 : vector<96x12xf32>
      %c25 = arith.constant 25 : index
      %c0_161 = arith.constant 0 : index
      %199 = vector.load %arg13[%c25, %c0_161] : memref<160x6xf32, #tpu.memory_space<vmem>>, vector<96x6xf32>
      %200 = arith.truncf %199 : vector<96x6xf32> to vector<96x6xbf16>
      %c11_162 = arith.constant 11 : index
      %c0_163 = arith.constant 0 : index
      %c0_164 = arith.constant 0 : index
      %201 = vector.load %arg4[%c11_162, %c0_163, %c0_164] : memref<25x6x12xbf16, #tpu.memory_space<vmem>>, vector<1x6x12xbf16>
      %202 = vector.shape_cast %201 : vector<1x6x12xbf16> to vector<6x12xbf16>
      %cst_165 = arith.constant dense<0.000000e+00> : vector<96x12xf32>
      %203 = tpu.matmul %200, %202, %cst_165 {dimension_numbers = #tpu.dot_dimension_numbers<[1], [0], [0], [1], [0, 0, 1, 1], [], []>} : vector<96x6xbf16>, vector<6x12xbf16>, vector<96x12xf32> -> vector<96x12xf32>
      %204 = arith.addf %198, %203 : vector<96x12xf32>
      %c26 = arith.constant 26 : index
      %c0_166 = arith.constant 0 : index
      %205 = vector.load %arg13[%c26, %c0_166] : memref<160x6xf32, #tpu.memory_space<vmem>>, vector<96x6xf32>
      %206 = arith.truncf %205 : vector<96x6xf32> to vector<96x6xbf16>
      %c12_167 = arith.constant 12 : index
      %c0_168 = arith.constant 0 : index
      %c0_169 = arith.constant 0 : index
      %207 = vector.load %arg4[%c12_167, %c0_168, %c0_169] : memref<25x6x12xbf16, #tpu.memory_space<vmem>>, vector<1x6x12xbf16>
      %208 = vector.shape_cast %207 : vector<1x6x12xbf16> to vector<6x12xbf16>
      %cst_170 = arith.constant dense<0.000000e+00> : vector<96x12xf32>
      %209 = tpu.matmul %206, %208, %cst_170 {dimension_numbers = #tpu.dot_dimension_numbers<[1], [0], [0], [1], [0, 0, 1, 1], [], []>} : vector<96x6xbf16>, vector<6x12xbf16>, vector<96x12xf32> -> vector<96x12xf32>
      %210 = arith.addf %204, %209 : vector<96x12xf32>
      %c27 = arith.constant 27 : index
      %c0_171 = arith.constant 0 : index
      %211 = vector.load %arg13[%c27, %c0_171] : memref<160x6xf32, #tpu.memory_space<vmem>>, vector<96x6xf32>
      %212 = arith.truncf %211 : vector<96x6xf32> to vector<96x6xbf16>
      %c13_172 = arith.constant 13 : index
      %c0_173 = arith.constant 0 : index
      %c0_174 = arith.constant 0 : index
      %213 = vector.load %arg4[%c13_172, %c0_173, %c0_174] : memref<25x6x12xbf16, #tpu.memory_space<vmem>>, vector<1x6x12xbf16>
      %214 = vector.shape_cast %213 : vector<1x6x12xbf16> to vector<6x12xbf16>
      %cst_175 = arith.constant dense<0.000000e+00> : vector<96x12xf32>
      %215 = tpu.matmul %212, %214, %cst_175 {dimension_numbers = #tpu.dot_dimension_numbers<[1], [0], [0], [1], [0, 0, 1, 1], [], []>} : vector<96x6xbf16>, vector<6x12xbf16>, vector<96x12xf32> -> vector<96x12xf32>
      %216 = arith.addf %210, %215 : vector<96x12xf32>
      %c28 = arith.constant 28 : index
      %c0_176 = arith.constant 0 : index
      %217 = vector.load %arg13[%c28, %c0_176] : memref<160x6xf32, #tpu.memory_space<vmem>>, vector<96x6xf32>
      %218 = arith.truncf %217 : vector<96x6xf32> to vector<96x6xbf16>
      %c14_177 = arith.constant 14 : index
      %c0_178 = arith.constant 0 : index
      %c0_179 = arith.constant 0 : index
      %219 = vector.load %arg4[%c14_177, %c0_178, %c0_179] : memref<25x6x12xbf16, #tpu.memory_space<vmem>>, vector<1x6x12xbf16>
      %220 = vector.shape_cast %219 : vector<1x6x12xbf16> to vector<6x12xbf16>
      %cst_180 = arith.constant dense<0.000000e+00> : vector<96x12xf32>
      %221 = tpu.matmul %218, %220, %cst_180 {dimension_numbers = #tpu.dot_dimension_numbers<[1], [0], [0], [1], [0, 0, 1, 1], [], []>} : vector<96x6xbf16>, vector<6x12xbf16>, vector<96x12xf32> -> vector<96x12xf32>
      %222 = arith.addf %216, %221 : vector<96x12xf32>
      %c36 = arith.constant 36 : index
      %c0_181 = arith.constant 0 : index
      %223 = vector.load %arg13[%c36, %c0_181] : memref<160x6xf32, #tpu.memory_space<vmem>>, vector<96x6xf32>
      %224 = arith.truncf %223 : vector<96x6xf32> to vector<96x6xbf16>
      %c15_182 = arith.constant 15 : index
      %c0_183 = arith.constant 0 : index
      %c0_184 = arith.constant 0 : index
      %225 = vector.load %arg4[%c15_182, %c0_183, %c0_184] : memref<25x6x12xbf16, #tpu.memory_space<vmem>>, vector<1x6x12xbf16>
      %226 = vector.shape_cast %225 : vector<1x6x12xbf16> to vector<6x12xbf16>
      %cst_185 = arith.constant dense<0.000000e+00> : vector<96x12xf32>
      %227 = tpu.matmul %224, %226, %cst_185 {dimension_numbers = #tpu.dot_dimension_numbers<[1], [0], [0], [1], [0, 0, 1, 1], [], []>} : vector<96x6xbf16>, vector<6x12xbf16>, vector<96x12xf32> -> vector<96x12xf32>
      %228 = arith.addf %222, %227 : vector<96x12xf32>
      %c37 = arith.constant 37 : index
      %c0_186 = arith.constant 0 : index
      %229 = vector.load %arg13[%c37, %c0_186] : memref<160x6xf32, #tpu.memory_space<vmem>>, vector<96x6xf32>
      %230 = arith.truncf %229 : vector<96x6xf32> to vector<96x6xbf16>
      %c16_187 = arith.constant 16 : index
      %c0_188 = arith.constant 0 : index
      %c0_189 = arith.constant 0 : index
      %231 = vector.load %arg4[%c16_187, %c0_188, %c0_189] : memref<25x6x12xbf16, #tpu.memory_space<vmem>>, vector<1x6x12xbf16>
      %232 = vector.shape_cast %231 : vector<1x6x12xbf16> to vector<6x12xbf16>
      %cst_190 = arith.constant dense<0.000000e+00> : vector<96x12xf32>
      %233 = tpu.matmul %230, %232, %cst_190 {dimension_numbers = #tpu.dot_dimension_numbers<[1], [0], [0], [1], [0, 0, 1, 1], [], []>} : vector<96x6xbf16>, vector<6x12xbf16>, vector<96x12xf32> -> vector<96x12xf32>
      %234 = arith.addf %228, %233 : vector<96x12xf32>
      %c38 = arith.constant 38 : index
      %c0_191 = arith.constant 0 : index
      %235 = vector.load %arg13[%c38, %c0_191] : memref<160x6xf32, #tpu.memory_space<vmem>>, vector<96x6xf32>
      %236 = arith.truncf %235 : vector<96x6xf32> to vector<96x6xbf16>
      %c17 = arith.constant 17 : index
      %c0_192 = arith.constant 0 : index
      %c0_193 = arith.constant 0 : index
      %237 = vector.load %arg4[%c17, %c0_192, %c0_193] : memref<25x6x12xbf16, #tpu.memory_space<vmem>>, vector<1x6x12xbf16>
      %238 = vector.shape_cast %237 : vector<1x6x12xbf16> to vector<6x12xbf16>
      %cst_194 = arith.constant dense<0.000000e+00> : vector<96x12xf32>
      %239 = tpu.matmul %236, %238, %cst_194 {dimension_numbers = #tpu.dot_dimension_numbers<[1], [0], [0], [1], [0, 0, 1, 1], [], []>} : vector<96x6xbf16>, vector<6x12xbf16>, vector<96x12xf32> -> vector<96x12xf32>
      %240 = arith.addf %234, %239 : vector<96x12xf32>
      %c39 = arith.constant 39 : index
      %c0_195 = arith.constant 0 : index
      %241 = vector.load %arg13[%c39, %c0_195] : memref<160x6xf32, #tpu.memory_space<vmem>>, vector<96x6xf32>
      %242 = arith.truncf %241 : vector<96x6xf32> to vector<96x6xbf16>
      %c18 = arith.constant 18 : index
      %c0_196 = arith.constant 0 : index
      %c0_197 = arith.constant 0 : index
      %243 = vector.load %arg4[%c18, %c0_196, %c0_197] : memref<25x6x12xbf16, #tpu.memory_space<vmem>>, vector<1x6x12xbf16>
      %244 = vector.shape_cast %243 : vector<1x6x12xbf16> to vector<6x12xbf16>
      %cst_198 = arith.constant dense<0.000000e+00> : vector<96x12xf32>
      %245 = tpu.matmul %242, %244, %cst_198 {dimension_numbers = #tpu.dot_dimension_numbers<[1], [0], [0], [1], [0, 0, 1, 1], [], []>} : vector<96x6xbf16>, vector<6x12xbf16>, vector<96x12xf32> -> vector<96x12xf32>
      %246 = arith.addf %240, %245 : vector<96x12xf32>
      %c40_199 = arith.constant 40 : index
      %c0_200 = arith.constant 0 : index
      %247 = vector.load %arg13[%c40_199, %c0_200] : memref<160x6xf32, #tpu.memory_space<vmem>>, vector<96x6xf32>
      %248 = arith.truncf %247 : vector<96x6xf32> to vector<96x6xbf16>
      %c19 = arith.constant 19 : index
      %c0_201 = arith.constant 0 : index
      %c0_202 = arith.constant 0 : index
      %249 = vector.load %arg4[%c19, %c0_201, %c0_202] : memref<25x6x12xbf16, #tpu.memory_space<vmem>>, vector<1x6x12xbf16>
      %250 = vector.shape_cast %249 : vector<1x6x12xbf16> to vector<6x12xbf16>
      %cst_203 = arith.constant dense<0.000000e+00> : vector<96x12xf32>
      %251 = tpu.matmul %248, %250, %cst_203 {dimension_numbers = #tpu.dot_dimension_numbers<[1], [0], [0], [1], [0, 0, 1, 1], [], []>} : vector<96x6xbf16>, vector<6x12xbf16>, vector<96x12xf32> -> vector<96x12xf32>
      %252 = arith.addf %246, %251 : vector<96x12xf32>
      %c48_204 = arith.constant 48 : index
      %c0_205 = arith.constant 0 : index
      %253 = vector.load %arg13[%c48_204, %c0_205] : memref<160x6xf32, #tpu.memory_space<vmem>>, vector<96x6xf32>
      %254 = arith.truncf %253 : vector<96x6xf32> to vector<96x6xbf16>
      %c20 = arith.constant 20 : index
      %c0_206 = arith.constant 0 : index
      %c0_207 = arith.constant 0 : index
      %255 = vector.load %arg4[%c20, %c0_206, %c0_207] : memref<25x6x12xbf16, #tpu.memory_space<vmem>>, vector<1x6x12xbf16>
      %256 = vector.shape_cast %255 : vector<1x6x12xbf16> to vector<6x12xbf16>
      %cst_208 = arith.constant dense<0.000000e+00> : vector<96x12xf32>
      %257 = tpu.matmul %254, %256, %cst_208 {dimension_numbers = #tpu.dot_dimension_numbers<[1], [0], [0], [1], [0, 0, 1, 1], [], []>} : vector<96x6xbf16>, vector<6x12xbf16>, vector<96x12xf32> -> vector<96x12xf32>
      %258 = arith.addf %252, %257 : vector<96x12xf32>
      %c49 = arith.constant 49 : index
      %c0_209 = arith.constant 0 : index
      %259 = vector.load %arg13[%c49, %c0_209] : memref<160x6xf32, #tpu.memory_space<vmem>>, vector<96x6xf32>
      %260 = arith.truncf %259 : vector<96x6xf32> to vector<96x6xbf16>
      %c21 = arith.constant 21 : index
      %c0_210 = arith.constant 0 : index
      %c0_211 = arith.constant 0 : index
      %261 = vector.load %arg4[%c21, %c0_210, %c0_211] : memref<25x6x12xbf16, #tpu.memory_space<vmem>>, vector<1x6x12xbf16>
      %262 = vector.shape_cast %261 : vector<1x6x12xbf16> to vector<6x12xbf16>
      %cst_212 = arith.constant dense<0.000000e+00> : vector<96x12xf32>
      %263 = tpu.matmul %260, %262, %cst_212 {dimension_numbers = #tpu.dot_dimension_numbers<[1], [0], [0], [1], [0, 0, 1, 1], [], []>} : vector<96x6xbf16>, vector<6x12xbf16>, vector<96x12xf32> -> vector<96x12xf32>
      %264 = arith.addf %258, %263 : vector<96x12xf32>
      %c50 = arith.constant 50 : index
      %c0_213 = arith.constant 0 : index
      %265 = vector.load %arg13[%c50, %c0_213] : memref<160x6xf32, #tpu.memory_space<vmem>>, vector<96x6xf32>
      %266 = arith.truncf %265 : vector<96x6xf32> to vector<96x6xbf16>
      %c22 = arith.constant 22 : index
      %c0_214 = arith.constant 0 : index
      %c0_215 = arith.constant 0 : index
      %267 = vector.load %arg4[%c22, %c0_214, %c0_215] : memref<25x6x12xbf16, #tpu.memory_space<vmem>>, vector<1x6x12xbf16>
      %268 = vector.shape_cast %267 : vector<1x6x12xbf16> to vector<6x12xbf16>
      %cst_216 = arith.constant dense<0.000000e+00> : vector<96x12xf32>
      %269 = tpu.matmul %266, %268, %cst_216 {dimension_numbers = #tpu.dot_dimension_numbers<[1], [0], [0], [1], [0, 0, 1, 1], [], []>} : vector<96x6xbf16>, vector<6x12xbf16>, vector<96x12xf32> -> vector<96x12xf32>
      %270 = arith.addf %264, %269 : vector<96x12xf32>
      %c51 = arith.constant 51 : index
      %c0_217 = arith.constant 0 : index
      %271 = vector.load %arg13[%c51, %c0_217] : memref<160x6xf32, #tpu.memory_space<vmem>>, vector<96x6xf32>
      %272 = arith.truncf %271 : vector<96x6xf32> to vector<96x6xbf16>
      %c23 = arith.constant 23 : index
      %c0_218 = arith.constant 0 : index
      %c0_219 = arith.constant 0 : index
      %273 = vector.load %arg4[%c23, %c0_218, %c0_219] : memref<25x6x12xbf16, #tpu.memory_space<vmem>>, vector<1x6x12xbf16>
      %274 = vector.shape_cast %273 : vector<1x6x12xbf16> to vector<6x12xbf16>
      %cst_220 = arith.constant dense<0.000000e+00> : vector<96x12xf32>
      %275 = tpu.matmul %272, %274, %cst_220 {dimension_numbers = #tpu.dot_dimension_numbers<[1], [0], [0], [1], [0, 0, 1, 1], [], []>} : vector<96x6xbf16>, vector<6x12xbf16>, vector<96x12xf32> -> vector<96x12xf32>
      %276 = arith.addf %270, %275 : vector<96x12xf32>
      %c52 = arith.constant 52 : index
      %c0_221 = arith.constant 0 : index
      %277 = vector.load %arg13[%c52, %c0_221] : memref<160x6xf32, #tpu.memory_space<vmem>>, vector<96x6xf32>
      %278 = arith.truncf %277 : vector<96x6xf32> to vector<96x6xbf16>
      %c24_222 = arith.constant 24 : index
      %c0_223 = arith.constant 0 : index
      %c0_224 = arith.constant 0 : index
      %279 = vector.load %arg4[%c24_222, %c0_223, %c0_224] : memref<25x6x12xbf16, #tpu.memory_space<vmem>>, vector<1x6x12xbf16>
      %280 = vector.shape_cast %279 : vector<1x6x12xbf16> to vector<6x12xbf16>
      %cst_225 = arith.constant dense<0.000000e+00> : vector<96x12xf32>
      %281 = tpu.matmul %278, %280, %cst_225 {dimension_numbers = #tpu.dot_dimension_numbers<[1], [0], [0], [1], [0, 0, 1, 1], [], []>} : vector<96x6xbf16>, vector<6x12xbf16>, vector<96x12xf32> -> vector<96x12xf32>
      %282 = arith.addf %276, %281 : vector<96x12xf32>
      %c0_226 = arith.constant 0 : index
      %c0_227 = arith.constant 0 : index
      %283 = vector.load %arg5[%c0_226, %c0_227] : memref<1x12xf32, #tpu.memory_space<vmem>>, vector<1x12xf32>
      %284 = vector.broadcast %283 : vector<1x12xf32> to vector<96x12xf32>
      %285 = arith.addf %282, %284 : vector<96x12xf32>
      %cst_228 = arith.constant 0.000000e+00 : f32
      %286 = vector.broadcast %cst_228 : f32 to vector<96x12xf32>
      %287 = arith.maximumf %285, %286 : vector<96x12xf32>
      %c0_229 = arith.constant 0 : index
      %c0_230 = arith.constant 0 : index
      %288 = vector.load %arg14[%c0_229, %c0_230] : memref<96x12xf32, #tpu.memory_space<vmem>>, vector<96x12xf32>
      tpu.vector_store %arg14[%c0_229, %c0_230], %287 {strides = array<i32>} : memref<96x12xf32, #tpu.memory_space<vmem>>, vector<96x12xf32>,
      %c0_231 = arith.constant 0 : index
      %c0_232 = arith.constant 0 : index
      %289 = vector.load %arg14[%c0_231, %c0_232] : memref<96x12xf32, #tpu.memory_space<vmem>>, vector<1x12xf32>
      %c1_233 = arith.constant 1 : index
      %c0_234 = arith.constant 0 : index
      %290 = vector.load %arg14[%c1_233, %c0_234] : memref<96x12xf32, #tpu.memory_space<vmem>>, vector<1x12xf32>
      %291 = arith.maximumf %289, %290 : vector<1x12xf32>
      %c12_235 = arith.constant 12 : index
      %c0_236 = arith.constant 0 : index
      %292 = vector.load %arg14[%c12_235, %c0_236] : memref<96x12xf32, #tpu.memory_space<vmem>>, vector<1x12xf32>
      %c13_237 = arith.constant 13 : index
      %c0_238 = arith.constant 0 : index
      %293 = vector.load %arg14[%c13_237, %c0_238] : memref<96x12xf32, #tpu.memory_space<vmem>>, vector<1x12xf32>
      %294 = arith.maximumf %292, %293 : vector<1x12xf32>
      %295 = arith.maximumf %291, %294 : vector<1x12xf32>
      %c0_i32_239 = arith.constant 0 : i32
      %296 = arith.addi %c0_i32_239, %arg16 : i32
      %297 = arith.index_cast %296 : i32 to index
      %c0_240 = arith.constant 0 : index
      %298 = vector.load %arg15[%297, %c0_240] : memref<128x12xf32, #tpu.memory_space<vmem>>, vector<1x12xf32>
      tpu.vector_store %arg15[%297, %c0_240], %295 {strides = array<i32>} : memref<128x12xf32, #tpu.memory_space<vmem>>, vector<1x12xf32>,
      %c2_241 = arith.constant 2 : index
      %c0_242 = arith.constant 0 : index
      %299 = vector.load %arg14[%c2_241, %c0_242] : memref<96x12xf32, #tpu.memory_space<vmem>>, vector<1x12xf32>
      %c3_243 = arith.constant 3 : index
      %c0_244 = arith.constant 0 : index
      %300 = vector.load %arg14[%c3_243, %c0_244] : memref<96x12xf32, #tpu.memory_space<vmem>>, vector<1x12xf32>
      %301 = arith.maximumf %299, %300 : vector<1x12xf32>
      %c14_245 = arith.constant 14 : index
      %c0_246 = arith.constant 0 : index
      %302 = vector.load %arg14[%c14_245, %c0_246] : memref<96x12xf32, #tpu.memory_space<vmem>>, vector<1x12xf32>
      %c15_247 = arith.constant 15 : index
      %c0_248 = arith.constant 0 : index
      %303 = vector.load %arg14[%c15_247, %c0_248] : memref<96x12xf32, #tpu.memory_space<vmem>>, vector<1x12xf32>
      %304 = arith.maximumf %302, %303 : vector<1x12xf32>
      %305 = arith.maximumf %301, %304 : vector<1x12xf32>
      %c8_i32_249 = arith.constant 8 : i32
      %306 = arith.addi %c8_i32_249, %arg16 : i32
      %307 = arith.index_cast %306 : i32 to index
      %c0_250 = arith.constant 0 : index
      %308 = vector.load %arg15[%307, %c0_250] : memref<128x12xf32, #tpu.memory_space<vmem>>, vector<1x12xf32>
      tpu.vector_store %arg15[%307, %c0_250], %305 {strides = array<i32>} : memref<128x12xf32, #tpu.memory_space<vmem>>, vector<1x12xf32>,
      %c4_251 = arith.constant 4 : index
      %c0_252 = arith.constant 0 : index
      %309 = vector.load %arg14[%c4_251, %c0_252] : memref<96x12xf32, #tpu.memory_space<vmem>>, vector<1x12xf32>
      %c5_253 = arith.constant 5 : index
      %c0_254 = arith.constant 0 : index
      %310 = vector.load %arg14[%c5_253, %c0_254] : memref<96x12xf32, #tpu.memory_space<vmem>>, vector<1x12xf32>
      %311 = arith.maximumf %309, %310 : vector<1x12xf32>
      %c16_255 = arith.constant 16 : index
      %c0_256 = arith.constant 0 : index
      %312 = vector.load %arg14[%c16_255, %c0_256] : memref<96x12xf32, #tpu.memory_space<vmem>>, vector<1x12xf32>
      %c17_257 = arith.constant 17 : index
      %c0_258 = arith.constant 0 : index
      %313 = vector.load %arg14[%c17_257, %c0_258] : memref<96x12xf32, #tpu.memory_space<vmem>>, vector<1x12xf32>
      %314 = arith.maximumf %312, %313 : vector<1x12xf32>
      %315 = arith.maximumf %311, %314 : vector<1x12xf32>
      %c16_i32 = arith.constant 16 : i32
      %316 = arith.addi %c16_i32, %arg16 : i32
      %317 = arith.index_cast %316 : i32 to index
      %c0_259 = arith.constant 0 : index
      %318 = vector.load %arg15[%317, %c0_259] : memref<128x12xf32, #tpu.memory_space<vmem>>, vector<1x12xf32>
      tpu.vector_store %arg15[%317, %c0_259], %315 {strides = array<i32>} : memref<128x12xf32, #tpu.memory_space<vmem>>, vector<1x12xf32>,
      %c6_260 = arith.constant 6 : index
      %c0_261 = arith.constant 0 : index
      %319 = vector.load %arg14[%c6_260, %c0_261] : memref<96x12xf32, #tpu.memory_space<vmem>>, vector<1x12xf32>
      %c7_262 = arith.constant 7 : index
      %c0_263 = arith.constant 0 : index
      %320 = vector.load %arg14[%c7_262, %c0_263] : memref<96x12xf32, #tpu.memory_space<vmem>>, vector<1x12xf32>
      %321 = arith.maximumf %319, %320 : vector<1x12xf32>
      %c18_264 = arith.constant 18 : index
      %c0_265 = arith.constant 0 : index
      %322 = vector.load %arg14[%c18_264, %c0_265] : memref<96x12xf32, #tpu.memory_space<vmem>>, vector<1x12xf32>
      %c19_266 = arith.constant 19 : index
      %c0_267 = arith.constant 0 : index
      %323 = vector.load %arg14[%c19_266, %c0_267] : memref<96x12xf32, #tpu.memory_space<vmem>>, vector<1x12xf32>
      %324 = arith.maximumf %322, %323 : vector<1x12xf32>
      %325 = arith.maximumf %321, %324 : vector<1x12xf32>
      %c24_i32 = arith.constant 24 : i32
      %326 = arith.addi %c24_i32, %arg16 : i32
      %327 = arith.index_cast %326 : i32 to index
      %c0_268 = arith.constant 0 : index
      %328 = vector.load %arg15[%327, %c0_268] : memref<128x12xf32, #tpu.memory_space<vmem>>, vector<1x12xf32>
      tpu.vector_store %arg15[%327, %c0_268], %325 {strides = array<i32>} : memref<128x12xf32, #tpu.memory_space<vmem>>, vector<1x12xf32>,
      %c24_269 = arith.constant 24 : index
      %c0_270 = arith.constant 0 : index
      %329 = vector.load %arg14[%c24_269, %c0_270] : memref<96x12xf32, #tpu.memory_space<vmem>>, vector<1x12xf32>
      %c25_271 = arith.constant 25 : index
      %c0_272 = arith.constant 0 : index
      %330 = vector.load %arg14[%c25_271, %c0_272] : memref<96x12xf32, #tpu.memory_space<vmem>>, vector<1x12xf32>
      %331 = arith.maximumf %329, %330 : vector<1x12xf32>
      %c36_273 = arith.constant 36 : index
      %c0_274 = arith.constant 0 : index
      %332 = vector.load %arg14[%c36_273, %c0_274] : memref<96x12xf32, #tpu.memory_space<vmem>>, vector<1x12xf32>
      %c37_275 = arith.constant 37 : index
      %c0_276 = arith.constant 0 : index
      %333 = vector.load %arg14[%c37_275, %c0_276] : memref<96x12xf32, #tpu.memory_space<vmem>>, vector<1x12xf32>
      %334 = arith.maximumf %332, %333 : vector<1x12xf32>
      %335 = arith.maximumf %331, %334 : vector<1x12xf32>
      %c32_i32 = arith.constant 32 : i32
      %336 = arith.addi %c32_i32, %arg16 : i32
      %337 = arith.index_cast %336 : i32 to index
      %c0_277 = arith.constant 0 : index
      %338 = vector.load %arg15[%337, %c0_277] : memref<128x12xf32, #tpu.memory_space<vmem>>, vector<1x12xf32>
      tpu.vector_store %arg15[%337, %c0_277], %335 {strides = array<i32>} : memref<128x12xf32, #tpu.memory_space<vmem>>, vector<1x12xf32>,
      %c26_278 = arith.constant 26 : index
      %c0_279 = arith.constant 0 : index
      %339 = vector.load %arg14[%c26_278, %c0_279] : memref<96x12xf32, #tpu.memory_space<vmem>>, vector<1x12xf32>
      %c27_280 = arith.constant 27 : index
      %c0_281 = arith.constant 0 : index
      %340 = vector.load %arg14[%c27_280, %c0_281] : memref<96x12xf32, #tpu.memory_space<vmem>>, vector<1x12xf32>
      %341 = arith.maximumf %339, %340 : vector<1x12xf32>
      %c38_282 = arith.constant 38 : index
      %c0_283 = arith.constant 0 : index
      %342 = vector.load %arg14[%c38_282, %c0_283] : memref<96x12xf32, #tpu.memory_space<vmem>>, vector<1x12xf32>
      %c39_284 = arith.constant 39 : index
      %c0_285 = arith.constant 0 : index
      %343 = vector.load %arg14[%c39_284, %c0_285] : memref<96x12xf32, #tpu.memory_space<vmem>>, vector<1x12xf32>
      %344 = arith.maximumf %342, %343 : vector<1x12xf32>
      %345 = arith.maximumf %341, %344 : vector<1x12xf32>
      %c40_i32 = arith.constant 40 : i32
      %346 = arith.addi %c40_i32, %arg16 : i32
      %347 = arith.index_cast %346 : i32 to index
      %c0_286 = arith.constant 0 : index
      %348 = vector.load %arg15[%347, %c0_286] : memref<128x12xf32, #tpu.memory_space<vmem>>, vector<1x12xf32>
      tpu.vector_store %arg15[%347, %c0_286], %345 {strides = array<i32>} : memref<128x12xf32, #tpu.memory_space<vmem>>, vector<1x12xf32>,
      %c28_287 = arith.constant 28 : index
      %c0_288 = arith.constant 0 : index
      %349 = vector.load %arg14[%c28_287, %c0_288] : memref<96x12xf32, #tpu.memory_space<vmem>>, vector<1x12xf32>
      %c29 = arith.constant 29 : index
      %c0_289 = arith.constant 0 : index
      %350 = vector.load %arg14[%c29, %c0_289] : memref<96x12xf32, #tpu.memory_space<vmem>>, vector<1x12xf32>
      %351 = arith.maximumf %349, %350 : vector<1x12xf32>
      %c40_290 = arith.constant 40 : index
      %c0_291 = arith.constant 0 : index
      %352 = vector.load %arg14[%c40_290, %c0_291] : memref<96x12xf32, #tpu.memory_space<vmem>>, vector<1x12xf32>
      %c41 = arith.constant 41 : index
      %c0_292 = arith.constant 0 : index
      %353 = vector.load %arg14[%c41, %c0_292] : memref<96x12xf32, #tpu.memory_space<vmem>>, vector<1x12xf32>
      %354 = arith.maximumf %352, %353 : vector<1x12xf32>
      %355 = arith.maximumf %351, %354 : vector<1x12xf32>
      %c48_i32 = arith.constant 48 : i32
      %356 = arith.addi %c48_i32, %arg16 : i32
      %357 = arith.index_cast %356 : i32 to index
      %c0_293 = arith.constant 0 : index
      %358 = vector.load %arg15[%357, %c0_293] : memref<128x12xf32, #tpu.memory_space<vmem>>, vector<1x12xf32>
      tpu.vector_store %arg15[%357, %c0_293], %355 {strides = array<i32>} : memref<128x12xf32, #tpu.memory_space<vmem>>, vector<1x12xf32>,
      %c30 = arith.constant 30 : index
      %c0_294 = arith.constant 0 : index
      %359 = vector.load %arg14[%c30, %c0_294] : memref<96x12xf32, #tpu.memory_space<vmem>>, vector<1x12xf32>
      %c31 = arith.constant 31 : index
      %c0_295 = arith.constant 0 : index
      %360 = vector.load %arg14[%c31, %c0_295] : memref<96x12xf32, #tpu.memory_space<vmem>>, vector<1x12xf32>
      %361 = arith.maximumf %359, %360 : vector<1x12xf32>
      %c42 = arith.constant 42 : index
      %c0_296 = arith.constant 0 : index
      %362 = vector.load %arg14[%c42, %c0_296] : memref<96x12xf32, #tpu.memory_space<vmem>>, vector<1x12xf32>
      %c43 = arith.constant 43 : index
      %c0_297 = arith.constant 0 : index
      %363 = vector.load %arg14[%c43, %c0_297] : memref<96x12xf32, #tpu.memory_space<vmem>>, vector<1x12xf32>
      %364 = arith.maximumf %362, %363 : vector<1x12xf32>
      %365 = arith.maximumf %361, %364 : vector<1x12xf32>
      %c56_i32 = arith.constant 56 : i32
      %366 = arith.addi %c56_i32, %arg16 : i32
      %367 = arith.index_cast %366 : i32 to index
      %c0_298 = arith.constant 0 : index
      %368 = vector.load %arg15[%367, %c0_298] : memref<128x12xf32, #tpu.memory_space<vmem>>, vector<1x12xf32>
      tpu.vector_store %arg15[%367, %c0_298], %365 {strides = array<i32>} : memref<128x12xf32, #tpu.memory_space<vmem>>, vector<1x12xf32>,
      %c48_299 = arith.constant 48 : index
      %c0_300 = arith.constant 0 : index
      %369 = vector.load %arg14[%c48_299, %c0_300] : memref<96x12xf32, #tpu.memory_space<vmem>>, vector<1x12xf32>
      %c49_301 = arith.constant 49 : index
      %c0_302 = arith.constant 0 : index
      %370 = vector.load %arg14[%c49_301, %c0_302] : memref<96x12xf32, #tpu.memory_space<vmem>>, vector<1x12xf32>
      %371 = arith.maximumf %369, %370 : vector<1x12xf32>
      %c60 = arith.constant 60 : index
      %c0_303 = arith.constant 0 : index
      %372 = vector.load %arg14[%c60, %c0_303] : memref<96x12xf32, #tpu.memory_space<vmem>>, vector<1x12xf32>
      %c61 = arith.constant 61 : index
      %c0_304 = arith.constant 0 : index
      %373 = vector.load %arg14[%c61, %c0_304] : memref<96x12xf32, #tpu.memory_space<vmem>>, vector<1x12xf32>
      %374 = arith.maximumf %372, %373 : vector<1x12xf32>
      %375 = arith.maximumf %371, %374 : vector<1x12xf32>
      %c64_i32 = arith.constant 64 : i32
      %376 = arith.addi %c64_i32, %arg16 : i32
      %377 = arith.index_cast %376 : i32 to index
      %c0_305 = arith.constant 0 : index
      %378 = vector.load %arg15[%377, %c0_305] : memref<128x12xf32, #tpu.memory_space<vmem>>, vector<1x12xf32>
      tpu.vector_store %arg15[%377, %c0_305], %375 {strides = array<i32>} : memref<128x12xf32, #tpu.memory_space<vmem>>, vector<1x12xf32>,
      %c50_306 = arith.constant 50 : index
      %c0_307 = arith.constant 0 : index
      %379 = vector.load %arg14[%c50_306, %c0_307] : memref<96x12xf32, #tpu.memory_space<vmem>>, vector<1x12xf32>
      %c51_308 = arith.constant 51 : index
      %c0_309 = arith.constant 0 : index
      %380 = vector.load %arg14[%c51_308, %c0_309] : memref<96x12xf32, #tpu.memory_space<vmem>>, vector<1x12xf32>
      %381 = arith.maximumf %379, %380 : vector<1x12xf32>
      %c62 = arith.constant 62 : index
      %c0_310 = arith.constant 0 : index
      %382 = vector.load %arg14[%c62, %c0_310] : memref<96x12xf32, #tpu.memory_space<vmem>>, vector<1x12xf32>
      %c63 = arith.constant 63 : index
      %c0_311 = arith.constant 0 : index
      %383 = vector.load %arg14[%c63, %c0_311] : memref<96x12xf32, #tpu.memory_space<vmem>>, vector<1x12xf32>
      %384 = arith.maximumf %382, %383 : vector<1x12xf32>
      %385 = arith.maximumf %381, %384 : vector<1x12xf32>
      %c72_i32 = arith.constant 72 : i32
      %386 = arith.addi %c72_i32, %arg16 : i32
      %387 = arith.index_cast %386 : i32 to index
      %c0_312 = arith.constant 0 : index
      %388 = vector.load %arg15[%387, %c0_312] : memref<128x12xf32, #tpu.memory_space<vmem>>, vector<1x12xf32>
      tpu.vector_store %arg15[%387, %c0_312], %385 {strides = array<i32>} : memref<128x12xf32, #tpu.memory_space<vmem>>, vector<1x12xf32>,
      %c52_313 = arith.constant 52 : index
      %c0_314 = arith.constant 0 : index
      %389 = vector.load %arg14[%c52_313, %c0_314] : memref<96x12xf32, #tpu.memory_space<vmem>>, vector<1x12xf32>
      %c53 = arith.constant 53 : index
      %c0_315 = arith.constant 0 : index
      %390 = vector.load %arg14[%c53, %c0_315] : memref<96x12xf32, #tpu.memory_space<vmem>>, vector<1x12xf32>
      %391 = arith.maximumf %389, %390 : vector<1x12xf32>
      %c64_316 = arith.constant 64 : index
      %c0_317 = arith.constant 0 : index
      %392 = vector.load %arg14[%c64_316, %c0_317] : memref<96x12xf32, #tpu.memory_space<vmem>>, vector<1x12xf32>
      %c65 = arith.constant 65 : index
      %c0_318 = arith.constant 0 : index
      %393 = vector.load %arg14[%c65, %c0_318] : memref<96x12xf32, #tpu.memory_space<vmem>>, vector<1x12xf32>
      %394 = arith.maximumf %392, %393 : vector<1x12xf32>
      %395 = arith.maximumf %391, %394 : vector<1x12xf32>
      %c80_i32 = arith.constant 80 : i32
      %396 = arith.addi %c80_i32, %arg16 : i32
      %397 = arith.index_cast %396 : i32 to index
      %c0_319 = arith.constant 0 : index
      %398 = vector.load %arg15[%397, %c0_319] : memref<128x12xf32, #tpu.memory_space<vmem>>, vector<1x12xf32>
      tpu.vector_store %arg15[%397, %c0_319], %395 {strides = array<i32>} : memref<128x12xf32, #tpu.memory_space<vmem>>, vector<1x12xf32>,
      %c54 = arith.constant 54 : index
      %c0_320 = arith.constant 0 : index
      %399 = vector.load %arg14[%c54, %c0_320] : memref<96x12xf32, #tpu.memory_space<vmem>>, vector<1x12xf32>
      %c55 = arith.constant 55 : index
      %c0_321 = arith.constant 0 : index
      %400 = vector.load %arg14[%c55, %c0_321] : memref<96x12xf32, #tpu.memory_space<vmem>>, vector<1x12xf32>
      %401 = arith.maximumf %399, %400 : vector<1x12xf32>
      %c66 = arith.constant 66 : index
      %c0_322 = arith.constant 0 : index
      %402 = vector.load %arg14[%c66, %c0_322] : memref<96x12xf32, #tpu.memory_space<vmem>>, vector<1x12xf32>
      %c67 = arith.constant 67 : index
      %c0_323 = arith.constant 0 : index
      %403 = vector.load %arg14[%c67, %c0_323] : memref<96x12xf32, #tpu.memory_space<vmem>>, vector<1x12xf32>
      %404 = arith.maximumf %402, %403 : vector<1x12xf32>
      %405 = arith.maximumf %401, %404 : vector<1x12xf32>
      %c88_i32 = arith.constant 88 : i32
      %406 = arith.addi %c88_i32, %arg16 : i32
      %407 = arith.index_cast %406 : i32 to index
      %c0_324 = arith.constant 0 : index
      %408 = vector.load %arg15[%407, %c0_324] : memref<128x12xf32, #tpu.memory_space<vmem>>, vector<1x12xf32>
      tpu.vector_store %arg15[%407, %c0_324], %405 {strides = array<i32>} : memref<128x12xf32, #tpu.memory_space<vmem>>, vector<1x12xf32>,
      %c72_325 = arith.constant 72 : index
      %c0_326 = arith.constant 0 : index
      %409 = vector.load %arg14[%c72_325, %c0_326] : memref<96x12xf32, #tpu.memory_space<vmem>>, vector<1x12xf32>
      %c73 = arith.constant 73 : index
      %c0_327 = arith.constant 0 : index
      %410 = vector.load %arg14[%c73, %c0_327] : memref<96x12xf32, #tpu.memory_space<vmem>>, vector<1x12xf32>
      %411 = arith.maximumf %409, %410 : vector<1x12xf32>
      %c84 = arith.constant 84 : index
      %c0_328 = arith.constant 0 : index
      %412 = vector.load %arg14[%c84, %c0_328] : memref<96x12xf32, #tpu.memory_space<vmem>>, vector<1x12xf32>
      %c85 = arith.constant 85 : index
      %c0_329 = arith.constant 0 : index
      %413 = vector.load %arg14[%c85, %c0_329] : memref<96x12xf32, #tpu.memory_space<vmem>>, vector<1x12xf32>
      %414 = arith.maximumf %412, %413 : vector<1x12xf32>
      %415 = arith.maximumf %411, %414 : vector<1x12xf32>
      %c96_i32 = arith.constant 96 : i32
      %416 = arith.addi %c96_i32, %arg16 : i32
      %417 = arith.index_cast %416 : i32 to index
      %c0_330 = arith.constant 0 : index
      %418 = vector.load %arg15[%417, %c0_330] : memref<128x12xf32, #tpu.memory_space<vmem>>, vector<1x12xf32>
      tpu.vector_store %arg15[%417, %c0_330], %415 {strides = array<i32>} : memref<128x12xf32, #tpu.memory_space<vmem>>, vector<1x12xf32>,
      %c74 = arith.constant 74 : index
      %c0_331 = arith.constant 0 : index
      %419 = vector.load %arg14[%c74, %c0_331] : memref<96x12xf32, #tpu.memory_space<vmem>>, vector<1x12xf32>
      %c75 = arith.constant 75 : index
      %c0_332 = arith.constant 0 : index
      %420 = vector.load %arg14[%c75, %c0_332] : memref<96x12xf32, #tpu.memory_space<vmem>>, vector<1x12xf32>
      %421 = arith.maximumf %419, %420 : vector<1x12xf32>
      %c86 = arith.constant 86 : index
      %c0_333 = arith.constant 0 : index
      %422 = vector.load %arg14[%c86, %c0_333] : memref<96x12xf32, #tpu.memory_space<vmem>>, vector<1x12xf32>
      %c87 = arith.constant 87 : index
      %c0_334 = arith.constant 0 : index
      %423 = vector.load %arg14[%c87, %c0_334] : memref<96x12xf32, #tpu.memory_space<vmem>>, vector<1x12xf32>
      %424 = arith.maximumf %422, %423 : vector<1x12xf32>
      %425 = arith.maximumf %421, %424 : vector<1x12xf32>
      %c104_i32 = arith.constant 104 : i32
      %426 = arith.addi %c104_i32, %arg16 : i32
      %427 = arith.index_cast %426 : i32 to index
      %c0_335 = arith.constant 0 : index
      %428 = vector.load %arg15[%427, %c0_335] : memref<128x12xf32, #tpu.memory_space<vmem>>, vector<1x12xf32>
      tpu.vector_store %arg15[%427, %c0_335], %425 {strides = array<i32>} : memref<128x12xf32, #tpu.memory_space<vmem>>, vector<1x12xf32>,
      %c76 = arith.constant 76 : index
      %c0_336 = arith.constant 0 : index
      %429 = vector.load %arg14[%c76, %c0_336] : memref<96x12xf32, #tpu.memory_space<vmem>>, vector<1x12xf32>
      %c77 = arith.constant 77 : index
      %c0_337 = arith.constant 0 : index
      %430 = vector.load %arg14[%c77, %c0_337] : memref<96x12xf32, #tpu.memory_space<vmem>>, vector<1x12xf32>
      %431 = arith.maximumf %429, %430 : vector<1x12xf32>
      %c88_338 = arith.constant 88 : index
      %c0_339 = arith.constant 0 : index
      %432 = vector.load %arg14[%c88_338, %c0_339] : memref<96x12xf32, #tpu.memory_space<vmem>>, vector<1x12xf32>
      %c89 = arith.constant 89 : index
      %c0_340 = arith.constant 0 : index
      %433 = vector.load %arg14[%c89, %c0_340] : memref<96x12xf32, #tpu.memory_space<vmem>>, vector<1x12xf32>
      %434 = arith.maximumf %432, %433 : vector<1x12xf32>
      %435 = arith.maximumf %431, %434 : vector<1x12xf32>
      %c112_i32 = arith.constant 112 : i32
      %436 = arith.addi %c112_i32, %arg16 : i32
      %437 = arith.index_cast %436 : i32 to index
      %c0_341 = arith.constant 0 : index
      %438 = vector.load %arg15[%437, %c0_341] : memref<128x12xf32, #tpu.memory_space<vmem>>, vector<1x12xf32>
      tpu.vector_store %arg15[%437, %c0_341], %435 {strides = array<i32>} : memref<128x12xf32, #tpu.memory_space<vmem>>, vector<1x12xf32>,
      %c78 = arith.constant 78 : index
      %c0_342 = arith.constant 0 : index
      %439 = vector.load %arg14[%c78, %c0_342] : memref<96x12xf32, #tpu.memory_space<vmem>>, vector<1x12xf32>
      %c79 = arith.constant 79 : index
      %c0_343 = arith.constant 0 : index
      %440 = vector.load %arg14[%c79, %c0_343] : memref<96x12xf32, #tpu.memory_space<vmem>>, vector<1x12xf32>
      %441 = arith.maximumf %439, %440 : vector<1x12xf32>
      %c90 = arith.constant 90 : index
      %c0_344 = arith.constant 0 : index
      %442 = vector.load %arg14[%c90, %c0_344] : memref<96x12xf32, #tpu.memory_space<vmem>>, vector<1x12xf32>
      %c91 = arith.constant 91 : index
      %c0_345 = arith.constant 0 : index
      %443 = vector.load %arg14[%c91, %c0_345] : memref<96x12xf32, #tpu.memory_space<vmem>>, vector<1x12xf32>
      %444 = arith.maximumf %442, %443 : vector<1x12xf32>
      %445 = arith.maximumf %441, %444 : vector<1x12xf32>
      %c120_i32 = arith.constant 120 : i32
      %446 = arith.addi %c120_i32, %arg16 : i32
      %447 = arith.index_cast %446 : i32 to index
      %c0_346 = arith.constant 0 : index
      %448 = vector.load %arg15[%447, %c0_346] : memref<128x12xf32, #tpu.memory_space<vmem>>, vector<1x12xf32>
      tpu.vector_store %arg15[%447, %c0_346], %445 {strides = array<i32>} : memref<128x12xf32, #tpu.memory_space<vmem>>, vector<1x12xf32>,
    }
    %c8_i32_0 = arith.constant 8 : i32
    %cst_1 = arith.constant 0.000000e+00 : f32
    %3 = vector.broadcast %cst_1 : f32 to vector<8x120xf32>
    %c0_2 = arith.constant 0 : index
    %c0_3 = arith.constant 0 : index
    %4 = vector.load %arg15[%c0_2, %c0_3] : memref<128x12xf32, #tpu.memory_space<vmem>>, vector<8x12xf32>
    %5 = arith.truncf %4 : vector<8x12xf32> to vector<8x12xbf16>
    %c0_4 = arith.constant 0 : index
    %c0_5 = arith.constant 0 : index
    %c0_6 = arith.constant 0 : index
    %6 = vector.load %arg6[%c0_4, %c0_5, %c0_6] : memref<16x12x120xbf16, #tpu.memory_space<vmem>>, vector<1x12x120xbf16>
    %7 = vector.shape_cast %6 : vector<1x12x120xbf16> to vector<12x120xbf16>
    %cst_7 = arith.constant dense<0.000000e+00> : vector<8x120xf32>
    %8 = tpu.matmul %5, %7, %cst_7 {dimension_numbers = #tpu.dot_dimension_numbers<[1], [0], [0], [1], [0, 0, 1, 1], [], []>} : vector<8x12xbf16>, vector<12x120xbf16>, vector<8x120xf32> -> vector<8x120xf32>
    %9 = arith.addf %3, %8 : vector<8x120xf32>
    %c8 = arith.constant 8 : index
    %c0_8 = arith.constant 0 : index
    %10 = vector.load %arg15[%c8, %c0_8] : memref<128x12xf32, #tpu.memory_space<vmem>>, vector<8x12xf32>
    %11 = arith.truncf %10 : vector<8x12xf32> to vector<8x12xbf16>
    %c1 = arith.constant 1 : index
    %c0_9 = arith.constant 0 : index
    %c0_10 = arith.constant 0 : index
    %12 = vector.load %arg6[%c1, %c0_9, %c0_10] : memref<16x12x120xbf16, #tpu.memory_space<vmem>>, vector<1x12x120xbf16>
    %13 = vector.shape_cast %12 : vector<1x12x120xbf16> to vector<12x120xbf16>
    %cst_11 = arith.constant dense<0.000000e+00> : vector<8x120xf32>
    %14 = tpu.matmul %11, %13, %cst_11 {dimension_numbers = #tpu.dot_dimension_numbers<[1], [0], [0], [1], [0, 0, 1, 1], [], []>} : vector<8x12xbf16>, vector<12x120xbf16>, vector<8x120xf32> -> vector<8x120xf32>
    %15 = arith.addf %9, %14 : vector<8x120xf32>
    %c16 = arith.constant 16 : index
    %c0_12 = arith.constant 0 : index
    %16 = vector.load %arg15[%c16, %c0_12] : memref<128x12xf32, #tpu.memory_space<vmem>>, vector<8x12xf32>
    %17 = arith.truncf %16 : vector<8x12xf32> to vector<8x12xbf16>
    %c2 = arith.constant 2 : index
    %c0_13 = arith.constant 0 : index
    %c0_14 = arith.constant 0 : index
    %18 = vector.load %arg6[%c2, %c0_13, %c0_14] : memref<16x12x120xbf16, #tpu.memory_space<vmem>>, vector<1x12x120xbf16>
    %19 = vector.shape_cast %18 : vector<1x12x120xbf16> to vector<12x120xbf16>
    %cst_15 = arith.constant dense<0.000000e+00> : vector<8x120xf32>
    %20 = tpu.matmul %17, %19, %cst_15 {dimension_numbers = #tpu.dot_dimension_numbers<[1], [0], [0], [1], [0, 0, 1, 1], [], []>} : vector<8x12xbf16>, vector<12x120xbf16>, vector<8x120xf32> -> vector<8x120xf32>
    %21 = arith.addf %15, %20 : vector<8x120xf32>
    %c24 = arith.constant 24 : index
    %c0_16 = arith.constant 0 : index
    %22 = vector.load %arg15[%c24, %c0_16] : memref<128x12xf32, #tpu.memory_space<vmem>>, vector<8x12xf32>
    %23 = arith.truncf %22 : vector<8x12xf32> to vector<8x12xbf16>
    %c3 = arith.constant 3 : index
    %c0_17 = arith.constant 0 : index
    %c0_18 = arith.constant 0 : index
    %24 = vector.load %arg6[%c3, %c0_17, %c0_18] : memref<16x12x120xbf16, #tpu.memory_space<vmem>>, vector<1x12x120xbf16>
    %25 = vector.shape_cast %24 : vector<1x12x120xbf16> to vector<12x120xbf16>
    %cst_19 = arith.constant dense<0.000000e+00> : vector<8x120xf32>
    %26 = tpu.matmul %23, %25, %cst_19 {dimension_numbers = #tpu.dot_dimension_numbers<[1], [0], [0], [1], [0, 0, 1, 1], [], []>} : vector<8x12xbf16>, vector<12x120xbf16>, vector<8x120xf32> -> vector<8x120xf32>
    %27 = arith.addf %21, %26 : vector<8x120xf32>
    %c32 = arith.constant 32 : index
    %c0_20 = arith.constant 0 : index
    %28 = vector.load %arg15[%c32, %c0_20] : memref<128x12xf32, #tpu.memory_space<vmem>>, vector<8x12xf32>
    %29 = arith.truncf %28 : vector<8x12xf32> to vector<8x12xbf16>
    %c4 = arith.constant 4 : index
    %c0_21 = arith.constant 0 : index
    %c0_22 = arith.constant 0 : index
    %30 = vector.load %arg6[%c4, %c0_21, %c0_22] : memref<16x12x120xbf16, #tpu.memory_space<vmem>>, vector<1x12x120xbf16>
    %31 = vector.shape_cast %30 : vector<1x12x120xbf16> to vector<12x120xbf16>
    %cst_23 = arith.constant dense<0.000000e+00> : vector<8x120xf32>
    %32 = tpu.matmul %29, %31, %cst_23 {dimension_numbers = #tpu.dot_dimension_numbers<[1], [0], [0], [1], [0, 0, 1, 1], [], []>} : vector<8x12xbf16>, vector<12x120xbf16>, vector<8x120xf32> -> vector<8x120xf32>
    %33 = arith.addf %27, %32 : vector<8x120xf32>
    %c40 = arith.constant 40 : index
    %c0_24 = arith.constant 0 : index
    %34 = vector.load %arg15[%c40, %c0_24] : memref<128x12xf32, #tpu.memory_space<vmem>>, vector<8x12xf32>
    %35 = arith.truncf %34 : vector<8x12xf32> to vector<8x12xbf16>
    %c5 = arith.constant 5 : index
    %c0_25 = arith.constant 0 : index
    %c0_26 = arith.constant 0 : index
    %36 = vector.load %arg6[%c5, %c0_25, %c0_26] : memref<16x12x120xbf16, #tpu.memory_space<vmem>>, vector<1x12x120xbf16>
    %37 = vector.shape_cast %36 : vector<1x12x120xbf16> to vector<12x120xbf16>
    %cst_27 = arith.constant dense<0.000000e+00> : vector<8x120xf32>
    %38 = tpu.matmul %35, %37, %cst_27 {dimension_numbers = #tpu.dot_dimension_numbers<[1], [0], [0], [1], [0, 0, 1, 1], [], []>} : vector<8x12xbf16>, vector<12x120xbf16>, vector<8x120xf32> -> vector<8x120xf32>
    %39 = arith.addf %33, %38 : vector<8x120xf32>
    %c48 = arith.constant 48 : index
    %c0_28 = arith.constant 0 : index
    %40 = vector.load %arg15[%c48, %c0_28] : memref<128x12xf32, #tpu.memory_space<vmem>>, vector<8x12xf32>
    %41 = arith.truncf %40 : vector<8x12xf32> to vector<8x12xbf16>
    %c6 = arith.constant 6 : index
    %c0_29 = arith.constant 0 : index
    %c0_30 = arith.constant 0 : index
    %42 = vector.load %arg6[%c6, %c0_29, %c0_30] : memref<16x12x120xbf16, #tpu.memory_space<vmem>>, vector<1x12x120xbf16>
    %43 = vector.shape_cast %42 : vector<1x12x120xbf16> to vector<12x120xbf16>
    %cst_31 = arith.constant dense<0.000000e+00> : vector<8x120xf32>
    %44 = tpu.matmul %41, %43, %cst_31 {dimension_numbers = #tpu.dot_dimension_numbers<[1], [0], [0], [1], [0, 0, 1, 1], [], []>} : vector<8x12xbf16>, vector<12x120xbf16>, vector<8x120xf32> -> vector<8x120xf32>
    %45 = arith.addf %39, %44 : vector<8x120xf32>
    %c56 = arith.constant 56 : index
    %c0_32 = arith.constant 0 : index
    %46 = vector.load %arg15[%c56, %c0_32] : memref<128x12xf32, #tpu.memory_space<vmem>>, vector<8x12xf32>
    %47 = arith.truncf %46 : vector<8x12xf32> to vector<8x12xbf16>
    %c7 = arith.constant 7 : index
    %c0_33 = arith.constant 0 : index
    %c0_34 = arith.constant 0 : index
    %48 = vector.load %arg6[%c7, %c0_33, %c0_34] : memref<16x12x120xbf16, #tpu.memory_space<vmem>>, vector<1x12x120xbf16>
    %49 = vector.shape_cast %48 : vector<1x12x120xbf16> to vector<12x120xbf16>
    %cst_35 = arith.constant dense<0.000000e+00> : vector<8x120xf32>
    %50 = tpu.matmul %47, %49, %cst_35 {dimension_numbers = #tpu.dot_dimension_numbers<[1], [0], [0], [1], [0, 0, 1, 1], [], []>} : vector<8x12xbf16>, vector<12x120xbf16>, vector<8x120xf32> -> vector<8x120xf32>
    %51 = arith.addf %45, %50 : vector<8x120xf32>
    %c64 = arith.constant 64 : index
    %c0_36 = arith.constant 0 : index
    %52 = vector.load %arg15[%c64, %c0_36] : memref<128x12xf32, #tpu.memory_space<vmem>>, vector<8x12xf32>
    %53 = arith.truncf %52 : vector<8x12xf32> to vector<8x12xbf16>
    %c8_37 = arith.constant 8 : index
    %c0_38 = arith.constant 0 : index
    %c0_39 = arith.constant 0 : index
    %54 = vector.load %arg6[%c8_37, %c0_38, %c0_39] : memref<16x12x120xbf16, #tpu.memory_space<vmem>>, vector<1x12x120xbf16>
    %55 = vector.shape_cast %54 : vector<1x12x120xbf16> to vector<12x120xbf16>
    %cst_40 = arith.constant dense<0.000000e+00> : vector<8x120xf32>
    %56 = tpu.matmul %53, %55, %cst_40 {dimension_numbers = #tpu.dot_dimension_numbers<[1], [0], [0], [1], [0, 0, 1, 1], [], []>} : vector<8x12xbf16>, vector<12x120xbf16>, vector<8x120xf32> -> vector<8x120xf32>
    %57 = arith.addf %51, %56 : vector<8x120xf32>
    %c72 = arith.constant 72 : index
    %c0_41 = arith.constant 0 : index
    %58 = vector.load %arg15[%c72, %c0_41] : memref<128x12xf32, #tpu.memory_space<vmem>>, vector<8x12xf32>
    %59 = arith.truncf %58 : vector<8x12xf32> to vector<8x12xbf16>
    %c9 = arith.constant 9 : index
    %c0_42 = arith.constant 0 : index
    %c0_43 = arith.constant 0 : index
    %60 = vector.load %arg6[%c9, %c0_42, %c0_43] : memref<16x12x120xbf16, #tpu.memory_space<vmem>>, vector<1x12x120xbf16>
    %61 = vector.shape_cast %60 : vector<1x12x120xbf16> to vector<12x120xbf16>
    %cst_44 = arith.constant dense<0.000000e+00> : vector<8x120xf32>
    %62 = tpu.matmul %59, %61, %cst_44 {dimension_numbers = #tpu.dot_dimension_numbers<[1], [0], [0], [1], [0, 0, 1, 1], [], []>} : vector<8x12xbf16>, vector<12x120xbf16>, vector<8x120xf32> -> vector<8x120xf32>
    %63 = arith.addf %57, %62 : vector<8x120xf32>
    %c80 = arith.constant 80 : index
    %c0_45 = arith.constant 0 : index
    %64 = vector.load %arg15[%c80, %c0_45] : memref<128x12xf32, #tpu.memory_space<vmem>>, vector<8x12xf32>
    %65 = arith.truncf %64 : vector<8x12xf32> to vector<8x12xbf16>
    %c10 = arith.constant 10 : index
    %c0_46 = arith.constant 0 : index
    %c0_47 = arith.constant 0 : index
    %66 = vector.load %arg6[%c10, %c0_46, %c0_47] : memref<16x12x120xbf16, #tpu.memory_space<vmem>>, vector<1x12x120xbf16>
    %67 = vector.shape_cast %66 : vector<1x12x120xbf16> to vector<12x120xbf16>
    %cst_48 = arith.constant dense<0.000000e+00> : vector<8x120xf32>
    %68 = tpu.matmul %65, %67, %cst_48 {dimension_numbers = #tpu.dot_dimension_numbers<[1], [0], [0], [1], [0, 0, 1, 1], [], []>} : vector<8x12xbf16>, vector<12x120xbf16>, vector<8x120xf32> -> vector<8x120xf32>
    %69 = arith.addf %63, %68 : vector<8x120xf32>
    %c88 = arith.constant 88 : index
    %c0_49 = arith.constant 0 : index
    %70 = vector.load %arg15[%c88, %c0_49] : memref<128x12xf32, #tpu.memory_space<vmem>>, vector<8x12xf32>
    %71 = arith.truncf %70 : vector<8x12xf32> to vector<8x12xbf16>
    %c11 = arith.constant 11 : index
    %c0_50 = arith.constant 0 : index
    %c0_51 = arith.constant 0 : index
    %72 = vector.load %arg6[%c11, %c0_50, %c0_51] : memref<16x12x120xbf16, #tpu.memory_space<vmem>>, vector<1x12x120xbf16>
    %73 = vector.shape_cast %72 : vector<1x12x120xbf16> to vector<12x120xbf16>
    %cst_52 = arith.constant dense<0.000000e+00> : vector<8x120xf32>
    %74 = tpu.matmul %71, %73, %cst_52 {dimension_numbers = #tpu.dot_dimension_numbers<[1], [0], [0], [1], [0, 0, 1, 1], [], []>} : vector<8x12xbf16>, vector<12x120xbf16>, vector<8x120xf32> -> vector<8x120xf32>
    %75 = arith.addf %69, %74 : vector<8x120xf32>
    %c96 = arith.constant 96 : index
    %c0_53 = arith.constant 0 : index
    %76 = vector.load %arg15[%c96, %c0_53] : memref<128x12xf32, #tpu.memory_space<vmem>>, vector<8x12xf32>
    %77 = arith.truncf %76 : vector<8x12xf32> to vector<8x12xbf16>
    %c12 = arith.constant 12 : index
    %c0_54 = arith.constant 0 : index
    %c0_55 = arith.constant 0 : index
    %78 = vector.load %arg6[%c12, %c0_54, %c0_55] : memref<16x12x120xbf16, #tpu.memory_space<vmem>>, vector<1x12x120xbf16>
    %79 = vector.shape_cast %78 : vector<1x12x120xbf16> to vector<12x120xbf16>
    %cst_56 = arith.constant dense<0.000000e+00> : vector<8x120xf32>
    %80 = tpu.matmul %77, %79, %cst_56 {dimension_numbers = #tpu.dot_dimension_numbers<[1], [0], [0], [1], [0, 0, 1, 1], [], []>} : vector<8x12xbf16>, vector<12x120xbf16>, vector<8x120xf32> -> vector<8x120xf32>
    %81 = arith.addf %75, %80 : vector<8x120xf32>
    %c104 = arith.constant 104 : index
    %c0_57 = arith.constant 0 : index
    %82 = vector.load %arg15[%c104, %c0_57] : memref<128x12xf32, #tpu.memory_space<vmem>>, vector<8x12xf32>
    %83 = arith.truncf %82 : vector<8x12xf32> to vector<8x12xbf16>
    %c13 = arith.constant 13 : index
    %c0_58 = arith.constant 0 : index
    %c0_59 = arith.constant 0 : index
    %84 = vector.load %arg6[%c13, %c0_58, %c0_59] : memref<16x12x120xbf16, #tpu.memory_space<vmem>>, vector<1x12x120xbf16>
    %85 = vector.shape_cast %84 : vector<1x12x120xbf16> to vector<12x120xbf16>
    %cst_60 = arith.constant dense<0.000000e+00> : vector<8x120xf32>
    %86 = tpu.matmul %83, %85, %cst_60 {dimension_numbers = #tpu.dot_dimension_numbers<[1], [0], [0], [1], [0, 0, 1, 1], [], []>} : vector<8x12xbf16>, vector<12x120xbf16>, vector<8x120xf32> -> vector<8x120xf32>
    %87 = arith.addf %81, %86 : vector<8x120xf32>
    %c112 = arith.constant 112 : index
    %c0_61 = arith.constant 0 : index
    %88 = vector.load %arg15[%c112, %c0_61] : memref<128x12xf32, #tpu.memory_space<vmem>>, vector<8x12xf32>
    %89 = arith.truncf %88 : vector<8x12xf32> to vector<8x12xbf16>
    %c14 = arith.constant 14 : index
    %c0_62 = arith.constant 0 : index
    %c0_63 = arith.constant 0 : index
    %90 = vector.load %arg6[%c14, %c0_62, %c0_63] : memref<16x12x120xbf16, #tpu.memory_space<vmem>>, vector<1x12x120xbf16>
    %91 = vector.shape_cast %90 : vector<1x12x120xbf16> to vector<12x120xbf16>
    %cst_64 = arith.constant dense<0.000000e+00> : vector<8x120xf32>
    %92 = tpu.matmul %89, %91, %cst_64 {dimension_numbers = #tpu.dot_dimension_numbers<[1], [0], [0], [1], [0, 0, 1, 1], [], []>} : vector<8x12xbf16>, vector<12x120xbf16>, vector<8x120xf32> -> vector<8x120xf32>
    %93 = arith.addf %87, %92 : vector<8x120xf32>
    %c120 = arith.constant 120 : index
    %c0_65 = arith.constant 0 : index
    %94 = vector.load %arg15[%c120, %c0_65] : memref<128x12xf32, #tpu.memory_space<vmem>>, vector<8x12xf32>
    %95 = arith.truncf %94 : vector<8x12xf32> to vector<8x12xbf16>
    %c15 = arith.constant 15 : index
    %c0_66 = arith.constant 0 : index
    %c0_67 = arith.constant 0 : index
    %96 = vector.load %arg6[%c15, %c0_66, %c0_67] : memref<16x12x120xbf16, #tpu.memory_space<vmem>>, vector<1x12x120xbf16>
    %97 = vector.shape_cast %96 : vector<1x12x120xbf16> to vector<12x120xbf16>
    %cst_68 = arith.constant dense<0.000000e+00> : vector<8x120xf32>
    %98 = tpu.matmul %95, %97, %cst_68 {dimension_numbers = #tpu.dot_dimension_numbers<[1], [0], [0], [1], [0, 0, 1, 1], [], []>} : vector<8x12xbf16>, vector<12x120xbf16>, vector<8x120xf32> -> vector<8x120xf32>
    %99 = arith.addf %93, %98 : vector<8x120xf32>
    %c0_69 = arith.constant 0 : index
    %c0_70 = arith.constant 0 : index
    %100 = vector.load %arg7[%c0_69, %c0_70] : memref<1x120xf32, #tpu.memory_space<vmem>>, vector<1x120xf32>
    %101 = vector.broadcast %100 : vector<1x120xf32> to vector<8x120xf32>
    %102 = arith.addf %99, %101 : vector<8x120xf32>
    %cst_71 = arith.constant 0.000000e+00 : f32
    %103 = vector.broadcast %cst_71 : f32 to vector<8x120xf32>
    %104 = arith.maximumf %102, %103 : vector<8x120xf32>
    %105 = arith.truncf %104 : vector<8x120xf32> to vector<8x120xbf16>
    %c0_72 = arith.constant 0 : index
    %c0_73 = arith.constant 0 : index
    %106 = vector.load %arg8[%c0_72, %c0_73] : memref<120x60xbf16, #tpu.memory_space<vmem>>, vector<120x60xbf16>
    %cst_74 = arith.constant dense<0.000000e+00> : vector<8x60xf32>
    %107 = tpu.matmul %105, %106, %cst_74 {dimension_numbers = #tpu.dot_dimension_numbers<[1], [0], [0], [1], [0, 0, 1, 1], [], []>} : vector<8x120xbf16>, vector<120x60xbf16>, vector<8x60xf32> -> vector<8x60xf32>
    %c0_75 = arith.constant 0 : index
    %c0_76 = arith.constant 0 : index
    %108 = vector.load %arg9[%c0_75, %c0_76] : memref<1x60xf32, #tpu.memory_space<vmem>>, vector<1x60xf32>
    %109 = vector.broadcast %108 : vector<1x60xf32> to vector<8x60xf32>
    %110 = arith.addf %107, %109 : vector<8x60xf32>
    %cst_77 = arith.constant 0.000000e+00 : f32
    %111 = vector.broadcast %cst_77 : f32 to vector<8x60xf32>
    %112 = arith.maximumf %110, %111 : vector<8x60xf32>
    %113 = arith.truncf %112 : vector<8x60xf32> to vector<8x60xbf16>
    %c0_78 = arith.constant 0 : index
    %c0_79 = arith.constant 0 : index
    %114 = vector.load %arg10[%c0_78, %c0_79] : memref<60x10xbf16, #tpu.memory_space<vmem>>, vector<60x10xbf16>
    %cst_80 = arith.constant dense<0.000000e+00> : vector<8x10xf32>
    %115 = tpu.matmul %113, %114, %cst_80 {dimension_numbers = #tpu.dot_dimension_numbers<[1], [0], [0], [1], [0, 0, 1, 1], [], []>} : vector<8x60xbf16>, vector<60x10xbf16>, vector<8x10xf32> -> vector<8x10xf32>
    %c0_81 = arith.constant 0 : index
    %c0_82 = arith.constant 0 : index
    %116 = vector.load %arg11[%c0_81, %c0_82] : memref<1x10xf32, #tpu.memory_space<vmem>>, vector<1x10xf32>
    %117 = vector.broadcast %116 : vector<1x10xf32> to vector<8x10xf32>
    %118 = arith.addf %115, %117 : vector<8x10xf32>
    %c0_83 = arith.constant 0 : index
    %c0_84 = arith.constant 0 : index
    %119 = vector.load %arg12[%c0_83, %c0_84] : memref<8x10xf32, #tpu.memory_space<vmem>>, vector<8x10xf32>
    tpu.vector_store %arg12[%c0_83, %c0_84], %118 {strides = array<i32>} : memref<8x10xf32, #tpu.memory_space<vmem>>, vector<8x10xf32>,
    return
  }
  func.func @transform_0(%arg0: i32) -> (i32, i32) {
    %c0_i32 = arith.constant 0 : i32
    %c0_i32_0 = arith.constant 0 : i32
    return %arg0, %c0_i32 : i32, i32
  }
  func.func @transform_1(%arg0: i32) -> (i32, i32) {
    %c0_i32 = arith.constant 0 : i32
    %c0_i32_0 = arith.constant 0 : i32
    %c0_i32_1 = arith.constant 0 : i32
    return %c0_i32, %c0_i32_0 : i32, i32
  }
  func.func @transform_2(%arg0: i32) -> (i32, i32) {
    %c0_i32 = arith.constant 0 : i32
    %c0_i32_0 = arith.constant 0 : i32
    %c0_i32_1 = arith.constant 0 : i32
    return %c0_i32, %c0_i32_0 : i32, i32
  }
  func.func @transform_3(%arg0: i32) -> (i32, i32, i32) {
    %c0_i32 = arith.constant 0 : i32
    %c0_i32_0 = arith.constant 0 : i32
    %c0_i32_1 = arith.constant 0 : i32
    %c0_i32_2 = arith.constant 0 : i32
    return %c0_i32, %c0_i32_0, %c0_i32_1 : i32, i32, i32
  }
  func.func @transform_4(%arg0: i32) -> (i32, i32) {
    %c0_i32 = arith.constant 0 : i32
    %c0_i32_0 = arith.constant 0 : i32
    %c0_i32_1 = arith.constant 0 : i32
    return %c0_i32, %c0_i32_0 : i32, i32
  }
  func.func @transform_5(%arg0: i32) -> (i32, i32, i32) {
    %c0_i32 = arith.constant 0 : i32
    %c0_i32_0 = arith.constant 0 : i32
    %c0_i32_1 = arith.constant 0 : i32
    %c0_i32_2 = arith.constant 0 : i32
    return %c0_i32, %c0_i32_0, %c0_i32_1 : i32, i32, i32
  }
  func.func @transform_6(%arg0: i32) -> (i32, i32) {
    %c0_i32 = arith.constant 0 : i32
    %c0_i32_0 = arith.constant 0 : i32
    %c0_i32_1 = arith.constant 0 : i32
    return %c0_i32, %c0_i32_0 : i32, i32
  }
  func.func @transform_7(%arg0: i32) -> (i32, i32) {
    %c0_i32 = arith.constant 0 : i32
    %c0_i32_0 = arith.constant 0 : i32
    %c0_i32_1 = arith.constant 0 : i32
    return %c0_i32, %c0_i32_0 : i32, i32
  }
  func.func @transform_8(%arg0: i32) -> (i32, i32) {
    %c0_i32 = arith.constant 0 : i32
    %c0_i32_0 = arith.constant 0 : i32
    %c0_i32_1 = arith.constant 0 : i32
    return %c0_i32, %c0_i32_0 : i32, i32
  }
  func.func @transform_9(%arg0: i32) -> (i32, i32) {
    %c0_i32 = arith.constant 0 : i32
    %c0_i32_0 = arith.constant 0 : i32
    %c0_i32_1 = arith.constant 0 : i32
    return %c0_i32, %c0_i32_0 : i32, i32
  }
  func.func @transform_10(%arg0: i32) -> (i32, i32) {
    %c0_i32 = arith.constant 0 : i32
    %c0_i32_0 = arith.constant 0 : i32
    %c0_i32_1 = arith.constant 0 : i32
    return %c0_i32, %c0_i32_0 : i32, i32
  }
  func.func @transform_11(%arg0: i32) -> (i32, i32) {
    %c0_i32 = arith.constant 0 : i32
    %c0_i32_0 = arith.constant 0 : i32
    return %arg0, %c0_i32 : i32, i32
  }
}

</mosaic_0001>

<llo_original>
// kernel: network_forward.1
$region0: #{network_forward.1}
  #allocation0 [shape = 'u32[]', space=smem, size = 0x4, offset = 0x4, fixed_abs, tag = 'smem constant byte address 0x4 - core index']
  #allocation1 [shape = 'u32[144,128]{1,0:T(1,128)}', space=vmem, size = 0x12000, scoped, tag = 'internal scratch']
  #allocation2 [shape = 'f32[160,6]{1,0:T(8,128)}', space=vmem, size = 0x14000, scoped, tag = 'scratch operand']
  #allocation3 [shape = 'f32[96,12]{1,0:T(8,128)}', space=vmem, size = 0xc000, scoped, tag = 'scratch operand']
  #allocation4 [shape = 'f32[128,12]{1,0:T(8,128)}', space=vmem, size = 0x10000, scoped, tag = 'scratch operand']
  %s0 = inlined_call_operand.vmem [shape: bf16[1152,25], index: 0, kind: input, shape index: {}]
  %s1 = inlined_call_operand.vmem [shape: bf16[25,6], index: 1, kind: input, shape index: {}]
  %s2 = inlined_call_operand.vmem [shape: f32[1,6], index: 2, kind: input, shape index: {}]
  %s3 = inlined_call_operand.vmem [shape: bf16[25,6,12], index: 3, kind: input, shape index: {}]
  %s4 = inlined_call_operand.vmem [shape: f32[1,12], index: 4, kind: input, shape index: {}]
  %s5 = inlined_call_operand.vmem [shape: bf16[16,12,120], index: 5, kind: input, shape index: {}]
  %s6 = inlined_call_operand.vmem [shape: f32[1,120], index: 6, kind: input, shape index: {}]
  %s7 = inlined_call_operand.vmem [shape: bf16[120,60], index: 7, kind: input, shape index: {}]
  %s8 = inlined_call_operand.vmem [shape: f32[1,60], index: 8, kind: input, shape index: {}]
  %s9 = inlined_call_operand.vmem [shape: bf16[60,10], index: 9, kind: input, shape index: {}]
  %s10 = inlined_call_operand.vmem [shape: f32[1,10], index: 10, kind: input, shape index: {}]
  %s11 = inlined_call_operand.vmem [shape: f32[8,10], index: 11, kind: output, shape index: {}]
  %s12 = sld [smem:[#allocation0]]
  $region61: #{network_forward.1} parent=0
    _
  %s14 = ssub.s32 1, %s12
  %s15 = scalar_select 0, %s14, %s12
  // Predicated region
  $region2: #{network_forward.1} parent=0 // pred_check
    _
  $region3: #{network_forward.1} parent=0 // pred_check_branch
    %17 = sbr.rel (0) target = $region5
  $region4: #{network_forward.1} parent=0 // pred_region
    _
  $region5: #{network_forward.1} parent=0 // pred_fallthru
    _
  // Predicated region
  $region6: #{network_forward.1} parent=0 // pred_check
    _
  $region7: #{network_forward.1} parent=0 // pred_check_branch
    %19 = sbr.rel (0) target = $region9
  $region8: #{network_forward.1} parent=0 // pred_region
    _
  $region9: #{network_forward.1} parent=0 // pred_fallthru
    _
  // Predicated region
  $region10: #{network_forward.1} parent=0 // pred_check
    _
  $region11: #{network_forward.1} parent=0 // pred_check_branch
    %21 = sbr.rel (0) target = $region13
  $region12: #{network_forward.1} parent=0 // pred_region
    _
  $region13: #{network_forward.1} parent=0 // pred_fallthru
    _
  // Predicated region
  $region14: #{network_forward.1} parent=0 // pred_check
    _
  $region15: #{network_forward.1} parent=0 // pred_check_branch
    %23 = sbr.rel (0) target = $region17
  $region16: #{network_forward.1} parent=0 // pred_region
    _
  $region17: #{network_forward.1} parent=0 // pred_fallthru
    _
  // Predicated region
  $region18: #{network_forward.1} parent=0 // pred_check
    _
  $region19: #{network_forward.1} parent=0 // pred_check_branch
    %25 = sbr.rel (0) target = $region21
  $region20: #{network_forward.1} parent=0 // pred_region
    _
  $region21: #{network_forward.1} parent=0 // pred_fallthru
    _
  // Predicated region
  $region22: #{network_forward.1} parent=0 // pred_check
    _
  $region23: #{network_forward.1} parent=0 // pred_check_branch
    %27 = sbr.rel (0) target = $region25
  $region24: #{network_forward.1} parent=0 // pred_region
    _
  $region25: #{network_forward.1} parent=0 // pred_fallthru
    _
  // Predicated region
  $region26: #{network_forward.1} parent=0 // pred_check
    _
  $region27: #{network_forward.1} parent=0 // pred_check_branch
    %29 = sbr.rel (0) target = $region29
  $region28: #{network_forward.1} parent=0 // pred_region
    _
  $region29: #{network_forward.1} parent=0 // pred_fallthru
    _
  // Predicated region
  $region30: #{network_forward.1} parent=0 // pred_check
    _
  $region31: #{network_forward.1} parent=0 // pred_check_branch
    %31 = sbr.rel (0) target = $region33
  $region32: #{network_forward.1} parent=0 // pred_region
    _
  $region33: #{network_forward.1} parent=0 // pred_fallthru
    _
  // Predicated region
  $region34: #{network_forward.1} parent=0 // pred_check
    _
  $region35: #{network_forward.1} parent=0 // pred_check_branch
    %33 = sbr.rel (0) target = $region37
  $region36: #{network_forward.1} parent=0 // pred_region
    _
  $region37: #{network_forward.1} parent=0 // pred_fallthru
    _
  // Predicated region
  $region38: #{network_forward.1} parent=0 // pred_check
    _
  $region39: #{network_forward.1} parent=0 // pred_check_branch
    %35 = sbr.rel (0) target = $region41
  $region40: #{network_forward.1} parent=0 // pred_region
    _
  $region41: #{network_forward.1} parent=0 // pred_fallthru
    _
  // Predicated region
  $region42: #{network_forward.1} parent=0 // pred_check
    _
  $region43: #{network_forward.1} parent=0 // pred_check_branch
    %37 = sbr.rel (0) target = $region45
  $region44: #{network_forward.1} parent=0 // pred_region
    _
  $region45: #{network_forward.1} parent=0 // pred_fallthru
    _
  %vm39 = vcmask 48128
  %40 = vst.msk [vmem:[#allocation2 + $0x90] sm:$0xff] %vm39, 0.0
  %41 = vst.msk [vmem:[#allocation2 + $0x98] sm:$0xff] %vm39, 0.0
  loop: start=0, step=1, limit=8
  $region46: #{network_forward.1} parent=0 // loop_pre_header
    _
  $region47: #{network_forward.1} parent=0 // loop_header
    %s43 = sphi 0, %s47
    %p44 = scmp.ge.s32.totalorder %s43, 8
  $region48: #{network_forward.1} parent=0 // loop_header_branch
    %46 = sbr.rel (%p44) target = $region52
  $region49: #{network_forward.1} parent=0 // loop_body
    %s48 = smul.u32 %s43, 144
    %s49 = sshra.s32 %s48, 3
    %s50 = sand.u32 %s48, 7
    %s51 = smul.addr %s49, 4
    %s52 = scalar_lea.vmem %s0, %s51
    %v53 = vld [vmem:[%s52] sm:$0xf]
    %v54 = vld [vmem:[%s52 + $0x4] sm:$0xf]
    %v55 = vld [vmem:[%s52 + $0x8] sm:$0xf]
    %v56 = vld [vmem:[%s52 + $0xc] sm:$0xf]
    %v57 = vld [vmem:[%s52 + $0x10] sm:$0xf]
    %v58 = vld [vmem:[%s52 + $0x14] sm:$0xf]
    %v59 = vld [vmem:[%s52 + $0x18] sm:$0xf]
    %v60 = vld [vmem:[%s52 + $0x1c] sm:$0xf]
    %v61 = vld [vmem:[%s52 + $0x20] sm:$0xf]
    %v62 = vld [vmem:[%s52 + $0x24] sm:$0xf]
    %v63 = vld [vmem:[%s52 + $0x28] sm:$0xf]
    %v64 = vld [vmem:[%s52 + $0x2c] sm:$0xf]
    %v65 = vld [vmem:[%s52 + $0x30] sm:$0xf]
    %v66 = vld [vmem:[%s52 + $0x34] sm:$0xf]
    %v67 = vld [vmem:[%s52 + $0x38] sm:$0xf]
    %v68 = vld [vmem:[%s52 + $0x3c] sm:$0xf]
    %v69 = vld [vmem:[%s52 + $0x40] sm:$0xf]
    %v70 = vld [vmem:[%s52 + $0x44] sm:$0xf]
    %v71 = vld [vmem:[%s1] sm:$0xf]
    %v72 = vld [vmem:[%s1 + $0x4] sm:$0xf]
    %v73 = vld [vmem:[%s1 + $0x8] sm:$0xf]
    %v74 = vld [vmem:[%s1 + $0xc] sm:$0x1]
    %v75 = vld [vmem:[%s2] sm:$0x1]
    %v77 = vlaneseq
    %v78 = vshrl.u32 %v77, 7
    %v79 = vsub.s32 0, %v78
    %v80 = vrot.slane %v75, %v79
    %v100 = vunpack.c.l.b16 %v53
    %v101 = vunpack.c.l.b16 %v54
    %v102 = vunpack.c.l.b16 %v55
    %v103 = vunpack.c.l.b16 %v56
    %v104 = vunpack.c.l.b16 %v57
    %v105 = vunpack.c.l.b16 %v58
    %v106 = vunpack.c.l.b16 %v59
    %v107 = vunpack.c.l.b16 %v60
    %v108 = vunpack.c.l.b16 %v61
    %v109 = vunpack.c.l.b16 %v62
    %v110 = vunpack.c.l.b16 %v63
    %v111 = vunpack.c.l.b16 %v64
    %v112 = vunpack.c.l.b16 %v65
    %v113 = vunpack.c.l.b16 %v66
    %v114 = vunpack.c.l.b16 %v67
    %v115 = vunpack.c.l.b16 %v68
    %v116 = vunpack.c.l.b16 %v69
    %v117 = vunpack.c.l.b16 %v70
    %v118 = vpack.c.b16 %v101, %v100
    %v119 = vpack.c.b16 %v103, %v102
    %v120 = vpack.c.b16 %v105, %v104
    %v121 = vpack.c.b16 %v107, %v106
    %v122 = vpack.c.b16 %v109, %v108
    %v123 = vpack.c.b16 %v111, %v110
    %v124 = vpack.c.b16 %v113, %v112
    %v125 = vpack.c.b16 %v115, %v114
    %v126 = vpack.c.b16 %v117, %v116
    %v131 = vunpack.c.l.b16 %v71
    %v132 = vunpack.c.l.b16 %v72
    %v133 = vunpack.c.l.b16 %v73
    %v134 = vunpack.c.l.b16 %v74
    %v135 = vpack.c.b16 %v132, %v131
    %v136 = vpack.c.b16 %v134, %v133
    %vm138 = vcmask 203776
    %v140 = vsel %vm138, %v118, 0
    %v143 = vsel %vm138, %v119, 0
    %v146 = vsel %vm138, %v120, 0
    %v149 = vsel %vm138, %v121, 0
    %v152 = vsel %vm138, %v122, 0
    %v155 = vsel %vm138, %v123, 0
    %v158 = vsel %vm138, %v124, 0
    %v161 = vsel %vm138, %v125, 0
    %v164 = vsel %vm138, %v126, 0
    %vm166 = vcmask 1043456
    %vm167 = vcmask 1044480
    %v168 = vsel %vm166, 4294967295, 65535
    %v169 = vsel %vm167, %v168, 0
    %v171 = vand.u32 %v136, %v169
    %173 = vmatprep.subr.bf16.mxu0 0
    %174 = vmatpush1.bf16.msra.mxu0 %v135
    %175 = vmatprep.subr.bf16.mxu0 0
    %176 = vmatpush1.bf16.msra.mxu0 %v171
    %177 = vmatprep.subr.bf16.mxu0 0
    %178 = vmatpush1.bf16.msra.mxu0 0
    %179 = vmatprep.subr.bf16.mxu0 0
    %180 = vmatpush1.bf16.msra.mxu0 0
    %181 = vmatprep.subr.bf16.mxu0 0
    %182 = vmatpush1.bf16.msra.mxu0 0
    %183 = vmatprep.subr.bf16.mxu0 0
    %184 = vmatpush1.bf16.msra.mxu0 0
    %185 = vmatprep.subr.bf16.mxu0 0
    %186 = vmatpush1.bf16.msra.mxu0 0
    %187 = vmatprep.subr.bf16.mxu0 0
    %188 = vmatpush1.bf16.msra.mxu0 0
    %189 = vmatprep.subr.bf16.mxu0 0
    %190 = vmatpush1.bf16.msra.mxu0 0
    %191 = vmatprep.subr.bf16.mxu0 0
    %192 = vmatpush1.bf16.msra.mxu0 0
    %193 = vmatprep.subr.bf16.mxu0 0
    %194 = vmatpush1.bf16.msra.mxu0 0
    %195 = vmatprep.subr.bf16.mxu0 0
    %196 = vmatpush1.bf16.msra.mxu0 0
    %197 = vmatprep.subr.bf16.mxu0 0
    %198 = vmatpush1.bf16.msra.mxu0 0
    %199 = vmatprep.subr.bf16.mxu0 0
    %200 = vmatpush1.bf16.msra.mxu0 0
    %201 = vmatprep.subr.bf16.mxu0 0
    %202 = vmatpush1.bf16.msra.mxu0 0
    %203 = vmatprep.subr.bf16.mxu0 0
    %204 = vmatpush1.bf16.msra.mxu0 0
    %205 = vmatprep.mubr.bf16.mxu0 0
    %206 = vmatmul.mubr.bf16.gmra.mrb[0].mxu0 %v140
    %v207 = vpop.f32.mrb[0].mxu0
    %v208 = vadd.f32 %v80, %v207
    %v209 = vpop.f32.mrb[0].mxu0
    %v210 = vpop.f32.mrb[0].mxu0
    %v211 = vadd.f32 %v80, %v210
    %v212 = vpop.f32.mrb[0].mxu0
    %213 = vmatprep.mubr.bf16.mxu0 0
    %214 = vmatmul.mubr.bf16.gmra.mrb[0].mxu0 %v143
    %v215 = vpop.f32.mrb[0].mxu0
    %v216 = vadd.f32 %v80, %v215
    %v217 = vpop.f32.mrb[0].mxu0
    %v218 = vpop.f32.mrb[0].mxu0
    %v219 = vadd.f32 %v80, %v218
    %v220 = vpop.f32.mrb[0].mxu0
    %221 = vmatprep.mubr.bf16.mxu0 0
    %222 = vmatmul.mubr.bf16.gmra.mrb[0].mxu0 %v146
    %v223 = vpop.f32.mrb[0].mxu0
    %v224 = vadd.f32 %v80, %v223
    %v225 = vpop.f32.mrb[0].mxu0
    %v226 = vpop.f32.mrb[0].mxu0
    %v227 = vadd.f32 %v80, %v226
    %v228 = vpop.f32.mrb[0].mxu0
    %229 = vmatprep.mubr.bf16.mxu0 0
    %230 = vmatmul.mubr.bf16.gmra.mrb[0].mxu0 %v149
    %v231 = vpop.f32.mrb[0].mxu0
    %v232 = vadd.f32 %v80, %v231
    %v233 = vpop.f32.mrb[0].mxu0
    %v234 = vpop.f32.mrb[0].mxu0
    %v235 = vadd.f32 %v80, %v234
    %v236 = vpop.f32.mrb[0].mxu0
    %237 = vmatprep.mubr.bf16.mxu0 0
    %238 = vmatmul.mubr.bf16.gmra.mrb[0].mxu0 %v152
    %v239 = vpop.f32.mrb[0].mxu0
    %v240 = vadd.f32 %v80, %v239
    %v241 = vpop.f32.mrb[0].mxu0
    %v242 = vpop.f32.mrb[0].mxu0
    %v243 = vadd.f32 %v80, %v242
    %v244 = vpop.f32.mrb[0].mxu0
    %245 = vmatprep.mubr.bf16.mxu0 0
    %246 = vmatmul.mubr.bf16.gmra.mrb[0].mxu0 %v155
    %v247 = vpop.f32.mrb[0].mxu0
    %v248 = vadd.f32 %v80, %v247
    %v249 = vpop.f32.mrb[0].mxu0
    %v250 = vpop.f32.mrb[0].mxu0
    %v251 = vadd.f32 %v80, %v250
    %v252 = vpop.f32.mrb[0].mxu0
    %253 = vmatprep.mubr.bf16.mxu0 0
    %254 = vmatmul.mubr.bf16.gmra.mrb[0].mxu0 %v158
    %v255 = vpop.f32.mrb[0].mxu0
    %v256 = vadd.f32 %v80, %v255
    %v257 = vpop.f32.mrb[0].mxu0
    %v258 = vpop.f32.mrb[0].mxu0
    %v259 = vadd.f32 %v80, %v258
    %v260 = vpop.f32.mrb[0].mxu0
    %261 = vmatprep.mubr.bf16.mxu0 0
    %262 = vmatmul.mubr.bf16.gmra.mrb[0].mxu0 %v161
    %v263 = vpop.f32.mrb[0].mxu0
    %v264 = vadd.f32 %v80, %v263
    %v265 = vpop.f32.mrb[0].mxu0
    %v266 = vpop.f32.mrb[0].mxu0
    %v267 = vadd.f32 %v80, %v266
    %v268 = vpop.f32.mrb[0].mxu0
    %269 = vmatprep.mubr.bf16.mxu0 0
    %270 = vmatmul.mubr.bf16.gmra.mrb[0].mxu0 %v164
    %v271 = vpop.f32.mrb[0].mxu0
    %v272 = vadd.f32 %v80, %v271
    %v273 = vpop.f32.mrb[0].mxu0
    %v274 = vpop.f32.mrb[0].mxu0
    %v275 = vadd.f32 %v80, %v274
    %v276 = vpop.f32.mrb[0].mxu0
    %277 = vdwg.mxu0
    %v278 = vmax.f32 %v208, 0.0
    %v279 = vmax.f32 %v211, 0.0
    %v280 = vmax.f32 %v216, 0.0
    %v281 = vmax.f32 %v219, 0.0
    %v282 = vmax.f32 %v224, 0.0
    %v283 = vmax.f32 %v227, 0.0
    %v284 = vmax.f32 %v232, 0.0
    %v285 = vmax.f32 %v235, 0.0
    %v286 = vmax.f32 %v240, 0.0
    %v287 = vmax.f32 %v243, 0.0
    %v288 = vmax.f32 %v248, 0.0
    %v289 = vmax.f32 %v251, 0.0
    %v290 = vmax.f32 %v256, 0.0
    %v291 = vmax.f32 %v259, 0.0
    %v292 = vmax.f32 %v264, 0.0
    %v293 = vmax.f32 %v267, 0.0
    %v294 = vmax.f32 %v272, 0.0
    %v295 = vmax.f32 %v275, 0.0
    %296 = vst.msk [vmem:[#allocation2] sm:$0xff] %vm39, %v278
    %297 = vst.msk [vmem:[#allocation2 + $0x8] sm:$0xff] %vm39, %v279
    %298 = vst.msk [vmem:[#allocation2 + $0x10] sm:$0xff] %vm39, %v280
    %299 = vst.msk [vmem:[#allocation2 + $0x18] sm:$0xff] %vm39, %v281
    %300 = vst.msk [vmem:[#allocation2 + $0x20] sm:$0xff] %vm39, %v282
    %301 = vst.msk [vmem:[#allocation2 + $0x28] sm:$0xff] %vm39, %v283
    %302 = vst.msk [vmem:[#allocation2 + $0x30] sm:$0xff] %vm39, %v284
    %303 = vst.msk [vmem:[#allocation2 + $0x38] sm:$0xff] %vm39, %v285
    %304 = vst.msk [vmem:[#allocation2 + $0x40] sm:$0xff] %vm39, %v286
    %305 = vst.msk [vmem:[#allocation2 + $0x48] sm:$0xff] %vm39, %v287
    %306 = vst.msk [vmem:[#allocation2 + $0x50] sm:$0xff] %vm39, %v288
    %307 = vst.msk [vmem:[#allocation2 + $0x58] sm:$0xff] %vm39, %v289
    %308 = vst.msk [vmem:[#allocation2 + $0x60] sm:$0xff] %vm39, %v290
    %309 = vst.msk [vmem:[#allocation2 + $0x68] sm:$0xff] %vm39, %v291
    %310 = vst.msk [vmem:[#allocation2 + $0x70] sm:$0xff] %vm39, %v292
    %311 = vst.msk [vmem:[#allocation2 + $0x78] sm:$0xff] %vm39, %v293
    %312 = vst.msk [vmem:[#allocation2 + $0x80] sm:$0xff] %vm39, %v294
    %313 = vst.msk [vmem:[#allocation2 + $0x88] sm:$0xff] %vm39, %v295
    %v314 = vld [vmem:[#allocation2] sm:$0xff]
    %v315 = vld [vmem:[#allocation2 + $0x8] sm:$0xff]
    %v316 = vld [vmem:[#allocation2 + $0x10] sm:$0xff]
    %v317 = vld [vmem:[#allocation2 + $0x18] sm:$0xff]
    %v318 = vld [vmem:[#allocation2 + $0x20] sm:$0xff]
    %v319 = vld [vmem:[#allocation2 + $0x28] sm:$0xff]
    %v320 = vld [vmem:[#allocation2 + $0x30] sm:$0xff]
    %v321 = vld [vmem:[#allocation2 + $0x38] sm:$0xff]
    %v322 = vld [vmem:[#allocation2 + $0x40] sm:$0xff]
    %v323 = vld [vmem:[#allocation2 + $0x48] sm:$0xff]
    %v324 = vld [vmem:[#allocation2 + $0x50] sm:$0xff]
    %v325 = vld [vmem:[#allocation2 + $0x58] sm:$0xff]
    %v326 = vpack.c.bf16 %v315, %v314
    %v327 = vpack.c.bf16 %v317, %v316
    %v328 = vpack.c.bf16 %v319, %v318
    %v329 = vpack.c.bf16 %v321, %v320
    %v330 = vpack.c.bf16 %v323, %v322
    %v331 = vpack.c.bf16 %v325, %v324
    %v332 = vld [vmem:[%s3] sm:$0x7]
    %v333 = vld [vmem:[#allocation2 + $0x1] sm:$0xff]
    %v334 = vld [vmem:[#allocation2 + $0x9] sm:$0xff]
    %v335 = vld [vmem:[#allocation2 + $0x11] sm:$0xff]
    %v336 = vld [vmem:[#allocation2 + $0x19] sm:$0xff]
    %v337 = vld [vmem:[#allocation2 + $0x21] sm:$0xff]
    %v338 = vld [vmem:[#allocation2 + $0x29] sm:$0xff]
    %v339 = vld [vmem:[#allocation2 + $0x31] sm:$0xff]
    %v340 = vld [vmem:[#allocation2 + $0x39] sm:$0xff]
    %v341 = vld [vmem:[#allocation2 + $0x41] sm:$0xff]
    %v342 = vld [vmem:[#allocation2 + $0x49] sm:$0xff]
    %v343 = vld [vmem:[#allocation2 + $0x51] sm:$0xff]
    %v344 = vld [vmem:[#allocation2 + $0x59] sm:$0xff]
    %v345 = vpack.c.bf16 %v334, %v333
    %v346 = vpack.c.bf16 %v336, %v335
    %v347 = vpack.c.bf16 %v338, %v337
    %v348 = vpack.c.bf16 %v340, %v339
    %v349 = vpack.c.bf16 %v342, %v341
    %v350 = vpack.c.bf16 %v344, %v343
    %s351 = scalar_lea.vmem %s3, 4
    %v352 = vld [vmem:[%s351] sm:$0x7]
    %v354 = vsel %vm39, %v345, 0
    %v357 = vsel %vm39, %v346, 0
    %v360 = vsel %vm39, %v347, 0
    %v363 = vsel %vm39, %v348, 0
    %v366 = vsel %vm39, %v349, 0
    %v369 = vsel %vm39, %v350, 0
    %vm371 = vcmask 1042432
    %v373 = vsel %vm371, %v352, 0
    %375 = vmatprep.subr.bf16.mxu0 0
    %376 = vmatpush1.bf16.msra.mxu0 %v373
    %377 = vmatprep.subr.bf16.mxu0 0
    %378 = vmatpush1.bf16.msra.mxu0 0
    %379 = vmatprep.subr.bf16.mxu0 0
    %380 = vmatpush1.bf16.msra.mxu0 0
    %381 = vmatprep.subr.bf16.mxu0 0
    %382 = vmatpush1.bf16.msra.mxu0 0
    %383 = vmatprep.subr.bf16.mxu0 0
    %384 = vmatpush1.bf16.msra.mxu0 0
    %385 = vmatprep.subr.bf16.mxu0 0
    %386 = vmatpush1.bf16.msra.mxu0 0
    %387 = vmatprep.subr.bf16.mxu0 0
    %388 = vmatpush1.bf16.msra.mxu0 0
    %389 = vmatprep.subr.bf16.mxu0 0
    %390 = vmatpush1.bf16.msra.mxu0 0
    %391 = vmatprep.subr.bf16.mxu0 0
    %392 = vmatpush1.bf16.msra.mxu0 0
    %393 = vmatprep.subr.bf16.mxu0 0
    %394 = vmatpush1.bf16.msra.mxu0 0
    %395 = vmatprep.subr.bf16.mxu0 0
    %396 = vmatpush1.bf16.msra.mxu0 0
    %397 = vmatprep.subr.bf16.mxu0 0
    %398 = vmatpush1.bf16.msra.mxu0 0
    %399 = vmatprep.subr.bf16.mxu0 0
    %400 = vmatpush1.bf16.msra.mxu0 0
    %401 = vmatprep.subr.bf16.mxu0 0
    %402 = vmatpush1.bf16.msra.mxu0 0
    %403 = vmatprep.subr.bf16.mxu0 0
    %404 = vmatpush1.bf16.msra.mxu0 0
    %405 = vmatprep.subr.bf16.mxu0 0
    %406 = vmatpush1.bf16.msra.mxu0 0
    %407 = vmatprep.mubr.bf16.mxu0 0
    %408 = vmatmul.mubr.bf16.gmra.mrb[0].mxu0 %v354
    %v409 = vpop.f32.mrb[0].mxu0
    %v410 = vadd.f32 0.0, %v409
    %v411 = vpop.f32.mrb[0].mxu0
    %v412 = vpop.f32.mrb[0].mxu0
    %v413 = vadd.f32 0.0, %v412
    %v414 = vpop.f32.mrb[0].mxu0
    %415 = vmatprep.mubr.bf16.mxu0 0
    %416 = vmatmul.mubr.bf16.gmra.mrb[0].mxu0 %v357
    %v417 = vpop.f32.mrb[0].mxu0
    %v418 = vadd.f32 0.0, %v417
    %v419 = vpop.f32.mrb[0].mxu0
    %v420 = vpop.f32.mrb[0].mxu0
    %v421 = vadd.f32 0.0, %v420
    %v422 = vpop.f32.mrb[0].mxu0
    %423 = vmatprep.mubr.bf16.mxu0 0
    %424 = vmatmul.mubr.bf16.gmra.mrb[0].mxu0 %v360
    %v425 = vpop.f32.mrb[0].mxu0
    %v426 = vadd.f32 0.0, %v425
    %v427 = vpop.f32.mrb[0].mxu0
    %v428 = vpop.f32.mrb[0].mxu0
    %v429 = vadd.f32 0.0, %v428
    %v430 = vpop.f32.mrb[0].mxu0
    %431 = vmatprep.mubr.bf16.mxu0 0
    %432 = vmatmul.mubr.bf16.gmra.mrb[0].mxu0 %v363
    %v433 = vpop.f32.mrb[0].mxu0
    %v434 = vadd.f32 0.0, %v433
    %v435 = vpop.f32.mrb[0].mxu0
    %v436 = vpop.f32.mrb[0].mxu0
    %v437 = vadd.f32 0.0, %v436
    %v438 = vpop.f32.mrb[0].mxu0
    %439 = vmatprep.mubr.bf16.mxu0 0
    %440 = vmatmul.mubr.bf16.gmra.mrb[0].mxu0 %v366
    %v441 = vpop.f32.mrb[0].mxu0
    %v442 = vadd.f32 0.0, %v441
    %v443 = vpop.f32.mrb[0].mxu0
    %v444 = vpop.f32.mrb[0].mxu0
    %v445 = vadd.f32 0.0, %v444
    %v446 = vpop.f32.mrb[0].mxu0
    %447 = vmatprep.mubr.bf16.mxu0 0
    %448 = vmatmul.mubr.bf16.gmra.mrb[0].mxu0 %v369
    %v449 = vpop.f32.mrb[0].mxu0
    %v450 = vadd.f32 0.0, %v449
    %v451 = vpop.f32.mrb[0].mxu0
    %v452 = vpop.f32.mrb[0].mxu0
    %v453 = vadd.f32 0.0, %v452
    %v454 = vpop.f32.mrb[0].mxu0
    %455 = vdwg.mxu0
    %v457 = vsel %vm39, %v326, 0
    %v460 = vsel %vm39, %v327, 0
    %v463 = vsel %vm39, %v328, 0
    %v466 = vsel %vm39, %v329, 0
    %v469 = vsel %vm39, %v330, 0
    %v472 = vsel %vm39, %v331, 0
    %v475 = vsel %vm371, %v332, 0
    %477 = vmatprep.subr.bf16.mxu0 0
    %478 = vmatpush1.bf16.msra.mxu0 %v475
    %479 = vmatprep.subr.bf16.mxu0 0
    %480 = vmatpush1.bf16.msra.mxu0 0
    %481 = vmatprep.subr.bf16.mxu0 0
    %482 = vmatpush1.bf16.msra.mxu0 0
    %483 = vmatprep.subr.bf16.mxu0 0
    %484 = vmatpush1.bf16.msra.mxu0 0
    %485 = vmatprep.subr.bf16.mxu0 0
    %486 = vmatpush1.bf16.msra.mxu0 0
    %487 = vmatprep.subr.bf16.mxu0 0
    %488 = vmatpush1.bf16.msra.mxu0 0
    %489 = vmatprep.subr.bf16.mxu0 0
    %490 = vmatpush1.bf16.msra.mxu0 0
    %491 = vmatprep.subr.bf16.mxu0 0
    %492 = vmatpush1.bf16.msra.mxu0 0
    %493 = vmatprep.subr.bf16.mxu0 0
    %494 = vmatpush1.bf16.msra.mxu0 0
    %495 = vmatprep.subr.bf16.mxu0 0
    %496 = vmatpush1.bf16.msra.mxu0 0
    %497 = vmatprep.subr.bf16.mxu0 0
    %498 = vmatpush1.bf16.msra.mxu0 0
    %499 = vmatprep.subr.bf16.mxu0 0
    %500 = vmatpush1.bf16.msra.mxu0 0
    %501 = vmatprep.subr.bf16.mxu0 0
    %502 = vmatpush1.bf16.msra.mxu0 0
    %503 = vmatprep.subr.bf16.mxu0 0
    %504 = vmatpush1.bf16.msra.mxu0 0
    %505 = vmatprep.subr.bf16.mxu0 0
    %506 = vmatpush1.bf16.msra.mxu0 0
    %507 = vmatprep.subr.bf16.mxu0 0
    %508 = vmatpush1.bf16.msra.mxu0 0
    %509 = vmatprep.mubr.bf16.mxu0 0
    %510 = vmatmul.mubr.bf16.gmra.mrb[0].mxu0 %v457
    %v511 = vpop.f32.mrb[0].mxu0
    %v512 = vadd.f32 %v410, %v511
    %v513 = vpop.f32.mrb[0].mxu0
    %v514 = vpop.f32.mrb[0].mxu0
    %v515 = vadd.f32 %v413, %v514
    %v516 = vpop.f32.mrb[0].mxu0
    %517 = vmatprep.mubr.bf16.mxu0 0
    %518 = vmatmul.mubr.bf16.gmra.mrb[0].mxu0 %v460
    %v519 = vpop.f32.mrb[0].mxu0
    %v520 = vadd.f32 %v418, %v519
    %v521 = vpop.f32.mrb[0].mxu0
    %v522 = vpop.f32.mrb[0].mxu0
    %v523 = vadd.f32 %v421, %v522
    %v524 = vpop.f32.mrb[0].mxu0
    %525 = vmatprep.mubr.bf16.mxu0 0
    %526 = vmatmul.mubr.bf16.gmra.mrb[0].mxu0 %v463
    %v527 = vpop.f32.mrb[0].mxu0
    %v528 = vadd.f32 %v426, %v527
    %v529 = vpop.f32.mrb[0].mxu0
    %v530 = vpop.f32.mrb[0].mxu0
    %v531 = vadd.f32 %v429, %v530
    %v532 = vpop.f32.mrb[0].mxu0
    %533 = vmatprep.mubr.bf16.mxu0 0
    %534 = vmatmul.mubr.bf16.gmra.mrb[0].mxu0 %v466
    %v535 = vpop.f32.mrb[0].mxu0
    %v536 = vadd.f32 %v434, %v535
    %v537 = vpop.f32.mrb[0].mxu0
    %v538 = vpop.f32.mrb[0].mxu0
    %v539 = vadd.f32 %v437, %v538
    %v540 = vpop.f32.mrb[0].mxu0
    %541 = vmatprep.mubr.bf16.mxu0 0
    %542 = vmatmul.mubr.bf16.gmra.mrb[0].mxu0 %v469
    %v543 = vpop.f32.mrb[0].mxu0
    %v544 = vadd.f32 %v442, %v543
    %v545 = vpop.f32.mrb[0].mxu0
    %v546 = vpop.f32.mrb[0].mxu0
    %v547 = vadd.f32 %v445, %v546
    %v548 = vpop.f32.mrb[0].mxu0
    %549 = vmatprep.mubr.bf16.mxu0 0
    %550 = vmatmul.mubr.bf16.gmra.mrb[0].mxu0 %v472
    %v551 = vpop.f32.mrb[0].mxu0
    %v552 = vadd.f32 %v450, %v551
    %v553 = vpop.f32.mrb[0].mxu0
    %v554 = vpop.f32.mrb[0].mxu0
    %v555 = vadd.f32 %v453, %v554
    %v556 = vpop.f32.mrb[0].mxu0
    %557 = vdwg.mxu0
    %v558 = vld [vmem:[#allocation2 + $0x2] sm:$0xff]
    %v559 = vld [vmem:[#allocation2 + $0xa] sm:$0xff]
    %v560 = vld [vmem:[#allocation2 + $0x12] sm:$0xff]
    %v561 = vld [vmem:[#allocation2 + $0x1a] sm:$0xff]
    %v562 = vld [vmem:[#allocation2 + $0x22] sm:$0xff]
    %v563 = vld [vmem:[#allocation2 + $0x2a] sm:$0xff]
    %v564 = vld [vmem:[#allocation2 + $0x32] sm:$0xff]
    %v565 = vld [vmem:[#allocation2 + $0x3a] sm:$0xff]
    %v566 = vld [vmem:[#allocation2 + $0x42] sm:$0xff]
    %v567 = vld [vmem:[#allocation2 + $0x4a] sm:$0xff]
    %v568 = vld [vmem:[#allocation2 + $0x52] sm:$0xff]
    %v569 = vld [vmem:[#allocation2 + $0x5a] sm:$0xff]
    %v570 = vpack.c.bf16 %v559, %v558
    %v571 = vpack.c.bf16 %v561, %v560
    %v572 = vpack.c.bf16 %v563, %v562
    %v573 = vpack.c.bf16 %v565, %v564
    %v574 = vpack.c.bf16 %v567, %v566
    %v575 = vpack.c.bf16 %v569, %v568
    %s576 = scalar_lea.vmem %s3, 8
    %v577 = vld [vmem:[%s576] sm:$0x7]
    %v579 = vsel %vm39, %v570, 0
    %v582 = vsel %vm39, %v571, 0
    %v585 = vsel %vm39, %v572, 0
    %v588 = vsel %vm39, %v573, 0
    %v591 = vsel %vm39, %v574, 0
    %v594 = vsel %vm39, %v575, 0
    %v597 = vsel %vm371, %v577, 0
    %599 = vmatprep.subr.bf16.mxu0 0
    %600 = vmatpush1.bf16.msra.mxu0 %v597
    %601 = vmatprep.subr.bf16.mxu0 0
    %602 = vmatpush1.bf16.msra.mxu0 0
    %603 = vmatprep.subr.bf16.mxu0 0
    %604 = vmatpush1.bf16.msra.mxu0 0
    %605 = vmatprep.subr.bf16.mxu0 0
    %606 = vmatpush1.bf16.msra.mxu0 0
    %607 = vmatprep.subr.bf16.mxu0 0
    %608 = vmatpush1.bf16.msra.mxu0 0
    %609 = vmatprep.subr.bf16.mxu0 0
    %610 = vmatpush1.bf16.msra.mxu0 0
    %611 = vmatprep.subr.bf16.mxu0 0
    %612 = vmatpush1.bf16.msra.mxu0 0
    %613 = vmatprep.subr.bf16.mxu0 0
    %614 = vmatpush1.bf16.msra.mxu0 0
    %615 = vmatprep.subr.bf16.mxu0 0
    %616 = vmatpush1.bf16.msra.mxu0 0
    %617 = vmatprep.subr.bf16.mxu0 0
    %618 = vmatpush1.bf16.msra.mxu0 0
    %619 = vmatprep.subr.bf16.mxu0 0
    %620 = vmatpush1.bf16.msra.mxu0 0
    %621 = vmatprep.subr.bf16.mxu0 0
    %622 = vmatpush1.bf16.msra.mxu0 0
    %623 = vmatprep.subr.bf16.mxu0 0
    %624 = vmatpush1.bf16.msra.mxu0 0
    %625 = vmatprep.subr.bf16.mxu0 0
    %626 = vmatpush1.bf16.msra.mxu0 0
    %627 = vmatprep.subr.bf16.mxu0 0
    %628 = vmatpush1.bf16.msra.mxu0 0
    %629 = vmatprep.subr.bf16.mxu0 0
    %630 = vmatpush1.bf16.msra.mxu0 0
    %631 = vmatprep.mubr.bf16.mxu0 0
    %632 = vmatmul.mubr.bf16.gmra.mrb[0].mxu0 %v579
    %v633 = vpop.f32.mrb[0].mxu0
    %v634 = vadd.f32 0.0, %v633
    %v635 = vpop.f32.mrb[0].mxu0
    %v636 = vpop.f32.mrb[0].mxu0
    %v637 = vadd.f32 0.0, %v636
    %v638 = vpop.f32.mrb[0].mxu0
    %639 = vmatprep.mubr.bf16.mxu0 0
    %640 = vmatmul.mubr.bf16.gmra.mrb[0].mxu0 %v582
    %v641 = vpop.f32.mrb[0].mxu0
    %v642 = vadd.f32 0.0, %v641
    %v643 = vpop.f32.mrb[0].mxu0
    %v644 = vpop.f32.mrb[0].mxu0
    %v645 = vadd.f32 0.0, %v644
    %v646 = vpop.f32.mrb[0].mxu0
    %647 = vmatprep.mubr.bf16.mxu0 0
    %648 = vmatmul.mubr.bf16.gmra.mrb[0].mxu0 %v585
    %v649 = vpop.f32.mrb[0].mxu0
    %v650 = vadd.f32 0.0, %v649
    %v651 = vpop.f32.mrb[0].mxu0
    %v652 = vpop.f32.mrb[0].mxu0
    %v653 = vadd.f32 0.0, %v652
    %v654 = vpop.f32.mrb[0].mxu0
    %655 = vmatprep.mubr.bf16.mxu0 0
    %656 = vmatmul.mubr.bf16.gmra.mrb[0].mxu0 %v588
    %v657 = vpop.f32.mrb[0].mxu0
    %v658 = vadd.f32 0.0, %v657
    %v659 = vpop.f32.mrb[0].mxu0
    %v660 = vpop.f32.mrb[0].mxu0
    %v661 = vadd.f32 0.0, %v660
    %v662 = vpop.f32.mrb[0].mxu0
    %663 = vmatprep.mubr.bf16.mxu0 0
    %664 = vmatmul.mubr.bf16.gmra.mrb[0].mxu0 %v591
    %v665 = vpop.f32.mrb[0].mxu0
    %v666 = vadd.f32 0.0, %v665
    %v667 = vpop.f32.mrb[0].mxu0
    %v668 = vpop.f32.mrb[0].mxu0
    %v669 = vadd.f32 0.0, %v668
    %v670 = vpop.f32.mrb[0].mxu0
    %671 = vmatprep.mubr.bf16.mxu0 0
    %672 = vmatmul.mubr.bf16.gmra.mrb[0].mxu0 %v594
    %v673 = vpop.f32.mrb[0].mxu0
    %v674 = vadd.f32 0.0, %v673
    %v675 = vpop.f32.mrb[0].mxu0
    %v676 = vpop.f32.mrb[0].mxu0
    %v677 = vadd.f32 0.0, %v676
    %v678 = vpop.f32.mrb[0].mxu0
    %679 = vdwg.mxu0
    %v680 = vadd.f32 %v512, %v634
    %v681 = vadd.f32 %v515, %v637
    %v682 = vadd.f32 %v520, %v642
    %v683 = vadd.f32 %v523, %v645
    %v684 = vadd.f32 %v528, %v650
    %v685 = vadd.f32 %v531, %v653
    %v686 = vadd.f32 %v536, %v658
    %v687 = vadd.f32 %v539, %v661
    %v688 = vadd.f32 %v544, %v666
    %v689 = vadd.f32 %v547, %v669
    %v690 = vadd.f32 %v552, %v674
    %v691 = vadd.f32 %v555, %v677
    %v692 = vld [vmem:[#allocation2 + $0x3] sm:$0xff]
    %v693 = vld [vmem:[#allocation2 + $0xb] sm:$0xff]
    %v694 = vld [vmem:[#allocation2 + $0x13] sm:$0xff]
    %v695 = vld [vmem:[#allocation2 + $0x1b] sm:$0xff]
    %v696 = vld [vmem:[#allocation2 + $0x23] sm:$0xff]
    %v697 = vld [vmem:[#allocation2 + $0x2b] sm:$0xff]
    %v698 = vld [vmem:[#allocation2 + $0x33] sm:$0xff]
    %v699 = vld [vmem:[#allocation2 + $0x3b] sm:$0xff]
    %v700 = vld [vmem:[#allocation2 + $0x43] sm:$0xff]
    %v701 = vld [vmem:[#allocation2 + $0x4b] sm:$0xff]
    %v702 = vld [vmem:[#allocation2 + $0x53] sm:$0xff]
    %v703 = vld [vmem:[#allocation2 + $0x5b] sm:$0xff]
    %v704 = vpack.c.bf16 %v693, %v692
    %v705 = vpack.c.bf16 %v695, %v694
    %v706 = vpack.c.bf16 %v697, %v696
    %v707 = vpack.c.bf16 %v699, %v698
    %v708 = vpack.c.bf16 %v701, %v700
    %v709 = vpack.c.bf16 %v703, %v702
    %s710 = scalar_lea.vmem %s3, 12
    %v711 = vld [vmem:[%s710] sm:$0x7]
    %v713 = vsel %vm39, %v704, 0
    %v716 = vsel %vm39, %v705, 0
    %v719 = vsel %vm39, %v706, 0
    %v722 = vsel %vm39, %v707, 0
    %v725 = vsel %vm39, %v708, 0
    %v728 = vsel %vm39, %v709, 0
    %v731 = vsel %vm371, %v711, 0
    %733 = vmatprep.subr.bf16.mxu0 0
    %734 = vmatpush1.bf16.msra.mxu0 %v731
    %735 = vmatprep.subr.bf16.mxu0 0
    %736 = vmatpush1.bf16.msra.mxu0 0
    %737 = vmatprep.subr.bf16.mxu0 0
    %738 = vmatpush1.bf16.msra.mxu0 0
    %739 = vmatprep.subr.bf16.mxu0 0
    %740 = vmatpush1.bf16.msra.mxu0 0
    %741 = vmatprep.subr.bf16.mxu0 0
    %742 = vmatpush1.bf16.msra.mxu0 0
    %743 = vmatprep.subr.bf16.mxu0 0
    %744 = vmatpush1.bf16.msra.mxu0 0
    %745 = vmatprep.subr.bf16.mxu0 0
    %746 = vmatpush1.bf16.msra.mxu0 0
    %747 = vmatprep.subr.bf16.mxu0 0
    %748 = vmatpush1.bf16.msra.mxu0 0
    %749 = vmatprep.subr.bf16.mxu0 0
    %750 = vmatpush1.bf16.msra.mxu0 0
    %751 = vmatprep.subr.bf16.mxu0 0
    %752 = vmatpush1.bf16.msra.mxu0 0
    %753 = vmatprep.subr.bf16.mxu0 0
    %754 = vmatpush1.bf16.msra.mxu0 0
    %755 = vmatprep.subr.bf16.mxu0 0
    %756 = vmatpush1.bf16.msra.mxu0 0
    %757 = vmatprep.subr.bf16.mxu0 0
    %758 = vmatpush1.bf16.msra.mxu0 0
    %759 = vmatprep.subr.bf16.mxu0 0
    %760 = vmatpush1.bf16.msra.mxu0 0
    %761 = vmatprep.subr.bf16.mxu0 0
    %762 = vmatpush1.bf16.msra.mxu0 0
    %763 = vmatprep.subr.bf16.mxu0 0
    %764 = vmatpush1.bf16.msra.mxu0 0
    %765 = vmatprep.mubr.bf16.mxu0 0
    %766 = vmatmul.mubr.bf16.gmra.mrb[0].mxu0 %v713
    %v767 = vpop.f32.mrb[0].mxu0
    %v768 = vadd.f32 0.0, %v767
    %v769 = vpop.f32.mrb[0].mxu0
    %v770 = vpop.f32.mrb[0].mxu0
    %v771 = vadd.f32 0.0, %v770
    %v772 = vpop.f32.mrb[0].mxu0
    %773 = vmatprep.mubr.bf16.mxu0 0
    %774 = vmatmul.mubr.bf16.gmra.mrb[0].mxu0 %v716
    %v775 = vpop.f32.mrb[0].mxu0
    %v776 = vadd.f32 0.0, %v775
    %v777 = vpop.f32.mrb[0].mxu0
    %v778 = vpop.f32.mrb[0].mxu0
    %v779 = vadd.f32 0.0, %v778
    %v780 = vpop.f32.mrb[0].mxu0
    %781 = vmatprep.mubr.bf16.mxu0 0
    %782 = vmatmul.mubr.bf16.gmra.mrb[0].mxu0 %v719
    %v783 = vpop.f32.mrb[0].mxu0
    %v784 = vadd.f32 0.0, %v783
    %v785 = vpop.f32.mrb[0].mxu0
    %v786 = vpop.f32.mrb[0].mxu0
    %v787 = vadd.f32 0.0, %v786
    %v788 = vpop.f32.mrb[0].mxu0
    %789 = vmatprep.mubr.bf16.mxu0 0
    %790 = vmatmul.mubr.bf16.gmra.mrb[0].mxu0 %v722
    %v791 = vpop.f32.mrb[0].mxu0
    %v792 = vadd.f32 0.0, %v791
    %v793 = vpop.f32.mrb[0].mxu0
    %v794 = vpop.f32.mrb[0].mxu0
    %v795 = vadd.f32 0.0, %v794
    %v796 = vpop.f32.mrb[0].mxu0
    %797 = vmatprep.mubr.bf16.mxu0 0
    %798 = vmatmul.mubr.bf16.gmra.mrb[0].mxu0 %v725
    %v799 = vpop.f32.mrb[0].mxu0
    %v800 = vadd.f32 0.0, %v799
    %v801 = vpop.f32.mrb[0].mxu0
    %v802 = vpop.f32.mrb[0].mxu0
    %v803 = vadd.f32 0.0, %v802
    %v804 = vpop.f32.mrb[0].mxu0
    %805 = vmatprep.mubr.bf16.mxu0 0
    %806 = vmatmul.mubr.bf16.gmra.mrb[0].mxu0 %v728
    %v807 = vpop.f32.mrb[0].mxu0
    %v808 = vadd.f32 0.0, %v807
    %v809 = vpop.f32.mrb[0].mxu0
    %v810 = vpop.f32.mrb[0].mxu0
    %v811 = vadd.f32 0.0, %v810
    %v812 = vpop.f32.mrb[0].mxu0
    %813 = vdwg.mxu0
    %v814 = vadd.f32 %v680, %v768
    %v815 = vadd.f32 %v681, %v771
    %v816 = vadd.f32 %v682, %v776
    %v817 = vadd.f32 %v683, %v779
    %v818 = vadd.f32 %v684, %v784
    %v819 = vadd.f32 %v685, %v787
    %v820 = vadd.f32 %v686, %v792
    %v821 = vadd.f32 %v687, %v795
    %v822 = vadd.f32 %v688, %v800
    %v823 = vadd.f32 %v689, %v803
    %v824 = vadd.f32 %v690, %v808
    %v825 = vadd.f32 %v691, %v811
    %v826 = vld [vmem:[#allocation2 + $0x4] sm:$0xff]
    %v827 = vld [vmem:[#allocation2 + $0xc] sm:$0xff]
    %v828 = vld [vmem:[#allocation2 + $0x14] sm:$0xff]
    %v829 = vld [vmem:[#allocation2 + $0x1c] sm:$0xff]
    %v830 = vld [vmem:[#allocation2 + $0x24] sm:$0xff]
    %v831 = vld [vmem:[#allocation2 + $0x2c] sm:$0xff]
    %v832 = vld [vmem:[#allocation2 + $0x34] sm:$0xff]
    %v833 = vld [vmem:[#allocation2 + $0x3c] sm:$0xff]
    %v834 = vld [vmem:[#allocation2 + $0x44] sm:$0xff]
    %v835 = vld [vmem:[#allocation2 + $0x4c] sm:$0xff]
    %v836 = vld [vmem:[#allocation2 + $0x54] sm:$0xff]
    %v837 = vld [vmem:[#allocation2 + $0x5c] sm:$0xff]
    %v838 = vpack.c.bf16 %v827, %v826
    %v839 = vpack.c.bf16 %v829, %v828
    %v840 = vpack.c.bf16 %v831, %v830
    %v841 = vpack.c.bf16 %v833, %v832
    %v842 = vpack.c.bf16 %v835, %v834
    %v843 = vpack.c.bf16 %v837, %v836
    %s844 = scalar_lea.vmem %s3, 16
    %v845 = vld [vmem:[%s844] sm:$0x7]
    %v847 = vsel %vm39, %v838, 0
    %v850 = vsel %vm39, %v839, 0
    %v853 = vsel %vm39, %v840, 0
    %v856 = vsel %vm39, %v841, 0
    %v859 = vsel %vm39, %v842, 0
    %v862 = vsel %vm39, %v843, 0
    %v865 = vsel %vm371, %v845, 0
    %867 = vmatprep.subr.bf16.mxu0 0
    %868 = vmatpush1.bf16.msra.mxu0 %v865
    %869 = vmatprep.subr.bf16.mxu0 0
    %870 = vmatpush1.bf16.msra.mxu0 0
    %871 = vmatprep.subr.bf16.mxu0 0
    %872 = vmatpush1.bf16.msra.mxu0 0
    %873 = vmatprep.subr.bf16.mxu0 0
    %874 = vmatpush1.bf16.msra.mxu0 0
    %875 = vmatprep.subr.bf16.mxu0 0
    %876 = vmatpush1.bf16.msra.mxu0 0
    %877 = vmatprep.subr.bf16.mxu0 0
    %878 = vmatpush1.bf16.msra.mxu0 0
    %879 = vmatprep.subr.bf16.mxu0 0
    %880 = vmatpush1.bf16.msra.mxu0 0
    %881 = vmatprep.subr.bf16.mxu0 0
    %882 = vmatpush1.bf16.msra.mxu0 0
    %883 = vmatprep.subr.bf16.mxu0 0
    %884 = vmatpush1.bf16.msra.mxu0 0
    %885 = vmatprep.subr.bf16.mxu0 0
    %886 = vmatpush1.bf16.msra.mxu0 0
    %887 = vmatprep.subr.bf16.mxu0 0
    %888 = vmatpush1.bf16.msra.mxu0 0
    %889 = vmatprep.subr.bf16.mxu0 0
    %890 = vmatpush1.bf16.msra.mxu0 0
    %891 = vmatprep.subr.bf16.mxu0 0
    %892 = vmatpush1.bf16.msra.mxu0 0
    %893 = vmatprep.subr.bf16.mxu0 0
    %894 = vmatpush1.bf16.msra.mxu0 0
    %895 = vmatprep.subr.bf16.mxu0 0
    %896 = vmatpush1.bf16.msra.mxu0 0
    %897 = vmatprep.subr.bf16.mxu0 0
    %898 = vmatpush1.bf16.msra.mxu0 0
    %899 = vmatprep.mubr.bf16.mxu0 0
    %900 = vmatmul.mubr.bf16.gmra.mrb[0].mxu0 %v847
    %v901 = vpop.f32.mrb[0].mxu0
    %v902 = vadd.f32 0.0, %v901
    %v903 = vpop.f32.mrb[0].mxu0
    %v904 = vpop.f32.mrb[0].mxu0
    %v905 = vadd.f32 0.0, %v904
    %v906 = vpop.f32.mrb[0].mxu0
    %907 = vmatprep.mubr.bf16.mxu0 0
    %908 = vmatmul.mubr.bf16.gmra.mrb[0].mxu0 %v850
    %v909 = vpop.f32.mrb[0].mxu0
    %v910 = vadd.f32 0.0, %v909
    %v911 = vpop.f32.mrb[0].mxu0
    %v912 = vpop.f32.mrb[0].mxu0
    %v913 = vadd.f32 0.0, %v912
    %v914 = vpop.f32.mrb[0].mxu0
    %915 = vmatprep.mubr.bf16.mxu0 0
    %916 = vmatmul.mubr.bf16.gmra.mrb[0].mxu0 %v853
    %v917 = vpop.f32.mrb[0].mxu0
    %v918 = vadd.f32 0.0, %v917
    %v919 = vpop.f32.mrb[0].mxu0
    %v920 = vpop.f32.mrb[0].mxu0
    %v921 = vadd.f32 0.0, %v920
    %v922 = vpop.f32.mrb[0].mxu0
    %923 = vmatprep.mubr.bf16.mxu0 0
    %924 = vmatmul.mubr.bf16.gmra.mrb[0].mxu0 %v856
    %v925 = vpop.f32.mrb[0].mxu0
    %v926 = vadd.f32 0.0, %v925
    %v927 = vpop.f32.mrb[0].mxu0
    %v928 = vpop.f32.mrb[0].mxu0
    %v929 = vadd.f32 0.0, %v928
    %v930 = vpop.f32.mrb[0].mxu0
    %931 = vmatprep.mubr.bf16.mxu0 0
    %932 = vmatmul.mubr.bf16.gmra.mrb[0].mxu0 %v859
    %v933 = vpop.f32.mrb[0].mxu0
    %v934 = vadd.f32 0.0, %v933
    %v935 = vpop.f32.mrb[0].mxu0
    %v936 = vpop.f32.mrb[0].mxu0
    %v937 = vadd.f32 0.0, %v936
    %v938 = vpop.f32.mrb[0].mxu0
    %939 = vmatprep.mubr.bf16.mxu0 0
    %940 = vmatmul.mubr.bf16.gmra.mrb[0].mxu0 %v862
    %v941 = vpop.f32.mrb[0].mxu0
    %v942 = vadd.f32 0.0, %v941
    %v943 = vpop.f32.mrb[0].mxu0
    %v944 = vpop.f32.mrb[0].mxu0
    %v945 = vadd.f32 0.0, %v944
    %v946 = vpop.f32.mrb[0].mxu0
    %947 = vdwg.mxu0
    %v948 = vadd.f32 %v814, %v902
    %v949 = vadd.f32 %v815, %v905
    %v950 = vadd.f32 %v816, %v910
    %v951 = vadd.f32 %v817, %v913
    %v952 = vadd.f32 %v818, %v918
    %v953 = vadd.f32 %v819, %v921
    %v954 = vadd.f32 %v820, %v926
    %v955 = vadd.f32 %v821, %v929
    %v956 = vadd.f32 %v822, %v934
    %v957 = vadd.f32 %v823, %v937
    %v958 = vadd.f32 %v824, %v942
    %v959 = vadd.f32 %v825, %v945
    %v960 = vld [vmem:[#allocation2 + $0xc] sm:$0xff]
    %v961 = vld [vmem:[#allocation2 + $0x14] sm:$0xff]
    %v962 = vld [vmem:[#allocation2 + $0x1c] sm:$0xff]
    %v963 = vld [vmem:[#allocation2 + $0x24] sm:$0xff]
    %v964 = vld [vmem:[#allocation2 + $0x2c] sm:$0xff]
    %v965 = vld [vmem:[#allocation2 + $0x34] sm:$0xff]
    %v966 = vld [vmem:[#allocation2 + $0x3c] sm:$0xff]
    %v967 = vld [vmem:[#allocation2 + $0x44] sm:$0xff]
    %v968 = vld [vmem:[#allocation2 + $0x4c] sm:$0xff]
    %v969 = vld [vmem:[#allocation2 + $0x54] sm:$0xff]
    %v970 = vld [vmem:[#allocation2 + $0x5c] sm:$0xff]
    %v971 = vld [vmem:[#allocation2 + $0x64] sm:$0xff]
    %v972 = vpack.c.bf16 %v961, %v960
    %v973 = vpack.c.bf16 %v963, %v962
    %v974 = vpack.c.bf16 %v965, %v964
    %v975 = vpack.c.bf16 %v967, %v966
    %v976 = vpack.c.bf16 %v969, %v968
    %v977 = vpack.c.bf16 %v971, %v970
    %s978 = scalar_lea.vmem %s3, 20
    %v979 = vld [vmem:[%s978] sm:$0x7]
    %v981 = vsel %vm39, %v972, 0
    %v984 = vsel %vm39, %v973, 0
    %v987 = vsel %vm39, %v974, 0
    %v990 = vsel %vm39, %v975, 0
    %v993 = vsel %vm39, %v976, 0
    %v996 = vsel %vm39, %v977, 0
    %v999 = vsel %vm371, %v979, 0
    %1001 = vmatprep.subr.bf16.mxu0 0
    %1002 = vmatpush1.bf16.msra.mxu0 %v999
    %1003 = vmatprep.subr.bf16.mxu0 0
    %1004 = vmatpush1.bf16.msra.mxu0 0
    %1005 = vmatprep.subr.bf16.mxu0 0
    %1006 = vmatpush1.bf16.msra.mxu0 0
    %1007 = vmatprep.subr.bf16.mxu0 0
    %1008 = vmatpush1.bf16.msra.mxu0 0
    %1009 = vmatprep.subr.bf16.mxu0 0
    %1010 = vmatpush1.bf16.msra.mxu0 0
    %1011 = vmatprep.subr.bf16.mxu0 0
    %1012 = vmatpush1.bf16.msra.mxu0 0
    %1013 = vmatprep.subr.bf16.mxu0 0
    %1014 = vmatpush1.bf16.msra.mxu0 0
    %1015 = vmatprep.subr.bf16.mxu0 0
    %1016 = vmatpush1.bf16.msra.mxu0 0
    %1017 = vmatprep.subr.bf16.mxu0 0
    %1018 = vmatpush1.bf16.msra.mxu0 0
    %1019 = vmatprep.subr.bf16.mxu0 0
    %1020 = vmatpush1.bf16.msra.mxu0 0
    %1021 = vmatprep.subr.bf16.mxu0 0
    %1022 = vmatpush1.bf16.msra.mxu0 0
    %1023 = vmatprep.subr.bf16.mxu0 0
    %1024 = vmatpush1.bf16.msra.mxu0 0
    %1025 = vmatprep.subr.bf16.mxu0 0
    %1026 = vmatpush1.bf16.msra.mxu0 0
    %1027 = vmatprep.subr.bf16.mxu0 0
    %1028 = vmatpush1.bf16.msra.mxu0 0
    %1029 = vmatprep.subr.bf16.mxu0 0
    %1030 = vmatpush1.bf16.msra.mxu0 0
    %1031 = vmatprep.subr.bf16.mxu0 0
    %1032 = vmatpush1.bf16.msra.mxu0 0
    %1033 = vmatprep.mubr.bf16.mxu0 0
    %1034 = vmatmul.mubr.bf16.gmra.mrb[0].mxu0 %v981
    %v1035 = vpop.f32.mrb[0].mxu0
    %v1036 = vadd.f32 0.0, %v1035
    %v1037 = vpop.f32.mrb[0].mxu0
    %v1038 = vpop.f32.mrb[0].mxu0
    %v1039 = vadd.f32 0.0, %v1038
    %v1040 = vpop.f32.mrb[0].mxu0
    %1041 = vmatprep.mubr.bf16.mxu0 0
    %1042 = vmatmul.mubr.bf16.gmra.mrb[0].mxu0 %v984
    %v1043 = vpop.f32.mrb[0].mxu0
    %v1044 = vadd.f32 0.0, %v1043
    %v1045 = vpop.f32.mrb[0].mxu0
    %v1046 = vpop.f32.mrb[0].mxu0
    %v1047 = vadd.f32 0.0, %v1046
    %v1048 = vpop.f32.mrb[0].mxu0
    %1049 = vmatprep.mubr.bf16.mxu0 0
    %1050 = vmatmul.mubr.bf16.gmra.mrb[0].mxu0 %v987
    %v1051 = vpop.f32.mrb[0].mxu0
    %v1052 = vadd.f32 0.0, %v1051
    %v1053 = vpop.f32.mrb[0].mxu0
    %v1054 = vpop.f32.mrb[0].mxu0
    %v1055 = vadd.f32 0.0, %v1054
    %v1056 = vpop.f32.mrb[0].mxu0
    %1057 = vmatprep.mubr.bf16.mxu0 0
    %1058 = vmatmul.mubr.bf16.gmra.mrb[0].mxu0 %v990
    %v1059 = vpop.f32.mrb[0].mxu0
    %v1060 = vadd.f32 0.0, %v1059
    %v1061 = vpop.f32.mrb[0].mxu0
    %v1062 = vpop.f32.mrb[0].mxu0
    %v1063 = vadd.f32 0.0, %v1062
    %v1064 = vpop.f32.mrb[0].mxu0
    %1065 = vmatprep.mubr.bf16.mxu0 0
    %1066 = vmatmul.mubr.bf16.gmra.mrb[0].mxu0 %v993
    %v1067 = vpop.f32.mrb[0].mxu0
    %v1068 = vadd.f32 0.0, %v1067
    %v1069 = vpop.f32.mrb[0].mxu0
    %v1070 = vpop.f32.mrb[0].mxu0
    %v1071 = vadd.f32 0.0, %v1070
    %v1072 = vpop.f32.mrb[0].mxu0
    %1073 = vmatprep.mubr.bf16.mxu0 0
    %1074 = vmatmul.mubr.bf16.gmra.mrb[0].mxu0 %v996
    %v1075 = vpop.f32.mrb[0].mxu0
    %v1076 = vadd.f32 0.0, %v1075
    %v1077 = vpop.f32.mrb[0].mxu0
    %v1078 = vpop.f32.mrb[0].mxu0
    %v1079 = vadd.f32 0.0, %v1078
    %v1080 = vpop.f32.mrb[0].mxu0
    %1081 = vdwg.mxu0
    %v1082 = vadd.f32 %v948, %v1036
    %v1083 = vadd.f32 %v949, %v1039
    %v1084 = vadd.f32 %v950, %v1044
    %v1085 = vadd.f32 %v951, %v1047
    %v1086 = vadd.f32 %v952, %v1052
    %v1087 = vadd.f32 %v953, %v1055
    %v1088 = vadd.f32 %v954, %v1060
    %v1089 = vadd.f32 %v955, %v1063
    %v1090 = vadd.f32 %v956, %v1068
    %v1091 = vadd.f32 %v957, %v1071
    %v1092 = vadd.f32 %v958, %v1076
    %v1093 = vadd.f32 %v959, %v1079
    %v1094 = vld [vmem:[#allocation2 + $0xd] sm:$0xff]
    %v1095 = vld [vmem:[#allocation2 + $0x15] sm:$0xff]
    %v1096 = vld [vmem:[#allocation2 + $0x1d] sm:$0xff]
    %v1097 = vld [vmem:[#allocation2 + $0x25] sm:$0xff]
    %v1098 = vld [vmem:[#allocation2 + $0x2d] sm:$0xff]
    %v1099 = vld [vmem:[#allocation2 + $0x35] sm:$0xff]
    %v1100 = vld [vmem:[#allocation2 + $0x3d] sm:$0xff]
    %v1101 = vld [vmem:[#allocation2 + $0x45] sm:$0xff]
    %v1102 = vld [vmem:[#allocation2 + $0x4d] sm:$0xff]
    %v1103 = vld [vmem:[#allocation2 + $0x55] sm:$0xff]
    %v1104 = vld [vmem:[#allocation2 + $0x5d] sm:$0xff]
    %v1105 = vld [vmem:[#allocation2 + $0x65] sm:$0xff]
    %v1106 = vpack.c.bf16 %v1095, %v1094
    %v1107 = vpack.c.bf16 %v1097, %v1096
    %v1108 = vpack.c.bf16 %v1099, %v1098
    %v1109 = vpack.c.bf16 %v1101, %v1100
    %v1110 = vpack.c.bf16 %v1103, %v1102
    %v1111 = vpack.c.bf16 %v1105, %v1104
    %s1112 = scalar_lea.vmem %s3, 24
    %v1113 = vld [vmem:[%s1112] sm:$0x7]
    %v1115 = vsel %vm39, %v1106, 0
    %v1118 = vsel %vm39, %v1107, 0
    %v1121 = vsel %vm39, %v1108, 0
    %v1124 = vsel %vm39, %v1109, 0
    %v1127 = vsel %vm39, %v1110, 0
    %v1130 = vsel %vm39, %v1111, 0
    %v1133 = vsel %vm371, %v1113, 0
    %1135 = vmatprep.subr.bf16.mxu0 0
    %1136 = vmatpush1.bf16.msra.mxu0 %v1133
    %1137 = vmatprep.subr.bf16.mxu0 0
    %1138 = vmatpush1.bf16.msra.mxu0 0
    %1139 = vmatprep.subr.bf16.mxu0 0
    %1140 = vmatpush1.bf16.msra.mxu0 0
    %1141 = vmatprep.subr.bf16.mxu0 0
    %1142 = vmatpush1.bf16.msra.mxu0 0
    %1143 = vmatprep.subr.bf16.mxu0 0
    %1144 = vmatpush1.bf16.msra.mxu0 0
    %1145 = vmatprep.subr.bf16.mxu0 0
    %1146 = vmatpush1.bf16.msra.mxu0 0
    %1147 = vmatprep.subr.bf16.mxu0 0
    %1148 = vmatpush1.bf16.msra.mxu0 0
    %1149 = vmatprep.subr.bf16.mxu0 0
    %1150 = vmatpush1.bf16.msra.mxu0 0
    %1151 = vmatprep.subr.bf16.mxu0 0
    %1152 = vmatpush1.bf16.msra.mxu0 0
    %1153 = vmatprep.subr.bf16.mxu0 0
    %1154 = vmatpush1.bf16.msra.mxu0 0
    %1155 = vmatprep.subr.bf16.mxu0 0
    %1156 = vmatpush1.bf16.msra.mxu0 0
    %1157 = vmatprep.subr.bf16.mxu0 0
    %1158 = vmatpush1.bf16.msra.mxu0 0
    %1159 = vmatprep.subr.bf16.mxu0 0
    %1160 = vmatpush1.bf16.msra.mxu0 0
    %1161 = vmatprep.subr.bf16.mxu0 0
    %1162 = vmatpush1.bf16.msra.mxu0 0
    %1163 = vmatprep.subr.bf16.mxu0 0
    %1164 = vmatpush1.bf16.msra.mxu0 0
    %1165 = vmatprep.subr.bf16.mxu0 0
    %1166 = vmatpush1.bf16.msra.mxu0 0
    %1167 = vmatprep.mubr.bf16.mxu0 0
    %1168 = vmatmul.mubr.bf16.gmra.mrb[0].mxu0 %v1115
    %v1169 = vpop.f32.mrb[0].mxu0
    %v1170 = vadd.f32 0.0, %v1169
    %v1171 = vpop.f32.mrb[0].mxu0
    %v1172 = vpop.f32.mrb[0].mxu0
    %v1173 = vadd.f32 0.0, %v1172
    %v1174 = vpop.f32.mrb[0].mxu0
    %1175 = vmatprep.mubr.bf16.mxu0 0
    %1176 = vmatmul.mubr.bf16.gmra.mrb[0].mxu0 %v1118
    %v1177 = vpop.f32.mrb[0].mxu0
    %v1178 = vadd.f32 0.0, %v1177
    %v1179 = vpop.f32.mrb[0].mxu0
    %v1180 = vpop.f32.mrb[0].mxu0
    %v1181 = vadd.f32 0.0, %v1180
    %v1182 = vpop.f32.mrb[0].mxu0
    %1183 = vmatprep.mubr.bf16.mxu0 0
    %1184 = vmatmul.mubr.bf16.gmra.mrb[0].mxu0 %v1121
    %v1185 = vpop.f32.mrb[0].mxu0
    %v1186 = vadd.f32 0.0, %v1185
    %v1187 = vpop.f32.mrb[0].mxu0
    %v1188 = vpop.f32.mrb[0].mxu0
    %v1189 = vadd.f32 0.0, %v1188
    %v1190 = vpop.f32.mrb[0].mxu0
    %1191 = vmatprep.mubr.bf16.mxu0 0
    %1192 = vmatmul.mubr.bf16.gmra.mrb[0].mxu0 %v1124
    %v1193 = vpop.f32.mrb[0].mxu0
    %v1194 = vadd.f32 0.0, %v1193
    %v1195 = vpop.f32.mrb[0].mxu0
    %v1196 = vpop.f32.mrb[0].mxu0
    %v1197 = vadd.f32 0.0, %v1196
    %v1198 = vpop.f32.mrb[0].mxu0
    %1199 = vmatprep.mubr.bf16.mxu0 0
    %1200 = vmatmul.mubr.bf16.gmra.mrb[0].mxu0 %v1127
    %v1201 = vpop.f32.mrb[0].mxu0
    %v1202 = vadd.f32 0.0, %v1201
    %v1203 = vpop.f32.mrb[0].mxu0
    %v1204 = vpop.f32.mrb[0].mxu0
    %v1205 = vadd.f32 0.0, %v1204
    %v1206 = vpop.f32.mrb[0].mxu0
    %1207 = vmatprep.mubr.bf16.mxu0 0
    %1208 = vmatmul.mubr.bf16.gmra.mrb[0].mxu0 %v1130
    %v1209 = vpop.f32.mrb[0].mxu0
    %v1210 = vadd.f32 0.0, %v1209
    %v1211 = vpop.f32.mrb[0].mxu0
    %v1212 = vpop.f32.mrb[0].mxu0
    %v1213 = vadd.f32 0.0, %v1212
    %v1214 = vpop.f32.mrb[0].mxu0
    %1215 = vdwg.mxu0
    %v1216 = vadd.f32 %v1082, %v1170
    %v1217 = vadd.f32 %v1083, %v1173
    %v1218 = vadd.f32 %v1084, %v1178
    %v1219 = vadd.f32 %v1085, %v1181
    %v1220 = vadd.f32 %v1086, %v1186
    %v1221 = vadd.f32 %v1087, %v1189
    %v1222 = vadd.f32 %v1088, %v1194
    %v1223 = vadd.f32 %v1089, %v1197
    %v1224 = vadd.f32 %v1090, %v1202
    %v1225 = vadd.f32 %v1091, %v1205
    %v1226 = vadd.f32 %v1092, %v1210
    %v1227 = vadd.f32 %v1093, %v1213
    %v1228 = vld [vmem:[#allocation2 + $0xe] sm:$0xff]
    %v1229 = vld [vmem:[#allocation2 + $0x16] sm:$0xff]
    %v1230 = vld [vmem:[#allocation2 + $0x1e] sm:$0xff]
    %v1231 = vld [vmem:[#allocation2 + $0x26] sm:$0xff]
    %v1232 = vld [vmem:[#allocation2 + $0x2e] sm:$0xff]
    %v1233 = vld [vmem:[#allocation2 + $0x36] sm:$0xff]
    %v1234 = vld [vmem:[#allocation2 + $0x3e] sm:$0xff]
    %v1235 = vld [vmem:[#allocation2 + $0x46] sm:$0xff]
    %v1236 = vld [vmem:[#allocation2 + $0x4e] sm:$0xff]
    %v1237 = vld [vmem:[#allocation2 + $0x56] sm:$0xff]
    %v1238 = vld [vmem:[#allocation2 + $0x5e] sm:$0xff]
    %v1239 = vld [vmem:[#allocation2 + $0x66] sm:$0xff]
    %v1240 = vpack.c.bf16 %v1229, %v1228
    %v1241 = vpack.c.bf16 %v1231, %v1230
    %v1242 = vpack.c.bf16 %v1233, %v1232
    %v1243 = vpack.c.bf16 %v1235, %v1234
    %v1244 = vpack.c.bf16 %v1237, %v1236
    %v1245 = vpack.c.bf16 %v1239, %v1238
    %s1246 = scalar_lea.vmem %s3, 28
    %v1247 = vld [vmem:[%s1246] sm:$0x7]
    %v1249 = vsel %vm39, %v1240, 0
    %v1252 = vsel %vm39, %v1241, 0
    %v1255 = vsel %vm39, %v1242, 0
    %v1258 = vsel %vm39, %v1243, 0
    %v1261 = vsel %vm39, %v1244, 0
    %v1264 = vsel %vm39, %v1245, 0
    %v1267 = vsel %vm371, %v1247, 0
    %1269 = vmatprep.subr.bf16.mxu0 0
    %1270 = vmatpush1.bf16.msra.mxu0 %v1267
    %1271 = vmatprep.subr.bf16.mxu0 0
    %1272 = vmatpush1.bf16.msra.mxu0 0
    %1273 = vmatprep.subr.bf16.mxu0 0
    %1274 = vmatpush1.bf16.msra.mxu0 0
    %1275 = vmatprep.subr.bf16.mxu0 0
    %1276 = vmatpush1.bf16.msra.mxu0 0
    %1277 = vmatprep.subr.bf16.mxu0 0
    %1278 = vmatpush1.bf16.msra.mxu0 0
    %1279 = vmatprep.subr.bf16.mxu0 0
    %1280 = vmatpush1.bf16.msra.mxu0 0
    %1281 = vmatprep.subr.bf16.mxu0 0
    %1282 = vmatpush1.bf16.msra.mxu0 0
    %1283 = vmatprep.subr.bf16.mxu0 0
    %1284 = vmatpush1.bf16.msra.mxu0 0
    %1285 = vmatprep.subr.bf16.mxu0 0
    %1286 = vmatpush1.bf16.msra.mxu0 0
    %1287 = vmatprep.subr.bf16.mxu0 0
    %1288 = vmatpush1.bf16.msra.mxu0 0
    %1289 = vmatprep.subr.bf16.mxu0 0
    %1290 = vmatpush1.bf16.msra.mxu0 0
    %1291 = vmatprep.subr.bf16.mxu0 0
    %1292 = vmatpush1.bf16.msra.mxu0 0
    %1293 = vmatprep.subr.bf16.mxu0 0
    %1294 = vmatpush1.bf16.msra.mxu0 0
    %1295 = vmatprep.subr.bf16.mxu0 0
    %1296 = vmatpush1.bf16.msra.mxu0 0
    %1297 = vmatprep.subr.bf16.mxu0 0
    %1298 = vmatpush1.bf16.msra.mxu0 0
    %1299 = vmatprep.subr.bf16.mxu0 0
    %1300 = vmatpush1.bf16.msra.mxu0 0
    %1301 = vmatprep.mubr.bf16.mxu0 0
    %1302 = vmatmul.mubr.bf16.gmra.mrb[0].mxu0 %v1249
    %v1303 = vpop.f32.mrb[0].mxu0
    %v1304 = vadd.f32 0.0, %v1303
    %v1305 = vpop.f32.mrb[0].mxu0
    %v1306 = vpop.f32.mrb[0].mxu0
    %v1307 = vadd.f32 0.0, %v1306
    %v1308 = vpop.f32.mrb[0].mxu0
    %1309 = vmatprep.mubr.bf16.mxu0 0
    %1310 = vmatmul.mubr.bf16.gmra.mrb[0].mxu0 %v1252
    %v1311 = vpop.f32.mrb[0].mxu0
    %v1312 = vadd.f32 0.0, %v1311
    %v1313 = vpop.f32.mrb[0].mxu0
    %v1314 = vpop.f32.mrb[0].mxu0
    %v1315 = vadd.f32 0.0, %v1314
    %v1316 = vpop.f32.mrb[0].mxu0
    %1317 = vmatprep.mubr.bf16.mxu0 0
    %1318 = vmatmul.mubr.bf16.gmra.mrb[0].mxu0 %v1255
    %v1319 = vpop.f32.mrb[0].mxu0
    %v1320 = vadd.f32 0.0, %v1319
    %v1321 = vpop.f32.mrb[0].mxu0
    %v1322 = vpop.f32.mrb[0].mxu0
    %v1323 = vadd.f32 0.0, %v1322
    %v1324 = vpop.f32.mrb[0].mxu0
    %1325 = vmatprep.mubr.bf16.mxu0 0
    %1326 = vmatmul.mubr.bf16.gmra.mrb[0].mxu0 %v1258
    %v1327 = vpop.f32.mrb[0].mxu0
    %v1328 = vadd.f32 0.0, %v1327
    %v1329 = vpop.f32.mrb[0].mxu0
    %v1330 = vpop.f32.mrb[0].mxu0
    %v1331 = vadd.f32 0.0, %v1330
    %v1332 = vpop.f32.mrb[0].mxu0
    %1333 = vmatprep.mubr.bf16.mxu0 0
    %1334 = vmatmul.mubr.bf16.gmra.mrb[0].mxu0 %v1261
    %v1335 = vpop.f32.mrb[0].mxu0
    %v1336 = vadd.f32 0.0, %v1335
    %v1337 = vpop.f32.mrb[0].mxu0
    %v1338 = vpop.f32.mrb[0].mxu0
    %v1339 = vadd.f32 0.0, %v1338
    %v1340 = vpop.f32.mrb[0].mxu0
    %1341 = vmatprep.mubr.bf16.mxu0 0
    %1342 = vmatmul.mubr.bf16.gmra.mrb[0].mxu0 %v1264
    %v1343 = vpop.f32.mrb[0].mxu0
    %v1344 = vadd.f32 0.0, %v1343
    %v1345 = vpop.f32.mrb[0].mxu0
    %v1346 = vpop.f32.mrb[0].mxu0
    %v1347 = vadd.f32 0.0, %v1346
    %v1348 = vpop.f32.mrb[0].mxu0
    %1349 = vdwg.mxu0
    %v1350 = vadd.f32 %v1216, %v1304
    %v1351 = vadd.f32 %v1217, %v1307
    %v1352 = vadd.f32 %v1218, %v1312
    %v1353 = vadd.f32 %v1219, %v1315
    %v1354 = vadd.f32 %v1220, %v1320
    %v1355 = vadd.f32 %v1221, %v1323
    %v1356 = vadd.f32 %v1222, %v1328
    %v1357 = vadd.f32 %v1223, %v1331
    %v1358 = vadd.f32 %v1224, %v1336
    %v1359 = vadd.f32 %v1225, %v1339
    %v1360 = vadd.f32 %v1226, %v1344
    %v1361 = vadd.f32 %v1227, %v1347
    %v1362 = vld [vmem:[#allocation2 + $0xf] sm:$0xff]
    %v1363 = vld [vmem:[#allocation2 + $0x17] sm:$0xff]
    %v1364 = vld [vmem:[#allocation2 + $0x1f] sm:$0xff]
    %v1365 = vld [vmem:[#allocation2 + $0x27] sm:$0xff]
    %v1366 = vld [vmem:[#allocation2 + $0x2f] sm:$0xff]
    %v1367 = vld [vmem:[#allocation2 + $0x37] sm:$0xff]
    %v1368 = vld [vmem:[#allocation2 + $0x3f] sm:$0xff]
    %v1369 = vld [vmem:[#allocation2 + $0x47] sm:$0xff]
    %v1370 = vld [vmem:[#allocation2 + $0x4f] sm:$0xff]
    %v1371 = vld [vmem:[#allocation2 + $0x57] sm:$0xff]
    %v1372 = vld [vmem:[#allocation2 + $0x5f] sm:$0xff]
    %v1373 = vld [vmem:[#allocation2 + $0x67] sm:$0xff]
    %v1374 = vpack.c.bf16 %v1363, %v1362
    %v1375 = vpack.c.bf16 %v1365, %v1364
    %v1376 = vpack.c.bf16 %v1367, %v1366
    %v1377 = vpack.c.bf16 %v1369, %v1368
    %v1378 = vpack.c.bf16 %v1371, %v1370
    %v1379 = vpack.c.bf16 %v1373, %v1372
    %s1380 = scalar_lea.vmem %s3, 32
    %v1381 = vld [vmem:[%s1380] sm:$0x7]
    %v1383 = vsel %vm39, %v1374, 0
    %v1386 = vsel %vm39, %v1375, 0
    %v1389 = vsel %vm39, %v1376, 0
    %v1392 = vsel %vm39, %v1377, 0
    %v1395 = vsel %vm39, %v1378, 0
    %v1398 = vsel %vm39, %v1379, 0
    %v1401 = vsel %vm371, %v1381, 0
    %1403 = vmatprep.subr.bf16.mxu0 0
    %1404 = vmatpush1.bf16.msra.mxu0 %v1401
    %1405 = vmatprep.subr.bf16.mxu0 0
    %1406 = vmatpush1.bf16.msra.mxu0 0
    %1407 = vmatprep.subr.bf16.mxu0 0
    %1408 = vmatpush1.bf16.msra.mxu0 0
    %1409 = vmatprep.subr.bf16.mxu0 0
    %1410 = vmatpush1.bf16.msra.mxu0 0
    %1411 = vmatprep.subr.bf16.mxu0 0
    %1412 = vmatpush1.bf16.msra.mxu0 0
    %1413 = vmatprep.subr.bf16.mxu0 0
    %1414 = vmatpush1.bf16.msra.mxu0 0
    %1415 = vmatprep.subr.bf16.mxu0 0
    %1416 = vmatpush1.bf16.msra.mxu0 0
    %1417 = vmatprep.subr.bf16.mxu0 0
    %1418 = vmatpush1.bf16.msra.mxu0 0
    %1419 = vmatprep.subr.bf16.mxu0 0
    %1420 = vmatpush1.bf16.msra.mxu0 0
    %1421 = vmatprep.subr.bf16.mxu0 0
    %1422 = vmatpush1.bf16.msra.mxu0 0
    %1423 = vmatprep.subr.bf16.mxu0 0
    %1424 = vmatpush1.bf16.msra.mxu0 0
    %1425 = vmatprep.subr.bf16.mxu0 0
    %1426 = vmatpush1.bf16.msra.mxu0 0
    %1427 = vmatprep.subr.bf16.mxu0 0
    %1428 = vmatpush1.bf16.msra.mxu0 0
    %1429 = vmatprep.subr.bf16.mxu0 0
    %1430 = vmatpush1.bf16.msra.mxu0 0
    %1431 = vmatprep.subr.bf16.mxu0 0
    %1432 = vmatpush1.bf16.msra.mxu0 0
    %1433 = vmatprep.subr.bf16.mxu0 0
    %1434 = vmatpush1.bf16.msra.mxu0 0
    %1435 = vmatprep.mubr.bf16.mxu0 0
    %1436 = vmatmul.mubr.bf16.gmra.mrb[0].mxu0 %v1383
    %v1437 = vpop.f32.mrb[0].mxu0
    %v1438 = vadd.f32 0.0, %v1437
    %v1439 = vpop.f32.mrb[0].mxu0
    %v1440 = vpop.f32.mrb[0].mxu0
    %v1441 = vadd.f32 0.0, %v1440
    %v1442 = vpop.f32.mrb[0].mxu0
    %1443 = vmatprep.mubr.bf16.mxu0 0
    %1444 = vmatmul.mubr.bf16.gmra.mrb[0].mxu0 %v1386
    %v1445 = vpop.f32.mrb[0].mxu0
    %v1446 = vadd.f32 0.0, %v1445
    %v1447 = vpop.f32.mrb[0].mxu0
    %v1448 = vpop.f32.mrb[0].mxu0
    %v1449 = vadd.f32 0.0, %v1448
    %v1450 = vpop.f32.mrb[0].mxu0
    %1451 = vmatprep.mubr.bf16.mxu0 0
    %1452 = vmatmul.mubr.bf16.gmra.mrb[0].mxu0 %v1389
    %v1453 = vpop.f32.mrb[0].mxu0
    %v1454 = vadd.f32 0.0, %v1453
    %v1455 = vpop.f32.mrb[0].mxu0
    %v1456 = vpop.f32.mrb[0].mxu0
    %v1457 = vadd.f32 0.0, %v1456
    %v1458 = vpop.f32.mrb[0].mxu0
    %1459 = vmatprep.mubr.bf16.mxu0 0
    %1460 = vmatmul.mubr.bf16.gmra.mrb[0].mxu0 %v1392
    %v1461 = vpop.f32.mrb[0].mxu0
    %v1462 = vadd.f32 0.0, %v1461
    %v1463 = vpop.f32.mrb[0].mxu0
    %v1464 = vpop.f32.mrb[0].mxu0
    %v1465 = vadd.f32 0.0, %v1464
    %v1466 = vpop.f32.mrb[0].mxu0
    %1467 = vmatprep.mubr.bf16.mxu0 0
    %1468 = vmatmul.mubr.bf16.gmra.mrb[0].mxu0 %v1395
    %v1469 = vpop.f32.mrb[0].mxu0
    %v1470 = vadd.f32 0.0, %v1469
    %v1471 = vpop.f32.mrb[0].mxu0
    %v1472 = vpop.f32.mrb[0].mxu0
    %v1473 = vadd.f32 0.0, %v1472
    %v1474 = vpop.f32.mrb[0].mxu0
    %1475 = vmatprep.mubr.bf16.mxu0 0
    %1476 = vmatmul.mubr.bf16.gmra.mrb[0].mxu0 %v1398
    %v1477 = vpop.f32.mrb[0].mxu0
    %v1478 = vadd.f32 0.0, %v1477
    %v1479 = vpop.f32.mrb[0].mxu0
    %v1480 = vpop.f32.mrb[0].mxu0
    %v1481 = vadd.f32 0.0, %v1480
    %v1482 = vpop.f32.mrb[0].mxu0
    %1483 = vdwg.mxu0
    %v1484 = vadd.f32 %v1350, %v1438
    %v1485 = vadd.f32 %v1351, %v1441
    %v1486 = vadd.f32 %v1352, %v1446
    %v1487 = vadd.f32 %v1353, %v1449
    %v1488 = vadd.f32 %v1354, %v1454
    %v1489 = vadd.f32 %v1355, %v1457
    %v1490 = vadd.f32 %v1356, %v1462
    %v1491 = vadd.f32 %v1357, %v1465
    %v1492 = vadd.f32 %v1358, %v1470
    %v1493 = vadd.f32 %v1359, %v1473
    %v1494 = vadd.f32 %v1360, %v1478
    %v1495 = vadd.f32 %v1361, %v1481
    %v1496 = vld [vmem:[#allocation2 + $0x10] sm:$0xff]
    %v1497 = vld [vmem:[#allocation2 + $0x18] sm:$0xff]
    %v1498 = vld [vmem:[#allocation2 + $0x20] sm:$0xff]
    %v1499 = vld [vmem:[#allocation2 + $0x28] sm:$0xff]
    %v1500 = vld [vmem:[#allocation2 + $0x30] sm:$0xff]
    %v1501 = vld [vmem:[#allocation2 + $0x38] sm:$0xff]
    %v1502 = vld [vmem:[#allocation2 + $0x40] sm:$0xff]
    %v1503 = vld [vmem:[#allocation2 + $0x48] sm:$0xff]
    %v1504 = vld [vmem:[#allocation2 + $0x50] sm:$0xff]
    %v1505 = vld [vmem:[#allocation2 + $0x58] sm:$0xff]
    %v1506 = vld [vmem:[#allocation2 + $0x60] sm:$0xff]
    %v1507 = vld [vmem:[#allocation2 + $0x68] sm:$0xff]
    %v1508 = vpack.c.bf16 %v1497, %v1496
    %v1509 = vpack.c.bf16 %v1499, %v1498
    %v1510 = vpack.c.bf16 %v1501, %v1500
    %v1511 = vpack.c.bf16 %v1503, %v1502
    %v1512 = vpack.c.bf16 %v1505, %v1504
    %v1513 = vpack.c.bf16 %v1507, %v1506
    %s1514 = scalar_lea.vmem %s3, 36
    %v1515 = vld [vmem:[%s1514] sm:$0x7]
    %v1517 = vsel %vm39, %v1508, 0
    %v1520 = vsel %vm39, %v1509, 0
    %v1523 = vsel %vm39, %v1510, 0
    %v1526 = vsel %vm39, %v1511, 0
    %v1529 = vsel %vm39, %v1512, 0
    %v1532 = vsel %vm39, %v1513, 0
    %v1535 = vsel %vm371, %v1515, 0
    %1537 = vmatprep.subr.bf16.mxu0 0
    %1538 = vmatpush1.bf16.msra.mxu0 %v1535
    %1539 = vmatprep.subr.bf16.mxu0 0
    %1540 = vmatpush1.bf16.msra.mxu0 0
    %1541 = vmatprep.subr.bf16.mxu0 0
    %1542 = vmatpush1.bf16.msra.mxu0 0
    %1543 = vmatprep.subr.bf16.mxu0 0
    %1544 = vmatpush1.bf16.msra.mxu0 0
    %1545 = vmatprep.subr.bf16.mxu0 0
    %1546 = vmatpush1.bf16.msra.mxu0 0
    %1547 = vmatprep.subr.bf16.mxu0 0
    %1548 = vmatpush1.bf16.msra.mxu0 0
    %1549 = vmatprep.subr.bf16.mxu0 0
    %1550 = vmatpush1.bf16.msra.mxu0 0
    %1551 = vmatprep.subr.bf16.mxu0 0
    %1552 = vmatpush1.bf16.msra.mxu0 0
    %1553 = vmatprep.subr.bf16.mxu0 0
    %1554 = vmatpush1.bf16.msra.mxu0 0
    %1555 = vmatprep.subr.bf16.mxu0 0
    %1556 = vmatpush1.bf16.msra.mxu0 0
    %1557 = vmatprep.subr.bf16.mxu0 0
    %1558 = vmatpush1.bf16.msra.mxu0 0
    %1559 = vmatprep.subr.bf16.mxu0 0
    %1560 = vmatpush1.bf16.msra.mxu0 0
    %1561 = vmatprep.subr.bf16.mxu0 0
    %1562 = vmatpush1.bf16.msra.mxu0 0
    %1563 = vmatprep.subr.bf16.mxu0 0
    %1564 = vmatpush1.bf16.msra.mxu0 0
    %1565 = vmatprep.subr.bf16.mxu0 0
    %1566 = vmatpush1.bf16.msra.mxu0 0
    %1567 = vmatprep.subr.bf16.mxu0 0
    %1568 = vmatpush1.bf16.msra.mxu0 0
    %1569 = vmatprep.mubr.bf16.mxu0 0
    %1570 = vmatmul.mubr.bf16.gmra.mrb[0].mxu0 %v1517
    %v1571 = vpop.f32.mrb[0].mxu0
    %v1572 = vadd.f32 0.0, %v1571
    %v1573 = vpop.f32.mrb[0].mxu0
    %v1574 = vpop.f32.mrb[0].mxu0
    %v1575 = vadd.f32 0.0, %v1574
    %v1576 = vpop.f32.mrb[0].mxu0
    %1577 = vmatprep.mubr.bf16.mxu0 0
    %1578 = vmatmul.mubr.bf16.gmra.mrb[0].mxu0 %v1520
    %v1579 = vpop.f32.mrb[0].mxu0
    %v1580 = vadd.f32 0.0, %v1579
    %v1581 = vpop.f32.mrb[0].mxu0
    %v1582 = vpop.f32.mrb[0].mxu0
    %v1583 = vadd.f32 0.0, %v1582
    %v1584 = vpop.f32.mrb[0].mxu0
    %1585 = vmatprep.mubr.bf16.mxu0 0
    %1586 = vmatmul.mubr.bf16.gmra.mrb[0].mxu0 %v1523
    %v1587 = vpop.f32.mrb[0].mxu0
    %v1588 = vadd.f32 0.0, %v1587
    %v1589 = vpop.f32.mrb[0].mxu0
    %v1590 = vpop.f32.mrb[0].mxu0
    %v1591 = vadd.f32 0.0, %v1590
    %v1592 = vpop.f32.mrb[0].mxu0
    %1593 = vmatprep.mubr.bf16.mxu0 0
    %1594 = vmatmul.mubr.bf16.gmra.mrb[0].mxu0 %v1526
    %v1595 = vpop.f32.mrb[0].mxu0
    %v1596 = vadd.f32 0.0, %v1595
    %v1597 = vpop.f32.mrb[0].mxu0
    %v1598 = vpop.f32.mrb[0].mxu0
    %v1599 = vadd.f32 0.0, %v1598
    %v1600 = vpop.f32.mrb[0].mxu0
    %1601 = vmatprep.mubr.bf16.mxu0 0
    %1602 = vmatmul.mubr.bf16.gmra.mrb[0].mxu0 %v1529
    %v1603 = vpop.f32.mrb[0].mxu0
    %v1604 = vadd.f32 0.0, %v1603
    %v1605 = vpop.f32.mrb[0].mxu0
    %v1606 = vpop.f32.mrb[0].mxu0
    %v1607 = vadd.f32 0.0, %v1606
    %v1608 = vpop.f32.mrb[0].mxu0
    %1609 = vmatprep.mubr.bf16.mxu0 0
    %1610 = vmatmul.mubr.bf16.gmra.mrb[0].mxu0 %v1532
    %v1611 = vpop.f32.mrb[0].mxu0
    %v1612 = vadd.f32 0.0, %v1611
    %v1613 = vpop.f32.mrb[0].mxu0
    %v1614 = vpop.f32.mrb[0].mxu0
    %v1615 = vadd.f32 0.0, %v1614
    %v1616 = vpop.f32.mrb[0].mxu0
    %1617 = vdwg.mxu0
    %v1618 = vadd.f32 %v1484, %v1572
    %v1619 = vadd.f32 %v1485, %v1575
    %v1620 = vadd.f32 %v1486, %v1580
    %v1621 = vadd.f32 %v1487, %v1583
    %v1622 = vadd.f32 %v1488, %v1588
    %v1623 = vadd.f32 %v1489, %v1591
    %v1624 = vadd.f32 %v1490, %v1596
    %v1625 = vadd.f32 %v1491, %v1599
    %v1626 = vadd.f32 %v1492, %v1604
    %v1627 = vadd.f32 %v1493, %v1607
    %v1628 = vadd.f32 %v1494, %v1612
    %v1629 = vadd.f32 %v1495, %v1615
    %v1630 = vld [vmem:[#allocation2 + $0x18] sm:$0xff]
    %v1631 = vld [vmem:[#allocation2 + $0x20] sm:$0xff]
    %v1632 = vld [vmem:[#allocation2 + $0x28] sm:$0xff]
    %v1633 = vld [vmem:[#allocation2 + $0x30] sm:$0xff]
    %v1634 = vld [vmem:[#allocation2 + $0x38] sm:$0xff]
    %v1635 = vld [vmem:[#allocation2 + $0x40] sm:$0xff]
    %v1636 = vld [vmem:[#allocation2 + $0x48] sm:$0xff]
    %v1637 = vld [vmem:[#allocation2 + $0x50] sm:$0xff]
    %v1638 = vld [vmem:[#allocation2 + $0x58] sm:$0xff]
    %v1639 = vld [vmem:[#allocation2 + $0x60] sm:$0xff]
    %v1640 = vld [vmem:[#allocation2 + $0x68] sm:$0xff]
    %v1641 = vld [vmem:[#allocation2 + $0x70] sm:$0xff]
    %v1642 = vpack.c.bf16 %v1631, %v1630
    %v1643 = vpack.c.bf16 %v1633, %v1632
    %v1644 = vpack.c.bf16 %v1635, %v1634
    %v1645 = vpack.c.bf16 %v1637, %v1636
    %v1646 = vpack.c.bf16 %v1639, %v1638
    %v1647 = vpack.c.bf16 %v1641, %v1640
    %s1648 = scalar_lea.vmem %s3, 40
    %v1649 = vld [vmem:[%s1648] sm:$0x7]
    %v1651 = vsel %vm39, %v1642, 0
    %v1654 = vsel %vm39, %v1643, 0
    %v1657 = vsel %vm39, %v1644, 0
    %v1660 = vsel %vm39, %v1645, 0
    %v1663 = vsel %vm39, %v1646, 0
    %v1666 = vsel %vm39, %v1647, 0
    %v1669 = vsel %vm371, %v1649, 0
    %1671 = vmatprep.subr.bf16.mxu0 0
    %1672 = vmatpush1.bf16.msra.mxu0 %v1669
    %1673 = vmatprep.subr.bf16.mxu0 0
    %1674 = vmatpush1.bf16.msra.mxu0 0
    %1675 = vmatprep.subr.bf16.mxu0 0
    %1676 = vmatpush1.bf16.msra.mxu0 0
    %1677 = vmatprep.subr.bf16.mxu0 0
    %1678 = vmatpush1.bf16.msra.mxu0 0
    %1679 = vmatprep.subr.bf16.mxu0 0
    %1680 = vmatpush1.bf16.msra.mxu0 0
    %1681 = vmatprep.subr.bf16.mxu0 0
    %1682 = vmatpush1.bf16.msra.mxu0 0
    %1683 = vmatprep.subr.bf16.mxu0 0
    %1684 = vmatpush1.bf16.msra.mxu0 0
    %1685 = vmatprep.subr.bf16.mxu0 0
    %1686 = vmatpush1.bf16.msra.mxu0 0
    %1687 = vmatprep.subr.bf16.mxu0 0
    %1688 = vmatpush1.bf16.msra.mxu0 0
    %1689 = vmatprep.subr.bf16.mxu0 0
    %1690 = vmatpush1.bf16.msra.mxu0 0
    %1691 = vmatprep.subr.bf16.mxu0 0
    %1692 = vmatpush1.bf16.msra.mxu0 0
    %1693 = vmatprep.subr.bf16.mxu0 0
    %1694 = vmatpush1.bf16.msra.mxu0 0
    %1695 = vmatprep.subr.bf16.mxu0 0
    %1696 = vmatpush1.bf16.msra.mxu0 0
    %1697 = vmatprep.subr.bf16.mxu0 0
    %1698 = vmatpush1.bf16.msra.mxu0 0
    %1699 = vmatprep.subr.bf16.mxu0 0
    %1700 = vmatpush1.bf16.msra.mxu0 0
    %1701 = vmatprep.subr.bf16.mxu0 0
    %1702 = vmatpush1.bf16.msra.mxu0 0
    %1703 = vmatprep.mubr.bf16.mxu0 0
    %1704 = vmatmul.mubr.bf16.gmra.mrb[0].mxu0 %v1651
    %v1705 = vpop.f32.mrb[0].mxu0
    %v1706 = vadd.f32 0.0, %v1705
    %v1707 = vpop.f32.mrb[0].mxu0
    %v1708 = vpop.f32.mrb[0].mxu0
    %v1709 = vadd.f32 0.0, %v1708
    %v1710 = vpop.f32.mrb[0].mxu0
    %1711 = vmatprep.mubr.bf16.mxu0 0
    %1712 = vmatmul.mubr.bf16.gmra.mrb[0].mxu0 %v1654
    %v1713 = vpop.f32.mrb[0].mxu0
    %v1714 = vadd.f32 0.0, %v1713
    %v1715 = vpop.f32.mrb[0].mxu0
    %v1716 = vpop.f32.mrb[0].mxu0
    %v1717 = vadd.f32 0.0, %v1716
    %v1718 = vpop.f32.mrb[0].mxu0
    %1719 = vmatprep.mubr.bf16.mxu0 0
    %1720 = vmatmul.mubr.bf16.gmra.mrb[0].mxu0 %v1657
    %v1721 = vpop.f32.mrb[0].mxu0
    %v1722 = vadd.f32 0.0, %v1721
    %v1723 = vpop.f32.mrb[0].mxu0
    %v1724 = vpop.f32.mrb[0].mxu0
    %v1725 = vadd.f32 0.0, %v1724
    %v1726 = vpop.f32.mrb[0].mxu0
    %1727 = vmatprep.mubr.bf16.mxu0 0
    %1728 = vmatmul.mubr.bf16.gmra.mrb[0].mxu0 %v1660
    %v1729 = vpop.f32.mrb[0].mxu0
    %v1730 = vadd.f32 0.0, %v1729
    %v1731 = vpop.f32.mrb[0].mxu0
    %v1732 = vpop.f32.mrb[0].mxu0
    %v1733 = vadd.f32 0.0, %v1732
    %v1734 = vpop.f32.mrb[0].mxu0
    %1735 = vmatprep.mubr.bf16.mxu0 0
    %1736 = vmatmul.mubr.bf16.gmra.mrb[0].mxu0 %v1663
    %v1737 = vpop.f32.mrb[0].mxu0
    %v1738 = vadd.f32 0.0, %v1737
    %v1739 = vpop.f32.mrb[0].mxu0
    %v1740 = vpop.f32.mrb[0].mxu0
    %v1741 = vadd.f32 0.0, %v1740
    %v1742 = vpop.f32.mrb[0].mxu0
    %1743 = vmatprep.mubr.bf16.mxu0 0
    %1744 = vmatmul.mubr.bf16.gmra.mrb[0].mxu0 %v1666
    %v1745 = vpop.f32.mrb[0].mxu0
    %v1746 = vadd.f32 0.0, %v1745
    %v1747 = vpop.f32.mrb[0].mxu0
    %v1748 = vpop.f32.mrb[0].mxu0
    %v1749 = vadd.f32 0.0, %v1748
    %v1750 = vpop.f32.mrb[0].mxu0
    %1751 = vdwg.mxu0
    %v1752 = vadd.f32 %v1618, %v1706
    %v1753 = vadd.f32 %v1619, %v1709
    %v1754 = vadd.f32 %v1620, %v1714
    %v1755 = vadd.f32 %v1621, %v1717
    %v1756 = vadd.f32 %v1622, %v1722
    %v1757 = vadd.f32 %v1623, %v1725
    %v1758 = vadd.f32 %v1624, %v1730
    %v1759 = vadd.f32 %v1625, %v1733
    %v1760 = vadd.f32 %v1626, %v1738
    %v1761 = vadd.f32 %v1627, %v1741
    %v1762 = vadd.f32 %v1628, %v1746
    %v1763 = vadd.f32 %v1629, %v1749
    %v1764 = vld [vmem:[#allocation2 + $0x19] sm:$0xff]
    %v1765 = vld [vmem:[#allocation2 + $0x21] sm:$0xff]
    %v1766 = vld [vmem:[#allocation2 + $0x29] sm:$0xff]
    %v1767 = vld [vmem:[#allocation2 + $0x31] sm:$0xff]
    %v1768 = vld [vmem:[#allocation2 + $0x39] sm:$0xff]
    %v1769 = vld [vmem:[#allocation2 + $0x41] sm:$0xff]
    %v1770 = vld [vmem:[#allocation2 + $0x49] sm:$0xff]
    %v1771 = vld [vmem:[#allocation2 + $0x51] sm:$0xff]
    %v1772 = vld [vmem:[#allocation2 + $0x59] sm:$0xff]
    %v1773 = vld [vmem:[#allocation2 + $0x61] sm:$0xff]
    %v1774 = vld [vmem:[#allocation2 + $0x69] sm:$0xff]
    %v1775 = vld [vmem:[#allocation2 + $0x71] sm:$0xff]
    %v1776 = vpack.c.bf16 %v1765, %v1764
    %v1777 = vpack.c.bf16 %v1767, %v1766
    %v1778 = vpack.c.bf16 %v1769, %v1768
    %v1779 = vpack.c.bf16 %v1771, %v1770
    %v1780 = vpack.c.bf16 %v1773, %v1772
    %v1781 = vpack.c.bf16 %v1775, %v1774
    %s1782 = scalar_lea.vmem %s3, 44
    %v1783 = vld [vmem:[%s1782] sm:$0x7]
    %v1785 = vsel %vm39, %v1776, 0
    %v1788 = vsel %vm39, %v1777, 0
    %v1791 = vsel %vm39, %v1778, 0
    %v1794 = vsel %vm39, %v1779, 0
    %v1797 = vsel %vm39, %v1780, 0
    %v1800 = vsel %vm39, %v1781, 0
    %v1803 = vsel %vm371, %v1783, 0
    %1805 = vmatprep.subr.bf16.mxu0 0
    %1806 = vmatpush1.bf16.msra.mxu0 %v1803
    %1807 = vmatprep.subr.bf16.mxu0 0
    %1808 = vmatpush1.bf16.msra.mxu0 0
    %1809 = vmatprep.subr.bf16.mxu0 0
    %1810 = vmatpush1.bf16.msra.mxu0 0
    %1811 = vmatprep.subr.bf16.mxu0 0
    %1812 = vmatpush1.bf16.msra.mxu0 0
    %1813 = vmatprep.subr.bf16.mxu0 0
    %1814 = vmatpush1.bf16.msra.mxu0 0
    %1815 = vmatprep.subr.bf16.mxu0 0
    %1816 = vmatpush1.bf16.msra.mxu0 0
    %1817 = vmatprep.subr.bf16.mxu0 0
    %1818 = vmatpush1.bf16.msra.mxu0 0
    %1819 = vmatprep.subr.bf16.mxu0 0
    %1820 = vmatpush1.bf16.msra.mxu0 0
    %1821 = vmatprep.subr.bf16.mxu0 0
    %1822 = vmatpush1.bf16.msra.mxu0 0
    %1823 = vmatprep.subr.bf16.mxu0 0
    %1824 = vmatpush1.bf16.msra.mxu0 0
    %1825 = vmatprep.subr.bf16.mxu0 0
    %1826 = vmatpush1.bf16.msra.mxu0 0
    %1827 = vmatprep.subr.bf16.mxu0 0
    %1828 = vmatpush1.bf16.msra.mxu0 0
    %1829 = vmatprep.subr.bf16.mxu0 0
    %1830 = vmatpush1.bf16.msra.mxu0 0
    %1831 = vmatprep.subr.bf16.mxu0 0
    %1832 = vmatpush1.bf16.msra.mxu0 0
    %1833 = vmatprep.subr.bf16.mxu0 0
    %1834 = vmatpush1.bf16.msra.mxu0 0
    %1835 = vmatprep.subr.bf16.mxu0 0
    %1836 = vmatpush1.bf16.msra.mxu0 0
    %1837 = vmatprep.mubr.bf16.mxu0 0
    %1838 = vmatmul.mubr.bf16.gmra.mrb[0].mxu0 %v1785
    %v1839 = vpop.f32.mrb[0].mxu0
    %v1840 = vadd.f32 0.0, %v1839
    %v1841 = vpop.f32.mrb[0].mxu0
    %v1842 = vpop.f32.mrb[0].mxu0
    %v1843 = vadd.f32 0.0, %v1842
    %v1844 = vpop.f32.mrb[0].mxu0
    %1845 = vmatprep.mubr.bf16.mxu0 0
    %1846 = vmatmul.mubr.bf16.gmra.mrb[0].mxu0 %v1788
    %v1847 = vpop.f32.mrb[0].mxu0
    %v1848 = vadd.f32 0.0, %v1847
    %v1849 = vpop.f32.mrb[0].mxu0
    %v1850 = vpop.f32.mrb[0].mxu0
    %v1851 = vadd.f32 0.0, %v1850
    %v1852 = vpop.f32.mrb[0].mxu0
    %1853 = vmatprep.mubr.bf16.mxu0 0
    %1854 = vmatmul.mubr.bf16.gmra.mrb[0].mxu0 %v1791
    %v1855 = vpop.f32.mrb[0].mxu0
    %v1856 = vadd.f32 0.0, %v1855
    %v1857 = vpop.f32.mrb[0].mxu0
    %v1858 = vpop.f32.mrb[0].mxu0
    %v1859 = vadd.f32 0.0, %v1858
    %v1860 = vpop.f32.mrb[0].mxu0
    %1861 = vmatprep.mubr.bf16.mxu0 0
    %1862 = vmatmul.mubr.bf16.gmra.mrb[0].mxu0 %v1794
    %v1863 = vpop.f32.mrb[0].mxu0
    %v1864 = vadd.f32 0.0, %v1863
    %v1865 = vpop.f32.mrb[0].mxu0
    %v1866 = vpop.f32.mrb[0].mxu0
    %v1867 = vadd.f32 0.0, %v1866
    %v1868 = vpop.f32.mrb[0].mxu0
    %1869 = vmatprep.mubr.bf16.mxu0 0
    %1870 = vmatmul.mubr.bf16.gmra.mrb[0].mxu0 %v1797
    %v1871 = vpop.f32.mrb[0].mxu0
    %v1872 = vadd.f32 0.0, %v1871
    %v1873 = vpop.f32.mrb[0].mxu0
    %v1874 = vpop.f32.mrb[0].mxu0
    %v1875 = vadd.f32 0.0, %v1874
    %v1876 = vpop.f32.mrb[0].mxu0
    %1877 = vmatprep.mubr.bf16.mxu0 0
    %1878 = vmatmul.mubr.bf16.gmra.mrb[0].mxu0 %v1800
    %v1879 = vpop.f32.mrb[0].mxu0
    %v1880 = vadd.f32 0.0, %v1879
    %v1881 = vpop.f32.mrb[0].mxu0
    %v1882 = vpop.f32.mrb[0].mxu0
    %v1883 = vadd.f32 0.0, %v1882
    %v1884 = vpop.f32.mrb[0].mxu0
    %1885 = vdwg.mxu0
    %v1886 = vadd.f32 %v1752, %v1840
    %v1887 = vadd.f32 %v1753, %v1843
    %v1888 = vadd.f32 %v1754, %v1848
    %v1889 = vadd.f32 %v1755, %v1851
    %v1890 = vadd.f32 %v1756, %v1856
    %v1891 = vadd.f32 %v1757, %v1859
    %v1892 = vadd.f32 %v1758, %v1864
    %v1893 = vadd.f32 %v1759, %v1867
    %v1894 = vadd.f32 %v1760, %v1872
    %v1895 = vadd.f32 %v1761, %v1875
    %v1896 = vadd.f32 %v1762, %v1880
    %v1897 = vadd.f32 %v1763, %v1883
    %v1898 = vld [vmem:[#allocation2 + $0x1a] sm:$0xff]
    %v1899 = vld [vmem:[#allocation2 + $0x22] sm:$0xff]
    %v1900 = vld [vmem:[#allocation2 + $0x2a] sm:$0xff]
    %v1901 = vld [vmem:[#allocation2 + $0x32] sm:$0xff]
    %v1902 = vld [vmem:[#allocation2 + $0x3a] sm:$0xff]
    %v1903 = vld [vmem:[#allocation2 + $0x42] sm:$0xff]
    %v1904 = vld [vmem:[#allocation2 + $0x4a] sm:$0xff]
    %v1905 = vld [vmem:[#allocation2 + $0x52] sm:$0xff]
    %v1906 = vld [vmem:[#allocation2 + $0x5a] sm:$0xff]
    %v1907 = vld [vmem:[#allocation2 + $0x62] sm:$0xff]
    %v1908 = vld [vmem:[#allocation2 + $0x6a] sm:$0xff]
    %v1909 = vld [vmem:[#allocation2 + $0x72] sm:$0xff]
    %v1910 = vpack.c.bf16 %v1899, %v1898
    %v1911 = vpack.c.bf16 %v1901, %v1900
    %v1912 = vpack.c.bf16 %v1903, %v1902
    %v1913 = vpack.c.bf16 %v1905, %v1904
    %v1914 = vpack.c.bf16 %v1907, %v1906
    %v1915 = vpack.c.bf16 %v1909, %v1908
    %s1916 = scalar_lea.vmem %s3, 48
    %v1917 = vld [vmem:[%s1916] sm:$0x7]
    %v1919 = vsel %vm39, %v1910, 0
    %v1922 = vsel %vm39, %v1911, 0
    %v1925 = vsel %vm39, %v1912, 0
    %v1928 = vsel %vm39, %v1913, 0
    %v1931 = vsel %vm39, %v1914, 0
    %v1934 = vsel %vm39, %v1915, 0
    %v1937 = vsel %vm371, %v1917, 0
    %1939 = vmatprep.subr.bf16.mxu0 0
    %1940 = vmatpush1.bf16.msra.mxu0 %v1937
    %1941 = vmatprep.subr.bf16.mxu0 0
    %1942 = vmatpush1.bf16.msra.mxu0 0
    %1943 = vmatprep.subr.bf16.mxu0 0
    %1944 = vmatpush1.bf16.msra.mxu0 0
    %1945 = vmatprep.subr.bf16.mxu0 0
    %1946 = vmatpush1.bf16.msra.mxu0 0
    %1947 = vmatprep.subr.bf16.mxu0 0
    %1948 = vmatpush1.bf16.msra.mxu0 0
    %1949 = vmatprep.subr.bf16.mxu0 0
    %1950 = vmatpush1.bf16.msra.mxu0 0
    %1951 = vmatprep.subr.bf16.mxu0 0
    %1952 = vmatpush1.bf16.msra.mxu0 0
    %1953 = vmatprep.subr.bf16.mxu0 0
    %1954 = vmatpush1.bf16.msra.mxu0 0
    %1955 = vmatprep.subr.bf16.mxu0 0
    %1956 = vmatpush1.bf16.msra.mxu0 0
    %1957 = vmatprep.subr.bf16.mxu0 0
    %1958 = vmatpush1.bf16.msra.mxu0 0
    %1959 = vmatprep.subr.bf16.mxu0 0
    %1960 = vmatpush1.bf16.msra.mxu0 0
    %1961 = vmatprep.subr.bf16.mxu0 0
    %1962 = vmatpush1.bf16.msra.mxu0 0
    %1963 = vmatprep.subr.bf16.mxu0 0
    %1964 = vmatpush1.bf16.msra.mxu0 0
    %1965 = vmatprep.subr.bf16.mxu0 0
    %1966 = vmatpush1.bf16.msra.mxu0 0
    %1967 = vmatprep.subr.bf16.mxu0 0
    %1968 = vmatpush1.bf16.msra.mxu0 0
    %1969 = vmatprep.subr.bf16.mxu0 0
    %1970 = vmatpush1.bf16.msra.mxu0 0
    %1971 = vmatprep.mubr.bf16.mxu0 0
    %1972 = vmatmul.mubr.bf16.gmra.mrb[0].mxu0 %v1919
    %v1973 = vpop.f32.mrb[0].mxu0
    %v1974 = vadd.f32 0.0, %v1973
    %v1975 = vpop.f32.mrb[0].mxu0
    %v1976 = vpop.f32.mrb[0].mxu0
    %v1977 = vadd.f32 0.0, %v1976
    %v1978 = vpop.f32.mrb[0].mxu0
    %1979 = vmatprep.mubr.bf16.mxu0 0
    %1980 = vmatmul.mubr.bf16.gmra.mrb[0].mxu0 %v1922
    %v1981 = vpop.f32.mrb[0].mxu0
    %v1982 = vadd.f32 0.0, %v1981
    %v1983 = vpop.f32.mrb[0].mxu0
    %v1984 = vpop.f32.mrb[0].mxu0
    %v1985 = vadd.f32 0.0, %v1984
    %v1986 = vpop.f32.mrb[0].mxu0
    %1987 = vmatprep.mubr.bf16.mxu0 0
    %1988 = vmatmul.mubr.bf16.gmra.mrb[0].mxu0 %v1925
    %v1989 = vpop.f32.mrb[0].mxu0
    %v1990 = vadd.f32 0.0, %v1989
    %v1991 = vpop.f32.mrb[0].mxu0
    %v1992 = vpop.f32.mrb[0].mxu0
    %v1993 = vadd.f32 0.0, %v1992
    %v1994 = vpop.f32.mrb[0].mxu0
    %1995 = vmatprep.mubr.bf16.mxu0 0
    %1996 = vmatmul.mubr.bf16.gmra.mrb[0].mxu0 %v1928
    %v1997 = vpop.f32.mrb[0].mxu0
    %v1998 = vadd.f32 0.0, %v1997
    %v1999 = vpop.f32.mrb[0].mxu0
    %v2000 = vpop.f32.mrb[0].mxu0
    %v2001 = vadd.f32 0.0, %v2000
    %v2002 = vpop.f32.mrb[0].mxu0
    %2003 = vmatprep.mubr.bf16.mxu0 0
    %2004 = vmatmul.mubr.bf16.gmra.mrb[0].mxu0 %v1931
    %v2005 = vpop.f32.mrb[0].mxu0
    %v2006 = vadd.f32 0.0, %v2005
    %v2007 = vpop.f32.mrb[0].mxu0
    %v2008 = vpop.f32.mrb[0].mxu0
    %v2009 = vadd.f32 0.0, %v2008
    %v2010 = vpop.f32.mrb[0].mxu0
    %2011 = vmatprep.mubr.bf16.mxu0 0
    %2012 = vmatmul.mubr.bf16.gmra.mrb[0].mxu0 %v1934
    %v2013 = vpop.f32.mrb[0].mxu0
    %v2014 = vadd.f32 0.0, %v2013
    %v2015 = vpop.f32.mrb[0].mxu0
    %v2016 = vpop.f32.mrb[0].mxu0
    %v2017 = vadd.f32 0.0, %v2016
    %v2018 = vpop.f32.mrb[0].mxu0
    %2019 = vdwg.mxu0
    %v2020 = vadd.f32 %v1886, %v1974
    %v2021 = vadd.f32 %v1887, %v1977
    %v2022 = vadd.f32 %v1888, %v1982
    %v2023 = vadd.f32 %v1889, %v1985
    %v2024 = vadd.f32 %v1890, %v1990
    %v2025 = vadd.f32 %v1891, %v1993
    %v2026 = vadd.f32 %v1892, %v1998
    %v2027 = vadd.f32 %v1893, %v2001
    %v2028 = vadd.f32 %v1894, %v2006
    %v2029 = vadd.f32 %v1895, %v2009
    %v2030 = vadd.f32 %v1896, %v2014
    %v2031 = vadd.f32 %v1897, %v2017
    %v2032 = vld [vmem:[#allocation2 + $0x1b] sm:$0xff]
    %v2033 = vld [vmem:[#allocation2 + $0x23] sm:$0xff]
    %v2034 = vld [vmem:[#allocation2 + $0x2b] sm:$0xff]
    %v2035 = vld [vmem:[#allocation2 + $0x33] sm:$0xff]
    %v2036 = vld [vmem:[#allocation2 + $0x3b] sm:$0xff]
    %v2037 = vld [vmem:[#allocation2 + $0x43] sm:$0xff]
    %v2038 = vld [vmem:[#allocation2 + $0x4b] sm:$0xff]
    %v2039 = vld [vmem:[#allocation2 + $0x53] sm:$0xff]
    %v2040 = vld [vmem:[#allocation2 + $0x5b] sm:$0xff]
    %v2041 = vld [vmem:[#allocation2 + $0x63] sm:$0xff]
    %v2042 = vld [vmem:[#allocation2 + $0x6b] sm:$0xff]
    %v2043 = vld [vmem:[#allocation2 + $0x73] sm:$0xff]
    %v2044 = vpack.c.bf16 %v2033, %v2032
    %v2045 = vpack.c.bf16 %v2035, %v2034
    %v2046 = vpack.c.bf16 %v2037, %v2036
    %v2047 = vpack.c.bf16 %v2039, %v2038
    %v2048 = vpack.c.bf16 %v2041, %v2040
    %v2049 = vpack.c.bf16 %v2043, %v2042
    %s2050 = scalar_lea.vmem %s3, 52
    %v2051 = vld [vmem:[%s2050] sm:$0x7]
    %v2053 = vsel %vm39, %v2044, 0
    %v2056 = vsel %vm39, %v2045, 0
    %v2059 = vsel %vm39, %v2046, 0
    %v2062 = vsel %vm39, %v2047, 0
    %v2065 = vsel %vm39, %v2048, 0
    %v2068 = vsel %vm39, %v2049, 0
    %v2071 = vsel %vm371, %v2051, 0
    %2073 = vmatprep.subr.bf16.mxu0 0
    %2074 = vmatpush1.bf16.msra.mxu0 %v2071
    %2075 = vmatprep.subr.bf16.mxu0 0
    %2076 = vmatpush1.bf16.msra.mxu0 0
    %2077 = vmatprep.subr.bf16.mxu0 0
    %2078 = vmatpush1.bf16.msra.mxu0 0
    %2079 = vmatprep.subr.bf16.mxu0 0
    %2080 = vmatpush1.bf16.msra.mxu0 0
    %2081 = vmatprep.subr.bf16.mxu0 0
    %2082 = vmatpush1.bf16.msra.mxu0 0
    %2083 = vmatprep.subr.bf16.mxu0 0
    %2084 = vmatpush1.bf16.msra.mxu0 0
    %2085 = vmatprep.subr.bf16.mxu0 0
    %2086 = vmatpush1.bf16.msra.mxu0 0
    %2087 = vmatprep.subr.bf16.mxu0 0
    %2088 = vmatpush1.bf16.msra.mxu0 0
    %2089 = vmatprep.subr.bf16.mxu0 0
    %2090 = vmatpush1.bf16.msra.mxu0 0
    %2091 = vmatprep.subr.bf16.mxu0 0
    %2092 = vmatpush1.bf16.msra.mxu0 0
    %2093 = vmatprep.subr.bf16.mxu0 0
    %2094 = vmatpush1.bf16.msra.mxu0 0
    %2095 = vmatprep.subr.bf16.mxu0 0
    %2096 = vmatpush1.bf16.msra.mxu0 0
    %2097 = vmatprep.subr.bf16.mxu0 0
    %2098 = vmatpush1.bf16.msra.mxu0 0
    %2099 = vmatprep.subr.bf16.mxu0 0
    %2100 = vmatpush1.bf16.msra.mxu0 0
    %2101 = vmatprep.subr.bf16.mxu0 0
    %2102 = vmatpush1.bf16.msra.mxu0 0
    %2103 = vmatprep.subr.bf16.mxu0 0
    %2104 = vmatpush1.bf16.msra.mxu0 0
    %2105 = vmatprep.mubr.bf16.mxu0 0
    %2106 = vmatmul.mubr.bf16.gmra.mrb[0].mxu0 %v2053
    %v2107 = vpop.f32.mrb[0].mxu0
    %v2108 = vadd.f32 0.0, %v2107
    %v2109 = vpop.f32.mrb[0].mxu0
    %v2110 = vpop.f32.mrb[0].mxu0
    %v2111 = vadd.f32 0.0, %v2110
    %v2112 = vpop.f32.mrb[0].mxu0
    %2113 = vmatprep.mubr.bf16.mxu0 0
    %2114 = vmatmul.mubr.bf16.gmra.mrb[0].mxu0 %v2056
    %v2115 = vpop.f32.mrb[0].mxu0
    %v2116 = vadd.f32 0.0, %v2115
    %v2117 = vpop.f32.mrb[0].mxu0
    %v2118 = vpop.f32.mrb[0].mxu0
    %v2119 = vadd.f32 0.0, %v2118
    %v2120 = vpop.f32.mrb[0].mxu0
    %2121 = vmatprep.mubr.bf16.mxu0 0
    %2122 = vmatmul.mubr.bf16.gmra.mrb[0].mxu0 %v2059
    %v2123 = vpop.f32.mrb[0].mxu0
    %v2124 = vadd.f32 0.0, %v2123
    %v2125 = vpop.f32.mrb[0].mxu0
    %v2126 = vpop.f32.mrb[0].mxu0
    %v2127 = vadd.f32 0.0, %v2126
    %v2128 = vpop.f32.mrb[0].mxu0
    %2129 = vmatprep.mubr.bf16.mxu0 0
    %2130 = vmatmul.mubr.bf16.gmra.mrb[0].mxu0 %v2062
    %v2131 = vpop.f32.mrb[0].mxu0
    %v2132 = vadd.f32 0.0, %v2131
    %v2133 = vpop.f32.mrb[0].mxu0
    %v2134 = vpop.f32.mrb[0].mxu0
    %v2135 = vadd.f32 0.0, %v2134
    %v2136 = vpop.f32.mrb[0].mxu0
    %2137 = vmatprep.mubr.bf16.mxu0 0
    %2138 = vmatmul.mubr.bf16.gmra.mrb[0].mxu0 %v2065
    %v2139 = vpop.f32.mrb[0].mxu0
    %v2140 = vadd.f32 0.0, %v2139
    %v2141 = vpop.f32.mrb[0].mxu0
    %v2142 = vpop.f32.mrb[0].mxu0
    %v2143 = vadd.f32 0.0, %v2142
    %v2144 = vpop.f32.mrb[0].mxu0
    %2145 = vmatprep.mubr.bf16.mxu0 0
    %2146 = vmatmul.mubr.bf16.gmra.mrb[0].mxu0 %v2068
    %v2147 = vpop.f32.mrb[0].mxu0
    %v2148 = vadd.f32 0.0, %v2147
    %v2149 = vpop.f32.mrb[0].mxu0
    %v2150 = vpop.f32.mrb[0].mxu0
    %v2151 = vadd.f32 0.0, %v2150
    %v2152 = vpop.f32.mrb[0].mxu0
    %2153 = vdwg.mxu0
    %v2154 = vadd.f32 %v2020, %v2108
    %v2155 = vadd.f32 %v2021, %v2111
    %v2156 = vadd.f32 %v2022, %v2116
    %v2157 = vadd.f32 %v2023, %v2119
    %v2158 = vadd.f32 %v2024, %v2124
    %v2159 = vadd.f32 %v2025, %v2127
    %v2160 = vadd.f32 %v2026, %v2132
    %v2161 = vadd.f32 %v2027, %v2135
    %v2162 = vadd.f32 %v2028, %v2140
    %v2163 = vadd.f32 %v2029, %v2143
    %v2164 = vadd.f32 %v2030, %v2148
    %v2165 = vadd.f32 %v2031, %v2151
    %v2166 = vld [vmem:[#allocation2 + $0x1c] sm:$0xff]
    %v2167 = vld [vmem:[#allocation2 + $0x24] sm:$0xff]
    %v2168 = vld [vmem:[#allocation2 + $0x2c] sm:$0xff]
    %v2169 = vld [vmem:[#allocation2 + $0x34] sm:$0xff]
    %v2170 = vld [vmem:[#allocation2 + $0x3c] sm:$0xff]
    %v2171 = vld [vmem:[#allocation2 + $0x44] sm:$0xff]
    %v2172 = vld [vmem:[#allocation2 + $0x4c] sm:$0xff]
    %v2173 = vld [vmem:[#allocation2 + $0x54] sm:$0xff]
    %v2174 = vld [vmem:[#allocation2 + $0x5c] sm:$0xff]
    %v2175 = vld [vmem:[#allocation2 + $0x64] sm:$0xff]
    %v2176 = vld [vmem:[#allocation2 + $0x6c] sm:$0xff]
    %v2177 = vld [vmem:[#allocation2 + $0x74] sm:$0xff]
    %v2178 = vpack.c.bf16 %v2167, %v2166
    %v2179 = vpack.c.bf16 %v2169, %v2168
    %v2180 = vpack.c.bf16 %v2171, %v2170
    %v2181 = vpack.c.bf16 %v2173, %v2172
    %v2182 = vpack.c.bf16 %v2175, %v2174
    %v2183 = vpack.c.bf16 %v2177, %v2176
    %s2184 = scalar_lea.vmem %s3, 56
    %v2185 = vld [vmem:[%s2184] sm:$0x7]
    %v2187 = vsel %vm39, %v2178, 0
    %v2190 = vsel %vm39, %v2179, 0
    %v2193 = vsel %vm39, %v2180, 0
    %v2196 = vsel %vm39, %v2181, 0
    %v2199 = vsel %vm39, %v2182, 0
    %v2202 = vsel %vm39, %v2183, 0
    %v2205 = vsel %vm371, %v2185, 0
    %2207 = vmatprep.subr.bf16.mxu0 0
    %2208 = vmatpush1.bf16.msra.mxu0 %v2205
    %2209 = vmatprep.subr.bf16.mxu0 0
    %2210 = vmatpush1.bf16.msra.mxu0 0
    %2211 = vmatprep.subr.bf16.mxu0 0
    %2212 = vmatpush1.bf16.msra.mxu0 0
    %2213 = vmatprep.subr.bf16.mxu0 0
    %2214 = vmatpush1.bf16.msra.mxu0 0
    %2215 = vmatprep.subr.bf16.mxu0 0
    %2216 = vmatpush1.bf16.msra.mxu0 0
    %2217 = vmatprep.subr.bf16.mxu0 0
    %2218 = vmatpush1.bf16.msra.mxu0 0
    %2219 = vmatprep.subr.bf16.mxu0 0
    %2220 = vmatpush1.bf16.msra.mxu0 0
    %2221 = vmatprep.subr.bf16.mxu0 0
    %2222 = vmatpush1.bf16.msra.mxu0 0
    %2223 = vmatprep.subr.bf16.mxu0 0
    %2224 = vmatpush1.bf16.msra.mxu0 0
    %2225 = vmatprep.subr.bf16.mxu0 0
    %2226 = vmatpush1.bf16.msra.mxu0 0
    %2227 = vmatprep.subr.bf16.mxu0 0
    %2228 = vmatpush1.bf16.msra.mxu0 0
    %2229 = vmatprep.subr.bf16.mxu0 0
    %2230 = vmatpush1.bf16.msra.mxu0 0
    %2231 = vmatprep.subr.bf16.mxu0 0
    %2232 = vmatpush1.bf16.msra.mxu0 0
    %2233 = vmatprep.subr.bf16.mxu0 0
    %2234 = vmatpush1.bf16.msra.mxu0 0
    %2235 = vmatprep.subr.bf16.mxu0 0
    %2236 = vmatpush1.bf16.msra.mxu0 0
    %2237 = vmatprep.subr.bf16.mxu0 0
    %2238 = vmatpush1.bf16.msra.mxu0 0
    %2239 = vmatprep.mubr.bf16.mxu0 0
    %2240 = vmatmul.mubr.bf16.gmra.mrb[0].mxu0 %v2187
    %v2241 = vpop.f32.mrb[0].mxu0
    %v2242 = vadd.f32 0.0, %v2241
    %v2243 = vpop.f32.mrb[0].mxu0
    %v2244 = vpop.f32.mrb[0].mxu0
    %v2245 = vadd.f32 0.0, %v2244
    %v2246 = vpop.f32.mrb[0].mxu0
    %2247 = vmatprep.mubr.bf16.mxu0 0
    %2248 = vmatmul.mubr.bf16.gmra.mrb[0].mxu0 %v2190
    %v2249 = vpop.f32.mrb[0].mxu0
    %v2250 = vadd.f32 0.0, %v2249
    %v2251 = vpop.f32.mrb[0].mxu0
    %v2252 = vpop.f32.mrb[0].mxu0
    %v2253 = vadd.f32 0.0, %v2252
    %v2254 = vpop.f32.mrb[0].mxu0
    %2255 = vmatprep.mubr.bf16.mxu0 0
    %2256 = vmatmul.mubr.bf16.gmra.mrb[0].mxu0 %v2193
    %v2257 = vpop.f32.mrb[0].mxu0
    %v2258 = vadd.f32 0.0, %v2257
    %v2259 = vpop.f32.mrb[0].mxu0
    %v2260 = vpop.f32.mrb[0].mxu0
    %v2261 = vadd.f32 0.0, %v2260
    %v2262 = vpop.f32.mrb[0].mxu0
    %2263 = vmatprep.mubr.bf16.mxu0 0
    %2264 = vmatmul.mubr.bf16.gmra.mrb[0].mxu0 %v2196
    %v2265 = vpop.f32.mrb[0].mxu0
    %v2266 = vadd.f32 0.0, %v2265
    %v2267 = vpop.f32.mrb[0].mxu0
    %v2268 = vpop.f32.mrb[0].mxu0
    %v2269 = vadd.f32 0.0, %v2268
    %v2270 = vpop.f32.mrb[0].mxu0
    %2271 = vmatprep.mubr.bf16.mxu0 0
    %2272 = vmatmul.mubr.bf16.gmra.mrb[0].mxu0 %v2199
    %v2273 = vpop.f32.mrb[0].mxu0
    %v2274 = vadd.f32 0.0, %v2273
    %v2275 = vpop.f32.mrb[0].mxu0
    %v2276 = vpop.f32.mrb[0].mxu0
    %v2277 = vadd.f32 0.0, %v2276
    %v2278 = vpop.f32.mrb[0].mxu0
    %2279 = vmatprep.mubr.bf16.mxu0 0
    %2280 = vmatmul.mubr.bf16.gmra.mrb[0].mxu0 %v2202
    %v2281 = vpop.f32.mrb[0].mxu0
    %v2282 = vadd.f32 0.0, %v2281
    %v2283 = vpop.f32.mrb[0].mxu0
    %v2284 = vpop.f32.mrb[0].mxu0
    %v2285 = vadd.f32 0.0, %v2284
    %v2286 = vpop.f32.mrb[0].mxu0
    %2287 = vdwg.mxu0
    %v2288 = vadd.f32 %v2154, %v2242
    %v2289 = vadd.f32 %v2155, %v2245
    %v2290 = vadd.f32 %v2156, %v2250
    %v2291 = vadd.f32 %v2157, %v2253
    %v2292 = vadd.f32 %v2158, %v2258
    %v2293 = vadd.f32 %v2159, %v2261
    %v2294 = vadd.f32 %v2160, %v2266
    %v2295 = vadd.f32 %v2161, %v2269
    %v2296 = vadd.f32 %v2162, %v2274
    %v2297 = vadd.f32 %v2163, %v2277
    %v2298 = vadd.f32 %v2164, %v2282
    %v2299 = vadd.f32 %v2165, %v2285
    %v2300 = vld [vmem:[#allocation2 + $0x24] sm:$0xff]
    %v2301 = vld [vmem:[#allocation2 + $0x2c] sm:$0xff]
    %v2302 = vld [vmem:[#allocation2 + $0x34] sm:$0xff]
    %v2303 = vld [vmem:[#allocation2 + $0x3c] sm:$0xff]
    %v2304 = vld [vmem:[#allocation2 + $0x44] sm:$0xff]
    %v2305 = vld [vmem:[#allocation2 + $0x4c] sm:$0xff]
    %v2306 = vld [vmem:[#allocation2 + $0x54] sm:$0xff]
    %v2307 = vld [vmem:[#allocation2 + $0x5c] sm:$0xff]
    %v2308 = vld [vmem:[#allocation2 + $0x64] sm:$0xff]
    %v2309 = vld [vmem:[#allocation2 + $0x6c] sm:$0xff]
    %v2310 = vld [vmem:[#allocation2 + $0x74] sm:$0xff]
    %v2311 = vld [vmem:[#allocation2 + $0x7c] sm:$0xff]
    %v2312 = vpack.c.bf16 %v2301, %v2300
    %v2313 = vpack.c.bf16 %v2303, %v2302
    %v2314 = vpack.c.bf16 %v2305, %v2304
    %v2315 = vpack.c.bf16 %v2307, %v2306
    %v2316 = vpack.c.bf16 %v2309, %v2308
    %v2317 = vpack.c.bf16 %v2311, %v2310
    %s2318 = scalar_lea.vmem %s3, 60
    %v2319 = vld [vmem:[%s2318] sm:$0x7]
    %v2321 = vsel %vm39, %v2312, 0
    %v2324 = vsel %vm39, %v2313, 0
    %v2327 = vsel %vm39, %v2314, 0
    %v2330 = vsel %vm39, %v2315, 0
    %v2333 = vsel %vm39, %v2316, 0
    %v2336 = vsel %vm39, %v2317, 0
    %v2339 = vsel %vm371, %v2319, 0
    %2341 = vmatprep.subr.bf16.mxu0 0
    %2342 = vmatpush1.bf16.msra.mxu0 %v2339
    %2343 = vmatprep.subr.bf16.mxu0 0
    %2344 = vmatpush1.bf16.msra.mxu0 0
    %2345 = vmatprep.subr.bf16.mxu0 0
    %2346 = vmatpush1.bf16.msra.mxu0 0
    %2347 = vmatprep.subr.bf16.mxu0 0
    %2348 = vmatpush1.bf16.msra.mxu0 0
    %2349 = vmatprep.subr.bf16.mxu0 0
    %2350 = vmatpush1.bf16.msra.mxu0 0
    %2351 = vmatprep.subr.bf16.mxu0 0
    %2352 = vmatpush1.bf16.msra.mxu0 0
    %2353 = vmatprep.subr.bf16.mxu0 0
    %2354 = vmatpush1.bf16.msra.mxu0 0
    %2355 = vmatprep.subr.bf16.mxu0 0
    %2356 = vmatpush1.bf16.msra.mxu0 0
    %2357 = vmatprep.subr.bf16.mxu0 0
    %2358 = vmatpush1.bf16.msra.mxu0 0
    %2359 = vmatprep.subr.bf16.mxu0 0
    %2360 = vmatpush1.bf16.msra.mxu0 0
    %2361 = vmatprep.subr.bf16.mxu0 0
    %2362 = vmatpush1.bf16.msra.mxu0 0
    %2363 = vmatprep.subr.bf16.mxu0 0
    %2364 = vmatpush1.bf16.msra.mxu0 0
    %2365 = vmatprep.subr.bf16.mxu0 0
    %2366 = vmatpush1.bf16.msra.mxu0 0
    %2367 = vmatprep.subr.bf16.mxu0 0
    %2368 = vmatpush1.bf16.msra.mxu0 0
    %2369 = vmatprep.subr.bf16.mxu0 0
    %2370 = vmatpush1.bf16.msra.mxu0 0
    %2371 = vmatprep.subr.bf16.mxu0 0
    %2372 = vmatpush1.bf16.msra.mxu0 0
    %2373 = vmatprep.mubr.bf16.mxu0 0
    %2374 = vmatmul.mubr.bf16.gmra.mrb[0].mxu0 %v2321
    %v2375 = vpop.f32.mrb[0].mxu0
    %v2376 = vadd.f32 0.0, %v2375
    %v2377 = vpop.f32.mrb[0].mxu0
    %v2378 = vpop.f32.mrb[0].mxu0
    %v2379 = vadd.f32 0.0, %v2378
    %v2380 = vpop.f32.mrb[0].mxu0
    %2381 = vmatprep.mubr.bf16.mxu0 0
    %2382 = vmatmul.mubr.bf16.gmra.mrb[0].mxu0 %v2324
    %v2383 = vpop.f32.mrb[0].mxu0
    %v2384 = vadd.f32 0.0, %v2383
    %v2385 = vpop.f32.mrb[0].mxu0
    %v2386 = vpop.f32.mrb[0].mxu0
    %v2387 = vadd.f32 0.0, %v2386
    %v2388 = vpop.f32.mrb[0].mxu0
    %2389 = vmatprep.mubr.bf16.mxu0 0
    %2390 = vmatmul.mubr.bf16.gmra.mrb[0].mxu0 %v2327
    %v2391 = vpop.f32.mrb[0].mxu0
    %v2392 = vadd.f32 0.0, %v2391
    %v2393 = vpop.f32.mrb[0].mxu0
    %v2394 = vpop.f32.mrb[0].mxu0
    %v2395 = vadd.f32 0.0, %v2394
    %v2396 = vpop.f32.mrb[0].mxu0
    %2397 = vmatprep.mubr.bf16.mxu0 0
    %2398 = vmatmul.mubr.bf16.gmra.mrb[0].mxu0 %v2330
    %v2399 = vpop.f32.mrb[0].mxu0
    %v2400 = vadd.f32 0.0, %v2399
    %v2401 = vpop.f32.mrb[0].mxu0
    %v2402 = vpop.f32.mrb[0].mxu0
    %v2403 = vadd.f32 0.0, %v2402
    %v2404 = vpop.f32.mrb[0].mxu0
    %2405 = vmatprep.mubr.bf16.mxu0 0
    %2406 = vmatmul.mubr.bf16.gmra.mrb[0].mxu0 %v2333
    %v2407 = vpop.f32.mrb[0].mxu0
    %v2408 = vadd.f32 0.0, %v2407
    %v2409 = vpop.f32.mrb[0].mxu0
    %v2410 = vpop.f32.mrb[0].mxu0
    %v2411 = vadd.f32 0.0, %v2410
    %v2412 = vpop.f32.mrb[0].mxu0
    %2413 = vmatprep.mubr.bf16.mxu0 0
    %2414 = vmatmul.mubr.bf16.gmra.mrb[0].mxu0 %v2336
    %v2415 = vpop.f32.mrb[0].mxu0
    %v2416 = vadd.f32 0.0, %v2415
    %v2417 = vpop.f32.mrb[0].mxu0
    %v2418 = vpop.f32.mrb[0].mxu0
    %v2419 = vadd.f32 0.0, %v2418
    %v2420 = vpop.f32.mrb[0].mxu0
    %2421 = vdwg.mxu0
    %v2422 = vadd.f32 %v2288, %v2376
    %v2423 = vadd.f32 %v2289, %v2379
    %v2424 = vadd.f32 %v2290, %v2384
    %v2425 = vadd.f32 %v2291, %v2387
    %v2426 = vadd.f32 %v2292, %v2392
    %v2427 = vadd.f32 %v2293, %v2395
    %v2428 = vadd.f32 %v2294, %v2400
    %v2429 = vadd.f32 %v2295, %v2403
    %v2430 = vadd.f32 %v2296, %v2408
    %v2431 = vadd.f32 %v2297, %v2411
    %v2432 = vadd.f32 %v2298, %v2416
    %v2433 = vadd.f32 %v2299, %v2419
    %v2434 = vld [vmem:[#allocation2 + $0x25] sm:$0xff]
    %v2435 = vld [vmem:[#allocation2 + $0x2d] sm:$0xff]
    %v2436 = vld [vmem:[#allocation2 + $0x35] sm:$0xff]
    %v2437 = vld [vmem:[#allocation2 + $0x3d] sm:$0xff]
    %v2438 = vld [vmem:[#allocation2 + $0x45] sm:$0xff]
    %v2439 = vld [vmem:[#allocation2 + $0x4d] sm:$0xff]
    %v2440 = vld [vmem:[#allocation2 + $0x55] sm:$0xff]
    %v2441 = vld [vmem:[#allocation2 + $0x5d] sm:$0xff]
    %v2442 = vld [vmem:[#allocation2 + $0x65] sm:$0xff]
    %v2443 = vld [vmem:[#allocation2 + $0x6d] sm:$0xff]
    %v2444 = vld [vmem:[#allocation2 + $0x75] sm:$0xff]
    %v2445 = vld [vmem:[#allocation2 + $0x7d] sm:$0xff]
    %v2446 = vpack.c.bf16 %v2435, %v2434
    %v2447 = vpack.c.bf16 %v2437, %v2436
    %v2448 = vpack.c.bf16 %v2439, %v2438
    %v2449 = vpack.c.bf16 %v2441, %v2440
    %v2450 = vpack.c.bf16 %v2443, %v2442
    %v2451 = vpack.c.bf16 %v2445, %v2444
    %s2452 = scalar_lea.vmem %s3, 64
    %v2453 = vld [vmem:[%s2452] sm:$0x7]
    %v2455 = vsel %vm39, %v2446, 0
    %v2458 = vsel %vm39, %v2447, 0
    %v2461 = vsel %vm39, %v2448, 0
    %v2464 = vsel %vm39, %v2449, 0
    %v2467 = vsel %vm39, %v2450, 0
    %v2470 = vsel %vm39, %v2451, 0
    %v2473 = vsel %vm371, %v2453, 0
    %2475 = vmatprep.subr.bf16.mxu0 0
    %2476 = vmatpush1.bf16.msra.mxu0 %v2473
    %2477 = vmatprep.subr.bf16.mxu0 0
    %2478 = vmatpush1.bf16.msra.mxu0 0
    %2479 = vmatprep.subr.bf16.mxu0 0
    %2480 = vmatpush1.bf16.msra.mxu0 0
    %2481 = vmatprep.subr.bf16.mxu0 0
    %2482 = vmatpush1.bf16.msra.mxu0 0
    %2483 = vmatprep.subr.bf16.mxu0 0
    %2484 = vmatpush1.bf16.msra.mxu0 0
    %2485 = vmatprep.subr.bf16.mxu0 0
    %2486 = vmatpush1.bf16.msra.mxu0 0
    %2487 = vmatprep.subr.bf16.mxu0 0
    %2488 = vmatpush1.bf16.msra.mxu0 0
    %2489 = vmatprep.subr.bf16.mxu0 0
    %2490 = vmatpush1.bf16.msra.mxu0 0
    %2491 = vmatprep.subr.bf16.mxu0 0
    %2492 = vmatpush1.bf16.msra.mxu0 0
    %2493 = vmatprep.subr.bf16.mxu0 0
    %2494 = vmatpush1.bf16.msra.mxu0 0
    %2495 = vmatprep.subr.bf16.mxu0 0
    %2496 = vmatpush1.bf16.msra.mxu0 0
    %2497 = vmatprep.subr.bf16.mxu0 0
    %2498 = vmatpush1.bf16.msra.mxu0 0
    %2499 = vmatprep.subr.bf16.mxu0 0
    %2500 = vmatpush1.bf16.msra.mxu0 0
    %2501 = vmatprep.subr.bf16.mxu0 0
    %2502 = vmatpush1.bf16.msra.mxu0 0
    %2503 = vmatprep.subr.bf16.mxu0 0
    %2504 = vmatpush1.bf16.msra.mxu0 0
    %2505 = vmatprep.subr.bf16.mxu0 0
    %2506 = vmatpush1.bf16.msra.mxu0 0
    %2507 = vmatprep.mubr.bf16.mxu0 0
    %2508 = vmatmul.mubr.bf16.gmra.mrb[0].mxu0 %v2455
    %v2509 = vpop.f32.mrb[0].mxu0
    %v2510 = vadd.f32 0.0, %v2509
    %v2511 = vpop.f32.mrb[0].mxu0
    %v2512 = vpop.f32.mrb[0].mxu0
    %v2513 = vadd.f32 0.0, %v2512
    %v2514 = vpop.f32.mrb[0].mxu0
    %2515 = vmatprep.mubr.bf16.mxu0 0
    %2516 = vmatmul.mubr.bf16.gmra.mrb[0].mxu0 %v2458
    %v2517 = vpop.f32.mrb[0].mxu0
    %v2518 = vadd.f32 0.0, %v2517
    %v2519 = vpop.f32.mrb[0].mxu0
    %v2520 = vpop.f32.mrb[0].mxu0
    %v2521 = vadd.f32 0.0, %v2520
    %v2522 = vpop.f32.mrb[0].mxu0
    %2523 = vmatprep.mubr.bf16.mxu0 0
    %2524 = vmatmul.mubr.bf16.gmra.mrb[0].mxu0 %v2461
    %v2525 = vpop.f32.mrb[0].mxu0
    %v2526 = vadd.f32 0.0, %v2525
    %v2527 = vpop.f32.mrb[0].mxu0
    %v2528 = vpop.f32.mrb[0].mxu0
    %v2529 = vadd.f32 0.0, %v2528
    %v2530 = vpop.f32.mrb[0].mxu0
    %2531 = vmatprep.mubr.bf16.mxu0 0
    %2532 = vmatmul.mubr.bf16.gmra.mrb[0].mxu0 %v2464
    %v2533 = vpop.f32.mrb[0].mxu0
    %v2534 = vadd.f32 0.0, %v2533
    %v2535 = vpop.f32.mrb[0].mxu0
    %v2536 = vpop.f32.mrb[0].mxu0
    %v2537 = vadd.f32 0.0, %v2536
    %v2538 = vpop.f32.mrb[0].mxu0
    %2539 = vmatprep.mubr.bf16.mxu0 0
    %2540 = vmatmul.mubr.bf16.gmra.mrb[0].mxu0 %v2467
    %v2541 = vpop.f32.mrb[0].mxu0
    %v2542 = vadd.f32 0.0, %v2541
    %v2543 = vpop.f32.mrb[0].mxu0
    %v2544 = vpop.f32.mrb[0].mxu0
    %v2545 = vadd.f32 0.0, %v2544
    %v2546 = vpop.f32.mrb[0].mxu0
    %2547 = vmatprep.mubr.bf16.mxu0 0
    %2548 = vmatmul.mubr.bf16.gmra.mrb[0].mxu0 %v2470
    %v2549 = vpop.f32.mrb[0].mxu0
    %v2550 = vadd.f32 0.0, %v2549
    %v2551 = vpop.f32.mrb[0].mxu0
    %v2552 = vpop.f32.mrb[0].mxu0
    %v2553 = vadd.f32 0.0, %v2552
    %v2554 = vpop.f32.mrb[0].mxu0
    %2555 = vdwg.mxu0
    %v2556 = vadd.f32 %v2422, %v2510
    %v2557 = vadd.f32 %v2423, %v2513
    %v2558 = vadd.f32 %v2424, %v2518
    %v2559 = vadd.f32 %v2425, %v2521
    %v2560 = vadd.f32 %v2426, %v2526
    %v2561 = vadd.f32 %v2427, %v2529
    %v2562 = vadd.f32 %v2428, %v2534
    %v2563 = vadd.f32 %v2429, %v2537
    %v2564 = vadd.f32 %v2430, %v2542
    %v2565 = vadd.f32 %v2431, %v2545
    %v2566 = vadd.f32 %v2432, %v2550
    %v2567 = vadd.f32 %v2433, %v2553
    %v2568 = vld [vmem:[#allocation2 + $0x26] sm:$0xff]
    %v2569 = vld [vmem:[#allocation2 + $0x2e] sm:$0xff]
    %v2570 = vld [vmem:[#allocation2 + $0x36] sm:$0xff]
    %v2571 = vld [vmem:[#allocation2 + $0x3e] sm:$0xff]
    %v2572 = vld [vmem:[#allocation2 + $0x46] sm:$0xff]
    %v2573 = vld [vmem:[#allocation2 + $0x4e] sm:$0xff]
    %v2574 = vld [vmem:[#allocation2 + $0x56] sm:$0xff]
    %v2575 = vld [vmem:[#allocation2 + $0x5e] sm:$0xff]
    %v2576 = vld [vmem:[#allocation2 + $0x66] sm:$0xff]
    %v2577 = vld [vmem:[#allocation2 + $0x6e] sm:$0xff]
    %v2578 = vld [vmem:[#allocation2 + $0x76] sm:$0xff]
    %v2579 = vld [vmem:[#allocation2 + $0x7e] sm:$0xff]
    %v2580 = vpack.c.bf16 %v2569, %v2568
    %v2581 = vpack.c.bf16 %v2571, %v2570
    %v2582 = vpack.c.bf16 %v2573, %v2572
    %v2583 = vpack.c.bf16 %v2575, %v2574
    %v2584 = vpack.c.bf16 %v2577, %v2576
    %v2585 = vpack.c.bf16 %v2579, %v2578
    %s2586 = scalar_lea.vmem %s3, 68
    %v2587 = vld [vmem:[%s2586] sm:$0x7]
    %v2589 = vsel %vm39, %v2580, 0
    %v2592 = vsel %vm39, %v2581, 0
    %v2595 = vsel %vm39, %v2582, 0
    %v2598 = vsel %vm39, %v2583, 0
    %v2601 = vsel %vm39, %v2584, 0
    %v2604 = vsel %vm39, %v2585, 0
    %v2607 = vsel %vm371, %v2587, 0
    %2609 = vmatprep.subr.bf16.mxu0 0
    %2610 = vmatpush1.bf16.msra.mxu0 %v2607
    %2611 = vmatprep.subr.bf16.mxu0 0
    %2612 = vmatpush1.bf16.msra.mxu0 0
    %2613 = vmatprep.subr.bf16.mxu0 0
    %2614 = vmatpush1.bf16.msra.mxu0 0
    %2615 = vmatprep.subr.bf16.mxu0 0
    %2616 = vmatpush1.bf16.msra.mxu0 0
    %2617 = vmatprep.subr.bf16.mxu0 0
    %2618 = vmatpush1.bf16.msra.mxu0 0
    %2619 = vmatprep.subr.bf16.mxu0 0
    %2620 = vmatpush1.bf16.msra.mxu0 0
    %2621 = vmatprep.subr.bf16.mxu0 0
    %2622 = vmatpush1.bf16.msra.mxu0 0
    %2623 = vmatprep.subr.bf16.mxu0 0
    %2624 = vmatpush1.bf16.msra.mxu0 0
    %2625 = vmatprep.subr.bf16.mxu0 0
    %2626 = vmatpush1.bf16.msra.mxu0 0
    %2627 = vmatprep.subr.bf16.mxu0 0
    %2628 = vmatpush1.bf16.msra.mxu0 0
    %2629 = vmatprep.subr.bf16.mxu0 0
    %2630 = vmatpush1.bf16.msra.mxu0 0
    %2631 = vmatprep.subr.bf16.mxu0 0
    %2632 = vmatpush1.bf16.msra.mxu0 0
    %2633 = vmatprep.subr.bf16.mxu0 0
    %2634 = vmatpush1.bf16.msra.mxu0 0
    %2635 = vmatprep.subr.bf16.mxu0 0
    %2636 = vmatpush1.bf16.msra.mxu0 0
    %2637 = vmatprep.subr.bf16.mxu0 0
    %2638 = vmatpush1.bf16.msra.mxu0 0
    %2639 = vmatprep.subr.bf16.mxu0 0
    %2640 = vmatpush1.bf16.msra.mxu0 0
    %2641 = vmatprep.mubr.bf16.mxu0 0
    %2642 = vmatmul.mubr.bf16.gmra.mrb[0].mxu0 %v2589
    %v2643 = vpop.f32.mrb[0].mxu0
    %v2644 = vadd.f32 0.0, %v2643
    %v2645 = vpop.f32.mrb[0].mxu0
    %v2646 = vpop.f32.mrb[0].mxu0
    %v2647 = vadd.f32 0.0, %v2646
    %v2648 = vpop.f32.mrb[0].mxu0
    %2649 = vmatprep.mubr.bf16.mxu0 0
    %2650 = vmatmul.mubr.bf16.gmra.mrb[0].mxu0 %v2592
    %v2651 = vpop.f32.mrb[0].mxu0
    %v2652 = vadd.f32 0.0, %v2651
    %v2653 = vpop.f32.mrb[0].mxu0
    %v2654 = vpop.f32.mrb[0].mxu0
    %v2655 = vadd.f32 0.0, %v2654
    %v2656 = vpop.f32.mrb[0].mxu0
    %2657 = vmatprep.mubr.bf16.mxu0 0
    %2658 = vmatmul.mubr.bf16.gmra.mrb[0].mxu0 %v2595
    %v2659 = vpop.f32.mrb[0].mxu0
    %v2660 = vadd.f32 0.0, %v2659
    %v2661 = vpop.f32.mrb[0].mxu0
    %v2662 = vpop.f32.mrb[0].mxu0
    %v2663 = vadd.f32 0.0, %v2662
    %v2664 = vpop.f32.mrb[0].mxu0
    %2665 = vmatprep.mubr.bf16.mxu0 0
    %2666 = vmatmul.mubr.bf16.gmra.mrb[0].mxu0 %v2598
    %v2667 = vpop.f32.mrb[0].mxu0
    %v2668 = vadd.f32 0.0, %v2667
    %v2669 = vpop.f32.mrb[0].mxu0
    %v2670 = vpop.f32.mrb[0].mxu0
    %v2671 = vadd.f32 0.0, %v2670
    %v2672 = vpop.f32.mrb[0].mxu0
    %2673 = vmatprep.mubr.bf16.mxu0 0
    %2674 = vmatmul.mubr.bf16.gmra.mrb[0].mxu0 %v2601
    %v2675 = vpop.f32.mrb[0].mxu0
    %v2676 = vadd.f32 0.0, %v2675
    %v2677 = vpop.f32.mrb[0].mxu0
    %v2678 = vpop.f32.mrb[0].mxu0
    %v2679 = vadd.f32 0.0, %v2678
    %v2680 = vpop.f32.mrb[0].mxu0
    %2681 = vmatprep.mubr.bf16.mxu0 0
    %2682 = vmatmul.mubr.bf16.gmra.mrb[0].mxu0 %v2604
    %v2683 = vpop.f32.mrb[0].mxu0
    %v2684 = vadd.f32 0.0, %v2683
    %v2685 = vpop.f32.mrb[0].mxu0
    %v2686 = vpop.f32.mrb[0].mxu0
    %v2687 = vadd.f32 0.0, %v2686
    %v2688 = vpop.f32.mrb[0].mxu0
    %2689 = vdwg.mxu0
    %v2690 = vadd.f32 %v2556, %v2644
    %v2691 = vadd.f32 %v2557, %v2647
    %v2692 = vadd.f32 %v2558, %v2652
    %v2693 = vadd.f32 %v2559, %v2655
    %v2694 = vadd.f32 %v2560, %v2660
    %v2695 = vadd.f32 %v2561, %v2663
    %v2696 = vadd.f32 %v2562, %v2668
    %v2697 = vadd.f32 %v2563, %v2671
    %v2698 = vadd.f32 %v2564, %v2676
    %v2699 = vadd.f32 %v2565, %v2679
    %v2700 = vadd.f32 %v2566, %v2684
    %v2701 = vadd.f32 %v2567, %v2687
    %v2702 = vld [vmem:[#allocation2 + $0x27] sm:$0xff]
    %v2703 = vld [vmem:[#allocation2 + $0x2f] sm:$0xff]
    %v2704 = vld [vmem:[#allocation2 + $0x37] sm:$0xff]
    %v2705 = vld [vmem:[#allocation2 + $0x3f] sm:$0xff]
    %v2706 = vld [vmem:[#allocation2 + $0x47] sm:$0xff]
    %v2707 = vld [vmem:[#allocation2 + $0x4f] sm:$0xff]
    %v2708 = vld [vmem:[#allocation2 + $0x57] sm:$0xff]
    %v2709 = vld [vmem:[#allocation2 + $0x5f] sm:$0xff]
    %v2710 = vld [vmem:[#allocation2 + $0x67] sm:$0xff]
    %v2711 = vld [vmem:[#allocation2 + $0x6f] sm:$0xff]
    %v2712 = vld [vmem:[#allocation2 + $0x77] sm:$0xff]
    %v2713 = vld [vmem:[#allocation2 + $0x7f] sm:$0xff]
    %v2714 = vpack.c.bf16 %v2703, %v2702
    %v2715 = vpack.c.bf16 %v2705, %v2704
    %v2716 = vpack.c.bf16 %v2707, %v2706
    %v2717 = vpack.c.bf16 %v2709, %v2708
    %v2718 = vpack.c.bf16 %v2711, %v2710
    %v2719 = vpack.c.bf16 %v2713, %v2712
    %s2720 = scalar_lea.vmem %s3, 72
    %v2721 = vld [vmem:[%s2720] sm:$0x7]
    %v2723 = vsel %vm39, %v2714, 0
    %v2726 = vsel %vm39, %v2715, 0
    %v2729 = vsel %vm39, %v2716, 0
    %v2732 = vsel %vm39, %v2717, 0
    %v2735 = vsel %vm39, %v2718, 0
    %v2738 = vsel %vm39, %v2719, 0
    %v2741 = vsel %vm371, %v2721, 0
    %2743 = vmatprep.subr.bf16.mxu0 0
    %2744 = vmatpush1.bf16.msra.mxu0 %v2741
    %2745 = vmatprep.subr.bf16.mxu0 0
    %2746 = vmatpush1.bf16.msra.mxu0 0
    %2747 = vmatprep.subr.bf16.mxu0 0
    %2748 = vmatpush1.bf16.msra.mxu0 0
    %2749 = vmatprep.subr.bf16.mxu0 0
    %2750 = vmatpush1.bf16.msra.mxu0 0
    %2751 = vmatprep.subr.bf16.mxu0 0
    %2752 = vmatpush1.bf16.msra.mxu0 0
    %2753 = vmatprep.subr.bf16.mxu0 0
    %2754 = vmatpush1.bf16.msra.mxu0 0
    %2755 = vmatprep.subr.bf16.mxu0 0
    %2756 = vmatpush1.bf16.msra.mxu0 0
    %2757 = vmatprep.subr.bf16.mxu0 0
    %2758 = vmatpush1.bf16.msra.mxu0 0
    %2759 = vmatprep.subr.bf16.mxu0 0
    %2760 = vmatpush1.bf16.msra.mxu0 0
    %2761 = vmatprep.subr.bf16.mxu0 0
    %2762 = vmatpush1.bf16.msra.mxu0 0
    %2763 = vmatprep.subr.bf16.mxu0 0
    %2764 = vmatpush1.bf16.msra.mxu0 0
    %2765 = vmatprep.subr.bf16.mxu0 0
    %2766 = vmatpush1.bf16.msra.mxu0 0
    %2767 = vmatprep.subr.bf16.mxu0 0
    %2768 = vmatpush1.bf16.msra.mxu0 0
    %2769 = vmatprep.subr.bf16.mxu0 0
    %2770 = vmatpush1.bf16.msra.mxu0 0
    %2771 = vmatprep.subr.bf16.mxu0 0
    %2772 = vmatpush1.bf16.msra.mxu0 0
    %2773 = vmatprep.subr.bf16.mxu0 0
    %2774 = vmatpush1.bf16.msra.mxu0 0
    %2775 = vmatprep.mubr.bf16.mxu0 0
    %2776 = vmatmul.mubr.bf16.gmra.mrb[0].mxu0 %v2723
    %v2777 = vpop.f32.mrb[0].mxu0
    %v2778 = vadd.f32 0.0, %v2777
    %v2779 = vpop.f32.mrb[0].mxu0
    %v2780 = vpop.f32.mrb[0].mxu0
    %v2781 = vadd.f32 0.0, %v2780
    %v2782 = vpop.f32.mrb[0].mxu0
    %2783 = vmatprep.mubr.bf16.mxu0 0
    %2784 = vmatmul.mubr.bf16.gmra.mrb[0].mxu0 %v2726
    %v2785 = vpop.f32.mrb[0].mxu0
    %v2786 = vadd.f32 0.0, %v2785
    %v2787 = vpop.f32.mrb[0].mxu0
    %v2788 = vpop.f32.mrb[0].mxu0
    %v2789 = vadd.f32 0.0, %v2788
    %v2790 = vpop.f32.mrb[0].mxu0
    %2791 = vmatprep.mubr.bf16.mxu0 0
    %2792 = vmatmul.mubr.bf16.gmra.mrb[0].mxu0 %v2729
    %v2793 = vpop.f32.mrb[0].mxu0
    %v2794 = vadd.f32 0.0, %v2793
    %v2795 = vpop.f32.mrb[0].mxu0
    %v2796 = vpop.f32.mrb[0].mxu0
    %v2797 = vadd.f32 0.0, %v2796
    %v2798 = vpop.f32.mrb[0].mxu0
    %2799 = vmatprep.mubr.bf16.mxu0 0
    %2800 = vmatmul.mubr.bf16.gmra.mrb[0].mxu0 %v2732
    %v2801 = vpop.f32.mrb[0].mxu0
    %v2802 = vadd.f32 0.0, %v2801
    %v2803 = vpop.f32.mrb[0].mxu0
    %v2804 = vpop.f32.mrb[0].mxu0
    %v2805 = vadd.f32 0.0, %v2804
    %v2806 = vpop.f32.mrb[0].mxu0
    %2807 = vmatprep.mubr.bf16.mxu0 0
    %2808 = vmatmul.mubr.bf16.gmra.mrb[0].mxu0 %v2735
    %v2809 = vpop.f32.mrb[0].mxu0
    %v2810 = vadd.f32 0.0, %v2809
    %v2811 = vpop.f32.mrb[0].mxu0
    %v2812 = vpop.f32.mrb[0].mxu0
    %v2813 = vadd.f32 0.0, %v2812
    %v2814 = vpop.f32.mrb[0].mxu0
    %2815 = vmatprep.mubr.bf16.mxu0 0
    %2816 = vmatmul.mubr.bf16.gmra.mrb[0].mxu0 %v2738
    %v2817 = vpop.f32.mrb[0].mxu0
    %v2818 = vadd.f32 0.0, %v2817
    %v2819 = vpop.f32.mrb[0].mxu0
    %v2820 = vpop.f32.mrb[0].mxu0
    %v2821 = vadd.f32 0.0, %v2820
    %v2822 = vpop.f32.mrb[0].mxu0
    %2823 = vdwg.mxu0
    %v2824 = vadd.f32 %v2690, %v2778
    %v2825 = vadd.f32 %v2691, %v2781
    %v2826 = vadd.f32 %v2692, %v2786
    %v2827 = vadd.f32 %v2693, %v2789
    %v2828 = vadd.f32 %v2694, %v2794
    %v2829 = vadd.f32 %v2695, %v2797
    %v2830 = vadd.f32 %v2696, %v2802
    %v2831 = vadd.f32 %v2697, %v2805
    %v2832 = vadd.f32 %v2698, %v2810
    %v2833 = vadd.f32 %v2699, %v2813
    %v2834 = vadd.f32 %v2700, %v2818
    %v2835 = vadd.f32 %v2701, %v2821
    %v2836 = vld [vmem:[#allocation2 + $0x28] sm:$0xff]
    %v2837 = vld [vmem:[#allocation2 + $0x30] sm:$0xff]
    %v2838 = vld [vmem:[#allocation2 + $0x38] sm:$0xff]
    %v2839 = vld [vmem:[#allocation2 + $0x40] sm:$0xff]
    %v2840 = vld [vmem:[#allocation2 + $0x48] sm:$0xff]
    %v2841 = vld [vmem:[#allocation2 + $0x50] sm:$0xff]
    %v2842 = vld [vmem:[#allocation2 + $0x58] sm:$0xff]
    %v2843 = vld [vmem:[#allocation2 + $0x60] sm:$0xff]
    %v2844 = vld [vmem:[#allocation2 + $0x68] sm:$0xff]
    %v2845 = vld [vmem:[#allocation2 + $0x70] sm:$0xff]
    %v2846 = vld [vmem:[#allocation2 + $0x78] sm:$0xff]
    %v2847 = vld [vmem:[#allocation2 + $0x80] sm:$0xff]
    %v2848 = vpack.c.bf16 %v2837, %v2836
    %v2849 = vpack.c.bf16 %v2839, %v2838
    %v2850 = vpack.c.bf16 %v2841, %v2840
    %v2851 = vpack.c.bf16 %v2843, %v2842
    %v2852 = vpack.c.bf16 %v2845, %v2844
    %v2853 = vpack.c.bf16 %v2847, %v2846
    %s2854 = scalar_lea.vmem %s3, 76
    %v2855 = vld [vmem:[%s2854] sm:$0x7]
    %v2857 = vsel %vm39, %v2848, 0
    %v2860 = vsel %vm39, %v2849, 0
    %v2863 = vsel %vm39, %v2850, 0
    %v2866 = vsel %vm39, %v2851, 0
    %v2869 = vsel %vm39, %v2852, 0
    %v2872 = vsel %vm39, %v2853, 0
    %v2875 = vsel %vm371, %v2855, 0
    %2877 = vmatprep.subr.bf16.mxu0 0
    %2878 = vmatpush1.bf16.msra.mxu0 %v2875
    %2879 = vmatprep.subr.bf16.mxu0 0
    %2880 = vmatpush1.bf16.msra.mxu0 0
    %2881 = vmatprep.subr.bf16.mxu0 0
    %2882 = vmatpush1.bf16.msra.mxu0 0
    %2883 = vmatprep.subr.bf16.mxu0 0
    %2884 = vmatpush1.bf16.msra.mxu0 0
    %2885 = vmatprep.subr.bf16.mxu0 0
    %2886 = vmatpush1.bf16.msra.mxu0 0
    %2887 = vmatprep.subr.bf16.mxu0 0
    %2888 = vmatpush1.bf16.msra.mxu0 0
    %2889 = vmatprep.subr.bf16.mxu0 0
    %2890 = vmatpush1.bf16.msra.mxu0 0
    %2891 = vmatprep.subr.bf16.mxu0 0
    %2892 = vmatpush1.bf16.msra.mxu0 0
    %2893 = vmatprep.subr.bf16.mxu0 0
    %2894 = vmatpush1.bf16.msra.mxu0 0
    %2895 = vmatprep.subr.bf16.mxu0 0
    %2896 = vmatpush1.bf16.msra.mxu0 0
    %2897 = vmatprep.subr.bf16.mxu0 0
    %2898 = vmatpush1.bf16.msra.mxu0 0
    %2899 = vmatprep.subr.bf16.mxu0 0
    %2900 = vmatpush1.bf16.msra.mxu0 0
    %2901 = vmatprep.subr.bf16.mxu0 0
    %2902 = vmatpush1.bf16.msra.mxu0 0
    %2903 = vmatprep.subr.bf16.mxu0 0
    %2904 = vmatpush1.bf16.msra.mxu0 0
    %2905 = vmatprep.subr.bf16.mxu0 0
    %2906 = vmatpush1.bf16.msra.mxu0 0
    %2907 = vmatprep.subr.bf16.mxu0 0
    %2908 = vmatpush1.bf16.msra.mxu0 0
    %2909 = vmatprep.mubr.bf16.mxu0 0
    %2910 = vmatmul.mubr.bf16.gmra.mrb[0].mxu0 %v2857
    %v2911 = vpop.f32.mrb[0].mxu0
    %v2912 = vadd.f32 0.0, %v2911
    %v2913 = vpop.f32.mrb[0].mxu0
    %v2914 = vpop.f32.mrb[0].mxu0
    %v2915 = vadd.f32 0.0, %v2914
    %v2916 = vpop.f32.mrb[0].mxu0
    %2917 = vmatprep.mubr.bf16.mxu0 0
    %2918 = vmatmul.mubr.bf16.gmra.mrb[0].mxu0 %v2860
    %v2919 = vpop.f32.mrb[0].mxu0
    %v2920 = vadd.f32 0.0, %v2919
    %v2921 = vpop.f32.mrb[0].mxu0
    %v2922 = vpop.f32.mrb[0].mxu0
    %v2923 = vadd.f32 0.0, %v2922
    %v2924 = vpop.f32.mrb[0].mxu0
    %2925 = vmatprep.mubr.bf16.mxu0 0
    %2926 = vmatmul.mubr.bf16.gmra.mrb[0].mxu0 %v2863
    %v2927 = vpop.f32.mrb[0].mxu0
    %v2928 = vadd.f32 0.0, %v2927
    %v2929 = vpop.f32.mrb[0].mxu0
    %v2930 = vpop.f32.mrb[0].mxu0
    %v2931 = vadd.f32 0.0, %v2930
    %v2932 = vpop.f32.mrb[0].mxu0
    %2933 = vmatprep.mubr.bf16.mxu0 0
    %2934 = vmatmul.mubr.bf16.gmra.mrb[0].mxu0 %v2866
    %v2935 = vpop.f32.mrb[0].mxu0
    %v2936 = vadd.f32 0.0, %v2935
    %v2937 = vpop.f32.mrb[0].mxu0
    %v2938 = vpop.f32.mrb[0].mxu0
    %v2939 = vadd.f32 0.0, %v2938
    %v2940 = vpop.f32.mrb[0].mxu0
    %2941 = vmatprep.mubr.bf16.mxu0 0
    %2942 = vmatmul.mubr.bf16.gmra.mrb[0].mxu0 %v2869
    %v2943 = vpop.f32.mrb[0].mxu0
    %v2944 = vadd.f32 0.0, %v2943
    %v2945 = vpop.f32.mrb[0].mxu0
    %v2946 = vpop.f32.mrb[0].mxu0
    %v2947 = vadd.f32 0.0, %v2946
    %v2948 = vpop.f32.mrb[0].mxu0
    %2949 = vmatprep.mubr.bf16.mxu0 0
    %2950 = vmatmul.mubr.bf16.gmra.mrb[0].mxu0 %v2872
    %v2951 = vpop.f32.mrb[0].mxu0
    %v2952 = vadd.f32 0.0, %v2951
    %v2953 = vpop.f32.mrb[0].mxu0
    %v2954 = vpop.f32.mrb[0].mxu0
    %v2955 = vadd.f32 0.0, %v2954
    %v2956 = vpop.f32.mrb[0].mxu0
    %2957 = vdwg.mxu0
    %v2958 = vadd.f32 %v2824, %v2912
    %v2959 = vadd.f32 %v2825, %v2915
    %v2960 = vadd.f32 %v2826, %v2920
    %v2961 = vadd.f32 %v2827, %v2923
    %v2962 = vadd.f32 %v2828, %v2928
    %v2963 = vadd.f32 %v2829, %v2931
    %v2964 = vadd.f32 %v2830, %v2936
    %v2965 = vadd.f32 %v2831, %v2939
    %v2966 = vadd.f32 %v2832, %v2944
    %v2967 = vadd.f32 %v2833, %v2947
    %v2968 = vadd.f32 %v2834, %v2952
    %v2969 = vadd.f32 %v2835, %v2955
    %v2970 = vld [vmem:[#allocation2 + $0x30] sm:$0xff]
    %v2971 = vld [vmem:[#allocation2 + $0x38] sm:$0xff]
    %v2972 = vld [vmem:[#allocation2 + $0x40] sm:$0xff]
    %v2973 = vld [vmem:[#allocation2 + $0x48] sm:$0xff]
    %v2974 = vld [vmem:[#allocation2 + $0x50] sm:$0xff]
    %v2975 = vld [vmem:[#allocation2 + $0x58] sm:$0xff]
    %v2976 = vld [vmem:[#allocation2 + $0x60] sm:$0xff]
    %v2977 = vld [vmem:[#allocation2 + $0x68] sm:$0xff]
    %v2978 = vld [vmem:[#allocation2 + $0x70] sm:$0xff]
    %v2979 = vld [vmem:[#allocation2 + $0x78] sm:$0xff]
    %v2980 = vld [vmem:[#allocation2 + $0x80] sm:$0xff]
    %v2981 = vld [vmem:[#allocation2 + $0x88] sm:$0xff]
    %v2982 = vpack.c.bf16 %v2971, %v2970
    %v2983 = vpack.c.bf16 %v2973, %v2972
    %v2984 = vpack.c.bf16 %v2975, %v2974
    %v2985 = vpack.c.bf16 %v2977, %v2976
    %v2986 = vpack.c.bf16 %v2979, %v2978
    %v2987 = vpack.c.bf16 %v2981, %v2980
    %s2988 = scalar_lea.vmem %s3, 80
    %v2989 = vld [vmem:[%s2988] sm:$0x7]
    %v2991 = vsel %vm39, %v2982, 0
    %v2994 = vsel %vm39, %v2983, 0
    %v2997 = vsel %vm39, %v2984, 0
    %v3000 = vsel %vm39, %v2985, 0
    %v3003 = vsel %vm39, %v2986, 0
    %v3006 = vsel %vm39, %v2987, 0
    %v3009 = vsel %vm371, %v2989, 0
    %3011 = vmatprep.subr.bf16.mxu0 0
    %3012 = vmatpush1.bf16.msra.mxu0 %v3009
    %3013 = vmatprep.subr.bf16.mxu0 0
    %3014 = vmatpush1.bf16.msra.mxu0 0
    %3015 = vmatprep.subr.bf16.mxu0 0
    %3016 = vmatpush1.bf16.msra.mxu0 0
    %3017 = vmatprep.subr.bf16.mxu0 0
    %3018 = vmatpush1.bf16.msra.mxu0 0
    %3019 = vmatprep.subr.bf16.mxu0 0
    %3020 = vmatpush1.bf16.msra.mxu0 0
    %3021 = vmatprep.subr.bf16.mxu0 0
    %3022 = vmatpush1.bf16.msra.mxu0 0
    %3023 = vmatprep.subr.bf16.mxu0 0
    %3024 = vmatpush1.bf16.msra.mxu0 0
    %3025 = vmatprep.subr.bf16.mxu0 0
    %3026 = vmatpush1.bf16.msra.mxu0 0
    %3027 = vmatprep.subr.bf16.mxu0 0
    %3028 = vmatpush1.bf16.msra.mxu0 0
    %3029 = vmatprep.subr.bf16.mxu0 0
    %3030 = vmatpush1.bf16.msra.mxu0 0
    %3031 = vmatprep.subr.bf16.mxu0 0
    %3032 = vmatpush1.bf16.msra.mxu0 0
    %3033 = vmatprep.subr.bf16.mxu0 0
    %3034 = vmatpush1.bf16.msra.mxu0 0
    %3035 = vmatprep.subr.bf16.mxu0 0
    %3036 = vmatpush1.bf16.msra.mxu0 0
    %3037 = vmatprep.subr.bf16.mxu0 0
    %3038 = vmatpush1.bf16.msra.mxu0 0
    %3039 = vmatprep.subr.bf16.mxu0 0
    %3040 = vmatpush1.bf16.msra.mxu0 0
    %3041 = vmatprep.subr.bf16.mxu0 0
    %3042 = vmatpush1.bf16.msra.mxu0 0
    %3043 = vmatprep.mubr.bf16.mxu0 0
    %3044 = vmatmul.mubr.bf16.gmra.mrb[0].mxu0 %v2991
    %v3045 = vpop.f32.mrb[0].mxu0
    %v3046 = vadd.f32 0.0, %v3045
    %v3047 = vpop.f32.mrb[0].mxu0
    %v3048 = vpop.f32.mrb[0].mxu0
    %v3049 = vadd.f32 0.0, %v3048
    %v3050 = vpop.f32.mrb[0].mxu0
    %3051 = vmatprep.mubr.bf16.mxu0 0
    %3052 = vmatmul.mubr.bf16.gmra.mrb[0].mxu0 %v2994
    %v3053 = vpop.f32.mrb[0].mxu0
    %v3054 = vadd.f32 0.0, %v3053
    %v3055 = vpop.f32.mrb[0].mxu0
    %v3056 = vpop.f32.mrb[0].mxu0
    %v3057 = vadd.f32 0.0, %v3056
    %v3058 = vpop.f32.mrb[0].mxu0
    %3059 = vmatprep.mubr.bf16.mxu0 0
    %3060 = vmatmul.mubr.bf16.gmra.mrb[0].mxu0 %v2997
    %v3061 = vpop.f32.mrb[0].mxu0
    %v3062 = vadd.f32 0.0, %v3061
    %v3063 = vpop.f32.mrb[0].mxu0
    %v3064 = vpop.f32.mrb[0].mxu0
    %v3065 = vadd.f32 0.0, %v3064
    %v3066 = vpop.f32.mrb[0].mxu0
    %3067 = vmatprep.mubr.bf16.mxu0 0
    %3068 = vmatmul.mubr.bf16.gmra.mrb[0].mxu0 %v3000
    %v3069 = vpop.f32.mrb[0].mxu0
    %v3070 = vadd.f32 0.0, %v3069
    %v3071 = vpop.f32.mrb[0].mxu0
    %v3072 = vpop.f32.mrb[0].mxu0
    %v3073 = vadd.f32 0.0, %v3072
    %v3074 = vpop.f32.mrb[0].mxu0
    %3075 = vmatprep.mubr.bf16.mxu0 0
    %3076 = vmatmul.mubr.bf16.gmra.mrb[0].mxu0 %v3003
    %v3077 = vpop.f32.mrb[0].mxu0
    %v3078 = vadd.f32 0.0, %v3077
    %v3079 = vpop.f32.mrb[0].mxu0
    %v3080 = vpop.f32.mrb[0].mxu0
    %v3081 = vadd.f32 0.0, %v3080
    %v3082 = vpop.f32.mrb[0].mxu0
    %3083 = vmatprep.mubr.bf16.mxu0 0
    %3084 = vmatmul.mubr.bf16.gmra.mrb[0].mxu0 %v3006
    %v3085 = vpop.f32.mrb[0].mxu0
    %v3086 = vadd.f32 0.0, %v3085
    %v3087 = vpop.f32.mrb[0].mxu0
    %v3088 = vpop.f32.mrb[0].mxu0
    %v3089 = vadd.f32 0.0, %v3088
    %v3090 = vpop.f32.mrb[0].mxu0
    %3091 = vdwg.mxu0
    %v3092 = vadd.f32 %v2958, %v3046
    %v3093 = vadd.f32 %v2959, %v3049
    %v3094 = vadd.f32 %v2960, %v3054
    %v3095 = vadd.f32 %v2961, %v3057
    %v3096 = vadd.f32 %v2962, %v3062
    %v3097 = vadd.f32 %v2963, %v3065
    %v3098 = vadd.f32 %v2964, %v3070
    %v3099 = vadd.f32 %v2965, %v3073
    %v3100 = vadd.f32 %v2966, %v3078
    %v3101 = vadd.f32 %v2967, %v3081
    %v3102 = vadd.f32 %v2968, %v3086
    %v3103 = vadd.f32 %v2969, %v3089
    %v3104 = vld [vmem:[#allocation2 + $0x31] sm:$0xff]
    %v3105 = vld [vmem:[#allocation2 + $0x39] sm:$0xff]
    %v3106 = vld [vmem:[#allocation2 + $0x41] sm:$0xff]
    %v3107 = vld [vmem:[#allocation2 + $0x49] sm:$0xff]
    %v3108 = vld [vmem:[#allocation2 + $0x51] sm:$0xff]
    %v3109 = vld [vmem:[#allocation2 + $0x59] sm:$0xff]
    %v3110 = vld [vmem:[#allocation2 + $0x61] sm:$0xff]
    %v3111 = vld [vmem:[#allocation2 + $0x69] sm:$0xff]
    %v3112 = vld [vmem:[#allocation2 + $0x71] sm:$0xff]
    %v3113 = vld [vmem:[#allocation2 + $0x79] sm:$0xff]
    %v3114 = vld [vmem:[#allocation2 + $0x81] sm:$0xff]
    %v3115 = vld [vmem:[#allocation2 + $0x89] sm:$0xff]
    %v3116 = vpack.c.bf16 %v3105, %v3104
    %v3117 = vpack.c.bf16 %v3107, %v3106
    %v3118 = vpack.c.bf16 %v3109, %v3108
    %v3119 = vpack.c.bf16 %v3111, %v3110
    %v3120 = vpack.c.bf16 %v3113, %v3112
    %v3121 = vpack.c.bf16 %v3115, %v3114
    %s3122 = scalar_lea.vmem %s3, 84
    %v3123 = vld [vmem:[%s3122] sm:$0x7]
    %v3125 = vsel %vm39, %v3116, 0
    %v3128 = vsel %vm39, %v3117, 0
    %v3131 = vsel %vm39, %v3118, 0
    %v3134 = vsel %vm39, %v3119, 0
    %v3137 = vsel %vm39, %v3120, 0
    %v3140 = vsel %vm39, %v3121, 0
    %v3143 = vsel %vm371, %v3123, 0
    %3145 = vmatprep.subr.bf16.mxu0 0
    %3146 = vmatpush1.bf16.msra.mxu0 %v3143
    %3147 = vmatprep.subr.bf16.mxu0 0
    %3148 = vmatpush1.bf16.msra.mxu0 0
    %3149 = vmatprep.subr.bf16.mxu0 0
    %3150 = vmatpush1.bf16.msra.mxu0 0
    %3151 = vmatprep.subr.bf16.mxu0 0
    %3152 = vmatpush1.bf16.msra.mxu0 0
    %3153 = vmatprep.subr.bf16.mxu0 0
    %3154 = vmatpush1.bf16.msra.mxu0 0
    %3155 = vmatprep.subr.bf16.mxu0 0
    %3156 = vmatpush1.bf16.msra.mxu0 0
    %3157 = vmatprep.subr.bf16.mxu0 0
    %3158 = vmatpush1.bf16.msra.mxu0 0
    %3159 = vmatprep.subr.bf16.mxu0 0
    %3160 = vmatpush1.bf16.msra.mxu0 0
    %3161 = vmatprep.subr.bf16.mxu0 0
    %3162 = vmatpush1.bf16.msra.mxu0 0
    %3163 = vmatprep.subr.bf16.mxu0 0
    %3164 = vmatpush1.bf16.msra.mxu0 0
    %3165 = vmatprep.subr.bf16.mxu0 0
    %3166 = vmatpush1.bf16.msra.mxu0 0
    %3167 = vmatprep.subr.bf16.mxu0 0
    %3168 = vmatpush1.bf16.msra.mxu0 0
    %3169 = vmatprep.subr.bf16.mxu0 0
    %3170 = vmatpush1.bf16.msra.mxu0 0
    %3171 = vmatprep.subr.bf16.mxu0 0
    %3172 = vmatpush1.bf16.msra.mxu0 0
    %3173 = vmatprep.subr.bf16.mxu0 0
    %3174 = vmatpush1.bf16.msra.mxu0 0
    %3175 = vmatprep.subr.bf16.mxu0 0
    %3176 = vmatpush1.bf16.msra.mxu0 0
    %3177 = vmatprep.mubr.bf16.mxu0 0
    %3178 = vmatmul.mubr.bf16.gmra.mrb[0].mxu0 %v3125
    %v3179 = vpop.f32.mrb[0].mxu0
    %v3180 = vadd.f32 0.0, %v3179
    %v3181 = vpop.f32.mrb[0].mxu0
    %v3182 = vpop.f32.mrb[0].mxu0
    %v3183 = vadd.f32 0.0, %v3182
    %v3184 = vpop.f32.mrb[0].mxu0
    %3185 = vmatprep.mubr.bf16.mxu0 0
    %3186 = vmatmul.mubr.bf16.gmra.mrb[0].mxu0 %v3128
    %v3187 = vpop.f32.mrb[0].mxu0
    %v3188 = vadd.f32 0.0, %v3187
    %v3189 = vpop.f32.mrb[0].mxu0
    %v3190 = vpop.f32.mrb[0].mxu0
    %v3191 = vadd.f32 0.0, %v3190
    %v3192 = vpop.f32.mrb[0].mxu0
    %3193 = vmatprep.mubr.bf16.mxu0 0
    %3194 = vmatmul.mubr.bf16.gmra.mrb[0].mxu0 %v3131
    %v3195 = vpop.f32.mrb[0].mxu0
    %v3196 = vadd.f32 0.0, %v3195
    %v3197 = vpop.f32.mrb[0].mxu0
    %v3198 = vpop.f32.mrb[0].mxu0
    %v3199 = vadd.f32 0.0, %v3198
    %v3200 = vpop.f32.mrb[0].mxu0
    %3201 = vmatprep.mubr.bf16.mxu0 0
    %3202 = vmatmul.mubr.bf16.gmra.mrb[0].mxu0 %v3134
    %v3203 = vpop.f32.mrb[0].mxu0
    %v3204 = vadd.f32 0.0, %v3203
    %v3205 = vpop.f32.mrb[0].mxu0
    %v3206 = vpop.f32.mrb[0].mxu0
    %v3207 = vadd.f32 0.0, %v3206
    %v3208 = vpop.f32.mrb[0].mxu0
    %3209 = vmatprep.mubr.bf16.mxu0 0
    %3210 = vmatmul.mubr.bf16.gmra.mrb[0].mxu0 %v3137
    %v3211 = vpop.f32.mrb[0].mxu0
    %v3212 = vadd.f32 0.0, %v3211
    %v3213 = vpop.f32.mrb[0].mxu0
    %v3214 = vpop.f32.mrb[0].mxu0
    %v3215 = vadd.f32 0.0, %v3214
    %v3216 = vpop.f32.mrb[0].mxu0
    %3217 = vmatprep.mubr.bf16.mxu0 0
    %3218 = vmatmul.mubr.bf16.gmra.mrb[0].mxu0 %v3140
    %v3219 = vpop.f32.mrb[0].mxu0
    %v3220 = vadd.f32 0.0, %v3219
    %v3221 = vpop.f32.mrb[0].mxu0
    %v3222 = vpop.f32.mrb[0].mxu0
    %v3223 = vadd.f32 0.0, %v3222
    %v3224 = vpop.f32.mrb[0].mxu0
    %3225 = vdwg.mxu0
    %v3226 = vadd.f32 %v3092, %v3180
    %v3227 = vadd.f32 %v3093, %v3183
    %v3228 = vadd.f32 %v3094, %v3188
    %v3229 = vadd.f32 %v3095, %v3191
    %v3230 = vadd.f32 %v3096, %v3196
    %v3231 = vadd.f32 %v3097, %v3199
    %v3232 = vadd.f32 %v3098, %v3204
    %v3233 = vadd.f32 %v3099, %v3207
    %v3234 = vadd.f32 %v3100, %v3212
    %v3235 = vadd.f32 %v3101, %v3215
    %v3236 = vadd.f32 %v3102, %v3220
    %v3237 = vadd.f32 %v3103, %v3223
    %v3238 = vld [vmem:[#allocation2 + $0x32] sm:$0xff]
    %v3239 = vld [vmem:[#allocation2 + $0x3a] sm:$0xff]
    %v3240 = vld [vmem:[#allocation2 + $0x42] sm:$0xff]
    %v3241 = vld [vmem:[#allocation2 + $0x4a] sm:$0xff]
    %v3242 = vld [vmem:[#allocation2 + $0x52] sm:$0xff]
    %v3243 = vld [vmem:[#allocation2 + $0x5a] sm:$0xff]
    %v3244 = vld [vmem:[#allocation2 + $0x62] sm:$0xff]
    %v3245 = vld [vmem:[#allocation2 + $0x6a] sm:$0xff]
    %v3246 = vld [vmem:[#allocation2 + $0x72] sm:$0xff]
    %v3247 = vld [vmem:[#allocation2 + $0x7a] sm:$0xff]
    %v3248 = vld [vmem:[#allocation2 + $0x82] sm:$0xff]
    %v3249 = vld [vmem:[#allocation2 + $0x8a] sm:$0xff]
    %v3250 = vpack.c.bf16 %v3239, %v3238
    %v3251 = vpack.c.bf16 %v3241, %v3240
    %v3252 = vpack.c.bf16 %v3243, %v3242
    %v3253 = vpack.c.bf16 %v3245, %v3244
    %v3254 = vpack.c.bf16 %v3247, %v3246
    %v3255 = vpack.c.bf16 %v3249, %v3248
    %s3256 = scalar_lea.vmem %s3, 88
    %v3257 = vld [vmem:[%s3256] sm:$0x7]
    %v3259 = vsel %vm39, %v3250, 0
    %v3262 = vsel %vm39, %v3251, 0
    %v3265 = vsel %vm39, %v3252, 0
    %v3268 = vsel %vm39, %v3253, 0
    %v3271 = vsel %vm39, %v3254, 0
    %v3274 = vsel %vm39, %v3255, 0
    %v3277 = vsel %vm371, %v3257, 0
    %3279 = vmatprep.subr.bf16.mxu0 0
    %3280 = vmatpush1.bf16.msra.mxu0 %v3277
    %3281 = vmatprep.subr.bf16.mxu0 0
    %3282 = vmatpush1.bf16.msra.mxu0 0
    %3283 = vmatprep.subr.bf16.mxu0 0
    %3284 = vmatpush1.bf16.msra.mxu0 0
    %3285 = vmatprep.subr.bf16.mxu0 0
    %3286 = vmatpush1.bf16.msra.mxu0 0
    %3287 = vmatprep.subr.bf16.mxu0 0
    %3288 = vmatpush1.bf16.msra.mxu0 0
    %3289 = vmatprep.subr.bf16.mxu0 0
    %3290 = vmatpush1.bf16.msra.mxu0 0
    %3291 = vmatprep.subr.bf16.mxu0 0
    %3292 = vmatpush1.bf16.msra.mxu0 0
    %3293 = vmatprep.subr.bf16.mxu0 0
    %3294 = vmatpush1.bf16.msra.mxu0 0
    %3295 = vmatprep.subr.bf16.mxu0 0
    %3296 = vmatpush1.bf16.msra.mxu0 0
    %3297 = vmatprep.subr.bf16.mxu0 0
    %3298 = vmatpush1.bf16.msra.mxu0 0
    %3299 = vmatprep.subr.bf16.mxu0 0
    %3300 = vmatpush1.bf16.msra.mxu0 0
    %3301 = vmatprep.subr.bf16.mxu0 0
    %3302 = vmatpush1.bf16.msra.mxu0 0
    %3303 = vmatprep.subr.bf16.mxu0 0
    %3304 = vmatpush1.bf16.msra.mxu0 0
    %3305 = vmatprep.subr.bf16.mxu0 0
    %3306 = vmatpush1.bf16.msra.mxu0 0
    %3307 = vmatprep.subr.bf16.mxu0 0
    %3308 = vmatpush1.bf16.msra.mxu0 0
    %3309 = vmatprep.subr.bf16.mxu0 0
    %3310 = vmatpush1.bf16.msra.mxu0 0
    %3311 = vmatprep.mubr.bf16.mxu0 0
    %3312 = vmatmul.mubr.bf16.gmra.mrb[0].mxu0 %v3259
    %v3313 = vpop.f32.mrb[0].mxu0
    %v3314 = vadd.f32 0.0, %v3313
    %v3315 = vpop.f32.mrb[0].mxu0
    %v3316 = vpop.f32.mrb[0].mxu0
    %v3317 = vadd.f32 0.0, %v3316
    %v3318 = vpop.f32.mrb[0].mxu0
    %3319 = vmatprep.mubr.bf16.mxu0 0
    %3320 = vmatmul.mubr.bf16.gmra.mrb[0].mxu0 %v3262
    %v3321 = vpop.f32.mrb[0].mxu0
    %v3322 = vadd.f32 0.0, %v3321
    %v3323 = vpop.f32.mrb[0].mxu0
    %v3324 = vpop.f32.mrb[0].mxu0
    %v3325 = vadd.f32 0.0, %v3324
    %v3326 = vpop.f32.mrb[0].mxu0
    %3327 = vmatprep.mubr.bf16.mxu0 0
    %3328 = vmatmul.mubr.bf16.gmra.mrb[0].mxu0 %v3265
    %v3329 = vpop.f32.mrb[0].mxu0
    %v3330 = vadd.f32 0.0, %v3329
    %v3331 = vpop.f32.mrb[0].mxu0
    %v3332 = vpop.f32.mrb[0].mxu0
    %v3333 = vadd.f32 0.0, %v3332
    %v3334 = vpop.f32.mrb[0].mxu0
    %3335 = vmatprep.mubr.bf16.mxu0 0
    %3336 = vmatmul.mubr.bf16.gmra.mrb[0].mxu0 %v3268
    %v3337 = vpop.f32.mrb[0].mxu0
    %v3338 = vadd.f32 0.0, %v3337
    %v3339 = vpop.f32.mrb[0].mxu0
    %v3340 = vpop.f32.mrb[0].mxu0
    %v3341 = vadd.f32 0.0, %v3340
    %v3342 = vpop.f32.mrb[0].mxu0
    %3343 = vmatprep.mubr.bf16.mxu0 0
    %3344 = vmatmul.mubr.bf16.gmra.mrb[0].mxu0 %v3271
    %v3345 = vpop.f32.mrb[0].mxu0
    %v3346 = vadd.f32 0.0, %v3345
    %v3347 = vpop.f32.mrb[0].mxu0
    %v3348 = vpop.f32.mrb[0].mxu0
    %v3349 = vadd.f32 0.0, %v3348
    %v3350 = vpop.f32.mrb[0].mxu0
    %3351 = vmatprep.mubr.bf16.mxu0 0
    %3352 = vmatmul.mubr.bf16.gmra.mrb[0].mxu0 %v3274
    %v3353 = vpop.f32.mrb[0].mxu0
    %v3354 = vadd.f32 0.0, %v3353
    %v3355 = vpop.f32.mrb[0].mxu0
    %v3356 = vpop.f32.mrb[0].mxu0
    %v3357 = vadd.f32 0.0, %v3356
    %v3358 = vpop.f32.mrb[0].mxu0
    %3359 = vdwg.mxu0
    %v3360 = vadd.f32 %v3226, %v3314
    %v3361 = vadd.f32 %v3227, %v3317
    %v3362 = vadd.f32 %v3228, %v3322
    %v3363 = vadd.f32 %v3229, %v3325
    %v3364 = vadd.f32 %v3230, %v3330
    %v3365 = vadd.f32 %v3231, %v3333
    %v3366 = vadd.f32 %v3232, %v3338
    %v3367 = vadd.f32 %v3233, %v3341
    %v3368 = vadd.f32 %v3234, %v3346
    %v3369 = vadd.f32 %v3235, %v3349
    %v3370 = vadd.f32 %v3236, %v3354
    %v3371 = vadd.f32 %v3237, %v3357
    %v3372 = vld [vmem:[#allocation2 + $0x33] sm:$0xff]
    %v3373 = vld [vmem:[#allocation2 + $0x3b] sm:$0xff]
    %v3374 = vld [vmem:[#allocation2 + $0x43] sm:$0xff]
    %v3375 = vld [vmem:[#allocation2 + $0x4b] sm:$0xff]
    %v3376 = vld [vmem:[#allocation2 + $0x53] sm:$0xff]
    %v3377 = vld [vmem:[#allocation2 + $0x5b] sm:$0xff]
    %v3378 = vld [vmem:[#allocation2 + $0x63] sm:$0xff]
    %v3379 = vld [vmem:[#allocation2 + $0x6b] sm:$0xff]
    %v3380 = vld [vmem:[#allocation2 + $0x73] sm:$0xff]
    %v3381 = vld [vmem:[#allocation2 + $0x7b] sm:$0xff]
    %v3382 = vld [vmem:[#allocation2 + $0x83] sm:$0xff]
    %v3383 = vld [vmem:[#allocation2 + $0x8b] sm:$0xff]
    %v3384 = vpack.c.bf16 %v3373, %v3372
    %v3385 = vpack.c.bf16 %v3375, %v3374
    %v3386 = vpack.c.bf16 %v3377, %v3376
    %v3387 = vpack.c.bf16 %v3379, %v3378
    %v3388 = vpack.c.bf16 %v3381, %v3380
    %v3389 = vpack.c.bf16 %v3383, %v3382
    %s3390 = scalar_lea.vmem %s3, 92
    %v3391 = vld [vmem:[%s3390] sm:$0x7]
    %v3393 = vsel %vm39, %v3384, 0
    %v3396 = vsel %vm39, %v3385, 0
    %v3399 = vsel %vm39, %v3386, 0
    %v3402 = vsel %vm39, %v3387, 0
    %v3405 = vsel %vm39, %v3388, 0
    %v3408 = vsel %vm39, %v3389, 0
    %v3411 = vsel %vm371, %v3391, 0
    %3413 = vmatprep.subr.bf16.mxu0 0
    %3414 = vmatpush1.bf16.msra.mxu0 %v3411
    %3415 = vmatprep.subr.bf16.mxu0 0
    %3416 = vmatpush1.bf16.msra.mxu0 0
    %3417 = vmatprep.subr.bf16.mxu0 0
    %3418 = vmatpush1.bf16.msra.mxu0 0
    %3419 = vmatprep.subr.bf16.mxu0 0
    %3420 = vmatpush1.bf16.msra.mxu0 0
    %3421 = vmatprep.subr.bf16.mxu0 0
    %3422 = vmatpush1.bf16.msra.mxu0 0
    %3423 = vmatprep.subr.bf16.mxu0 0
    %3424 = vmatpush1.bf16.msra.mxu0 0
    %3425 = vmatprep.subr.bf16.mxu0 0
    %3426 = vmatpush1.bf16.msra.mxu0 0
    %3427 = vmatprep.subr.bf16.mxu0 0
    %3428 = vmatpush1.bf16.msra.mxu0 0
    %3429 = vmatprep.subr.bf16.mxu0 0
    %3430 = vmatpush1.bf16.msra.mxu0 0
    %3431 = vmatprep.subr.bf16.mxu0 0
    %3432 = vmatpush1.bf16.msra.mxu0 0
    %3433 = vmatprep.subr.bf16.mxu0 0
    %3434 = vmatpush1.bf16.msra.mxu0 0
    %3435 = vmatprep.subr.bf16.mxu0 0
    %3436 = vmatpush1.bf16.msra.mxu0 0
    %3437 = vmatprep.subr.bf16.mxu0 0
    %3438 = vmatpush1.bf16.msra.mxu0 0
    %3439 = vmatprep.subr.bf16.mxu0 0
    %3440 = vmatpush1.bf16.msra.mxu0 0
    %3441 = vmatprep.subr.bf16.mxu0 0
    %3442 = vmatpush1.bf16.msra.mxu0 0
    %3443 = vmatprep.subr.bf16.mxu0 0
    %3444 = vmatpush1.bf16.msra.mxu0 0
    %3445 = vmatprep.mubr.bf16.mxu0 0
    %3446 = vmatmul.mubr.bf16.gmra.mrb[0].mxu0 %v3393
    %v3447 = vpop.f32.mrb[0].mxu0
    %v3448 = vadd.f32 0.0, %v3447
    %v3449 = vpop.f32.mrb[0].mxu0
    %v3450 = vpop.f32.mrb[0].mxu0
    %v3451 = vadd.f32 0.0, %v3450
    %v3452 = vpop.f32.mrb[0].mxu0
    %3453 = vmatprep.mubr.bf16.mxu0 0
    %3454 = vmatmul.mubr.bf16.gmra.mrb[0].mxu0 %v3396
    %v3455 = vpop.f32.mrb[0].mxu0
    %v3456 = vadd.f32 0.0, %v3455
    %v3457 = vpop.f32.mrb[0].mxu0
    %v3458 = vpop.f32.mrb[0].mxu0
    %v3459 = vadd.f32 0.0, %v3458
    %v3460 = vpop.f32.mrb[0].mxu0
    %3461 = vmatprep.mubr.bf16.mxu0 0
    %3462 = vmatmul.mubr.bf16.gmra.mrb[0].mxu0 %v3399
    %v3463 = vpop.f32.mrb[0].mxu0
    %v3464 = vadd.f32 0.0, %v3463
    %v3465 = vpop.f32.mrb[0].mxu0
    %v3466 = vpop.f32.mrb[0].mxu0
    %v3467 = vadd.f32 0.0, %v3466
    %v3468 = vpop.f32.mrb[0].mxu0
    %3469 = vmatprep.mubr.bf16.mxu0 0
    %3470 = vmatmul.mubr.bf16.gmra.mrb[0].mxu0 %v3402
    %v3471 = vpop.f32.mrb[0].mxu0
    %v3472 = vadd.f32 0.0, %v3471
    %v3473 = vpop.f32.mrb[0].mxu0
    %v3474 = vpop.f32.mrb[0].mxu0
    %v3475 = vadd.f32 0.0, %v3474
    %v3476 = vpop.f32.mrb[0].mxu0
    %3477 = vmatprep.mubr.bf16.mxu0 0
    %3478 = vmatmul.mubr.bf16.gmra.mrb[0].mxu0 %v3405
    %v3479 = vpop.f32.mrb[0].mxu0
    %v3480 = vadd.f32 0.0, %v3479
    %v3481 = vpop.f32.mrb[0].mxu0
    %v3482 = vpop.f32.mrb[0].mxu0
    %v3483 = vadd.f32 0.0, %v3482
    %v3484 = vpop.f32.mrb[0].mxu0
    %3485 = vmatprep.mubr.bf16.mxu0 0
    %3486 = vmatmul.mubr.bf16.gmra.mrb[0].mxu0 %v3408
    %v3487 = vpop.f32.mrb[0].mxu0
    %v3488 = vadd.f32 0.0, %v3487
    %v3489 = vpop.f32.mrb[0].mxu0
    %v3490 = vpop.f32.mrb[0].mxu0
    %v3491 = vadd.f32 0.0, %v3490
    %v3492 = vpop.f32.mrb[0].mxu0
    %3493 = vdwg.mxu0
    %v3494 = vadd.f32 %v3360, %v3448
    %v3495 = vadd.f32 %v3361, %v3451
    %v3496 = vadd.f32 %v3362, %v3456
    %v3497 = vadd.f32 %v3363, %v3459
    %v3498 = vadd.f32 %v3364, %v3464
    %v3499 = vadd.f32 %v3365, %v3467
    %v3500 = vadd.f32 %v3366, %v3472
    %v3501 = vadd.f32 %v3367, %v3475
    %v3502 = vadd.f32 %v3368, %v3480
    %v3503 = vadd.f32 %v3369, %v3483
    %v3504 = vadd.f32 %v3370, %v3488
    %v3505 = vadd.f32 %v3371, %v3491
    %v3506 = vld [vmem:[#allocation2 + $0x34] sm:$0xff]
    %v3507 = vld [vmem:[#allocation2 + $0x3c] sm:$0xff]
    %v3508 = vld [vmem:[#allocation2 + $0x44] sm:$0xff]
    %v3509 = vld [vmem:[#allocation2 + $0x4c] sm:$0xff]
    %v3510 = vld [vmem:[#allocation2 + $0x54] sm:$0xff]
    %v3511 = vld [vmem:[#allocation2 + $0x5c] sm:$0xff]
    %v3512 = vld [vmem:[#allocation2 + $0x64] sm:$0xff]
    %v3513 = vld [vmem:[#allocation2 + $0x6c] sm:$0xff]
    %v3514 = vld [vmem:[#allocation2 + $0x74] sm:$0xff]
    %v3515 = vld [vmem:[#allocation2 + $0x7c] sm:$0xff]
    %v3516 = vld [vmem:[#allocation2 + $0x84] sm:$0xff]
    %v3517 = vld [vmem:[#allocation2 + $0x8c] sm:$0xff]
    %v3518 = vpack.c.bf16 %v3507, %v3506
    %v3519 = vpack.c.bf16 %v3509, %v3508
    %v3520 = vpack.c.bf16 %v3511, %v3510
    %v3521 = vpack.c.bf16 %v3513, %v3512
    %v3522 = vpack.c.bf16 %v3515, %v3514
    %v3523 = vpack.c.bf16 %v3517, %v3516
    %s3524 = scalar_lea.vmem %s3, 96
    %v3525 = vld [vmem:[%s3524] sm:$0x7]
    %v3527 = vsel %vm39, %v3518, 0
    %v3530 = vsel %vm39, %v3519, 0
    %v3533 = vsel %vm39, %v3520, 0
    %v3536 = vsel %vm39, %v3521, 0
    %v3539 = vsel %vm39, %v3522, 0
    %v3542 = vsel %vm39, %v3523, 0
    %v3545 = vsel %vm371, %v3525, 0
    %3547 = vmatprep.subr.bf16.mxu0 0
    %3548 = vmatpush1.bf16.msra.mxu0 %v3545
    %3549 = vmatprep.subr.bf16.mxu0 0
    %3550 = vmatpush1.bf16.msra.mxu0 0
    %3551 = vmatprep.subr.bf16.mxu0 0
    %3552 = vmatpush1.bf16.msra.mxu0 0
    %3553 = vmatprep.subr.bf16.mxu0 0
    %3554 = vmatpush1.bf16.msra.mxu0 0
    %3555 = vmatprep.subr.bf16.mxu0 0
    %3556 = vmatpush1.bf16.msra.mxu0 0
    %3557 = vmatprep.subr.bf16.mxu0 0
    %3558 = vmatpush1.bf16.msra.mxu0 0
    %3559 = vmatprep.subr.bf16.mxu0 0
    %3560 = vmatpush1.bf16.msra.mxu0 0
    %3561 = vmatprep.subr.bf16.mxu0 0
    %3562 = vmatpush1.bf16.msra.mxu0 0
    %3563 = vmatprep.subr.bf16.mxu0 0
    %3564 = vmatpush1.bf16.msra.mxu0 0
    %3565 = vmatprep.subr.bf16.mxu0 0
    %3566 = vmatpush1.bf16.msra.mxu0 0
    %3567 = vmatprep.subr.bf16.mxu0 0
    %3568 = vmatpush1.bf16.msra.mxu0 0
    %3569 = vmatprep.subr.bf16.mxu0 0
    %3570 = vmatpush1.bf16.msra.mxu0 0
    %3571 = vmatprep.subr.bf16.mxu0 0
    %3572 = vmatpush1.bf16.msra.mxu0 0
    %3573 = vmatprep.subr.bf16.mxu0 0
    %3574 = vmatpush1.bf16.msra.mxu0 0
    %3575 = vmatprep.subr.bf16.mxu0 0
    %3576 = vmatpush1.bf16.msra.mxu0 0
    %3577 = vmatprep.subr.bf16.mxu0 0
    %3578 = vmatpush1.bf16.msra.mxu0 0
    %3579 = vmatprep.mubr.bf16.mxu0 0
    %3580 = vmatmul.mubr.bf16.gmra.mrb[0].mxu0 %v3527
    %v3581 = vpop.f32.mrb[0].mxu0
    %v3582 = vadd.f32 0.0, %v3581
    %v3583 = vpop.f32.mrb[0].mxu0
    %v3584 = vpop.f32.mrb[0].mxu0
    %v3585 = vadd.f32 0.0, %v3584
    %v3586 = vpop.f32.mrb[0].mxu0
    %3587 = vmatprep.mubr.bf16.mxu0 0
    %3588 = vmatmul.mubr.bf16.gmra.mrb[0].mxu0 %v3530
    %v3589 = vpop.f32.mrb[0].mxu0
    %v3590 = vadd.f32 0.0, %v3589
    %v3591 = vpop.f32.mrb[0].mxu0
    %v3592 = vpop.f32.mrb[0].mxu0
    %v3593 = vadd.f32 0.0, %v3592
    %v3594 = vpop.f32.mrb[0].mxu0
    %3595 = vmatprep.mubr.bf16.mxu0 0
    %3596 = vmatmul.mubr.bf16.gmra.mrb[0].mxu0 %v3533
    %v3597 = vpop.f32.mrb[0].mxu0
    %v3598 = vadd.f32 0.0, %v3597
    %v3599 = vpop.f32.mrb[0].mxu0
    %v3600 = vpop.f32.mrb[0].mxu0
    %v3601 = vadd.f32 0.0, %v3600
    %v3602 = vpop.f32.mrb[0].mxu0
    %3603 = vmatprep.mubr.bf16.mxu0 0
    %3604 = vmatmul.mubr.bf16.gmra.mrb[0].mxu0 %v3536
    %v3605 = vpop.f32.mrb[0].mxu0
    %v3606 = vadd.f32 0.0, %v3605
    %v3607 = vpop.f32.mrb[0].mxu0
    %v3608 = vpop.f32.mrb[0].mxu0
    %v3609 = vadd.f32 0.0, %v3608
    %v3610 = vpop.f32.mrb[0].mxu0
    %3611 = vmatprep.mubr.bf16.mxu0 0
    %3612 = vmatmul.mubr.bf16.gmra.mrb[0].mxu0 %v3539
    %v3613 = vpop.f32.mrb[0].mxu0
    %v3614 = vadd.f32 0.0, %v3613
    %v3615 = vpop.f32.mrb[0].mxu0
    %v3616 = vpop.f32.mrb[0].mxu0
    %v3617 = vadd.f32 0.0, %v3616
    %v3618 = vpop.f32.mrb[0].mxu0
    %3619 = vmatprep.mubr.bf16.mxu0 0
    %3620 = vmatmul.mubr.bf16.gmra.mrb[0].mxu0 %v3542
    %v3621 = vpop.f32.mrb[0].mxu0
    %v3622 = vadd.f32 0.0, %v3621
    %v3623 = vpop.f32.mrb[0].mxu0
    %v3624 = vpop.f32.mrb[0].mxu0
    %v3625 = vadd.f32 0.0, %v3624
    %v3626 = vpop.f32.mrb[0].mxu0
    %3627 = vdwg.mxu0
    %v3628 = vadd.f32 %v3494, %v3582
    %v3629 = vadd.f32 %v3495, %v3585
    %v3630 = vadd.f32 %v3496, %v3590
    %v3631 = vadd.f32 %v3497, %v3593
    %v3632 = vadd.f32 %v3498, %v3598
    %v3633 = vadd.f32 %v3499, %v3601
    %v3634 = vadd.f32 %v3500, %v3606
    %v3635 = vadd.f32 %v3501, %v3609
    %v3636 = vadd.f32 %v3502, %v3614
    %v3637 = vadd.f32 %v3503, %v3617
    %v3638 = vadd.f32 %v3504, %v3622
    %v3639 = vadd.f32 %v3505, %v3625
    %v3640 = vld [vmem:[%s4] sm:$0x1]
    %v3642 = vlaneseq
    %v3643 = vshrl.u32 %v3642, 7
    %v3644 = vsub.s32 0, %v3643
    %v3645 = vrot.slane %v3640, %v3644
    %v3647 = vadd.f32 %v3628, %v3645
    %v3648 = vadd.f32 %v3629, %v3645
    %v3649 = vadd.f32 %v3630, %v3645
    %v3650 = vadd.f32 %v3631, %v3645
    %v3651 = vadd.f32 %v3632, %v3645
    %v3652 = vadd.f32 %v3633, %v3645
    %v3653 = vadd.f32 %v3634, %v3645
    %v3654 = vadd.f32 %v3635, %v3645
    %v3655 = vadd.f32 %v3636, %v3645
    %v3656 = vadd.f32 %v3637, %v3645
    %v3657 = vadd.f32 %v3638, %v3645
    %v3658 = vadd.f32 %v3639, %v3645
    %v3659 = vmax.f32 %v3647, 0.0
    %v3660 = vmax.f32 %v3648, 0.0
    %v3661 = vmax.f32 %v3649, 0.0
    %v3662 = vmax.f32 %v3650, 0.0
    %v3663 = vmax.f32 %v3651, 0.0
    %v3664 = vmax.f32 %v3652, 0.0
    %v3665 = vmax.f32 %v3653, 0.0
    %v3666 = vmax.f32 %v3654, 0.0
    %v3667 = vmax.f32 %v3655, 0.0
    %v3668 = vmax.f32 %v3656, 0.0
    %v3669 = vmax.f32 %v3657, 0.0
    %v3670 = vmax.f32 %v3658, 0.0
    %vm3671 = vcmask 97280
    %3672 = vst.msk [vmem:[#allocation3] sm:$0xff] %vm3671, %v3659
    %3673 = vst.msk [vmem:[#allocation3 + $0x8] sm:$0xff] %vm3671, %v3660
    %3674 = vst.msk [vmem:[#allocation3 + $0x10] sm:$0xff] %vm3671, %v3661
    %3675 = vst.msk [vmem:[#allocation3 + $0x18] sm:$0xff] %vm3671, %v3662
    %3676 = vst.msk [vmem:[#allocation3 + $0x20] sm:$0xff] %vm3671, %v3663
    %3677 = vst.msk [vmem:[#allocation3 + $0x28] sm:$0xff] %vm3671, %v3664
    %3678 = vst.msk [vmem:[#allocation3 + $0x30] sm:$0xff] %vm3671, %v3665
    %3679 = vst.msk [vmem:[#allocation3 + $0x38] sm:$0xff] %vm3671, %v3666
    %3680 = vst.msk [vmem:[#allocation3 + $0x40] sm:$0xff] %vm3671, %v3667
    %3681 = vst.msk [vmem:[#allocation3 + $0x48] sm:$0xff] %vm3671, %v3668
    %3682 = vst.msk [vmem:[#allocation3 + $0x50] sm:$0xff] %vm3671, %v3669
    %3683 = vst.msk [vmem:[#allocation3 + $0x58] sm:$0xff] %vm3671, %v3670
    %v3684 = vld [vmem:[#allocation3] sm:$0x1]
    %v3685 = vld [vmem:[#allocation3 + $0x1] sm:$0x1]
    %v3686 = vmax.f32 %v3684, %v3685
    %v3687 = vld [vmem:[#allocation3 + $0xc] sm:$0x1]
    %v3688 = vld [vmem:[#allocation3 + $0xd] sm:$0x1]
    %v3689 = vmax.f32 %v3687, %v3688
    %v3690 = vmax.f32 %v3686, %v3689
    %s3691 = scalar_lea.vmem [#allocation4], %s43
    %vm3692 = vcmask 90112
    %3693 = vst.msk [vmem:[%s3691] sm:$0x1] %vm3692, %v3690
    %v3694 = vld [vmem:[#allocation3 + $0x2] sm:$0x1]
    %v3695 = vld [vmem:[#allocation3 + $0x3] sm:$0x1]
    %v3696 = vmax.f32 %v3694, %v3695
    %v3697 = vld [vmem:[#allocation3 + $0xe] sm:$0x1]
    %v3698 = vld [vmem:[#allocation3 + $0xf] sm:$0x1]
    %v3699 = vmax.f32 %v3697, %v3698
    %v3700 = vmax.f32 %v3696, %v3699
    %s3701 = sadd.s32 %s43, 8
    %s3702 = scalar_lea.vmem [#allocation4], %s3701
    %3703 = vst.msk [vmem:[%s3702] sm:$0x1] %vm3692, %v3700
    %v3704 = vld [vmem:[#allocation3 + $0x4] sm:$0x1]
    %v3705 = vld [vmem:[#allocation3 + $0x5] sm:$0x1]
    %v3706 = vmax.f32 %v3704, %v3705
    %v3707 = vld [vmem:[#allocation3 + $0x10] sm:$0x1]
    %v3708 = vld [vmem:[#allocation3 + $0x11] sm:$0x1]
    %v3709 = vmax.f32 %v3707, %v3708
    %v3710 = vmax.f32 %v3706, %v3709
    %s3711 = sadd.s32 %s43, 16
    %s3712 = scalar_lea.vmem [#allocation4], %s3711
    %3713 = vst.msk [vmem:[%s3712] sm:$0x1] %vm3692, %v3710
    %v3714 = vld [vmem:[#allocation3 + $0x6] sm:$0x1]
    %v3715 = vld [vmem:[#allocation3 + $0x7] sm:$0x1]
    %v3716 = vmax.f32 %v3714, %v3715
    %v3717 = vld [vmem:[#allocation3 + $0x12] sm:$0x1]
    %v3718 = vld [vmem:[#allocation3 + $0x13] sm:$0x1]
    %v3719 = vmax.f32 %v3717, %v3718
    %v3720 = vmax.f32 %v3716, %v3719
    %s3721 = sadd.s32 %s43, 24
    %s3722 = scalar_lea.vmem [#allocation4], %s3721
    %3723 = vst.msk [vmem:[%s3722] sm:$0x1] %vm3692, %v3720
    %v3724 = vld [vmem:[#allocation3 + $0x18] sm:$0x1]
    %v3725 = vld [vmem:[#allocation3 + $0x19] sm:$0x1]
    %v3726 = vmax.f32 %v3724, %v3725
    %v3727 = vld [vmem:[#allocation3 + $0x24] sm:$0x1]
    %v3728 = vld [vmem:[#allocation3 + $0x25] sm:$0x1]
    %v3729 = vmax.f32 %v3727, %v3728
    %v3730 = vmax.f32 %v3726, %v3729
    %s3731 = sadd.s32 %s43, 32
    %s3732 = scalar_lea.vmem [#allocation4], %s3731
    %3733 = vst.msk [vmem:[%s3732] sm:$0x1] %vm3692, %v3730
    %v3734 = vld [vmem:[#allocation3 + $0x1a] sm:$0x1]
    %v3735 = vld [vmem:[#allocation3 + $0x1b] sm:$0x1]
    %v3736 = vmax.f32 %v3734, %v3735
    %v3737 = vld [vmem:[#allocation3 + $0x26] sm:$0x1]
    %v3738 = vld [vmem:[#allocation3 + $0x27] sm:$0x1]
    %v3739 = vmax.f32 %v3737, %v3738
    %v3740 = vmax.f32 %v3736, %v3739
    %s3741 = sadd.s32 %s43, 40
    %s3742 = scalar_lea.vmem [#allocation4], %s3741
    %3743 = vst.msk [vmem:[%s3742] sm:$0x1] %vm3692, %v3740
    %v3744 = vld [vmem:[#allocation3 + $0x1c] sm:$0x1]
    %v3745 = vld [vmem:[#allocation3 + $0x1d] sm:$0x1]
    %v3746 = vmax.f32 %v3744, %v3745
    %v3747 = vld [vmem:[#allocation3 + $0x28] sm:$0x1]
    %v3748 = vld [vmem:[#allocation3 + $0x29] sm:$0x1]
    %v3749 = vmax.f32 %v3747, %v3748
    %v3750 = vmax.f32 %v3746, %v3749
    %s3751 = sadd.s32 %s43, 48
    %s3752 = scalar_lea.vmem [#allocation4], %s3751
    %3753 = vst.msk [vmem:[%s3752] sm:$0x1] %vm3692, %v3750
    %v3754 = vld [vmem:[#allocation3 + $0x1e] sm:$0x1]
    %v3755 = vld [vmem:[#allocation3 + $0x1f] sm:$0x1]
    %v3756 = vmax.f32 %v3754, %v3755
    %v3757 = vld [vmem:[#allocation3 + $0x2a] sm:$0x1]
    %v3758 = vld [vmem:[#allocation3 + $0x2b] sm:$0x1]
    %v3759 = vmax.f32 %v3757, %v3758
    %v3760 = vmax.f32 %v3756, %v3759
    %s3761 = sadd.s32 %s43, 56
    %s3762 = scalar_lea.vmem [#allocation4], %s3761
    %3763 = vst.msk [vmem:[%s3762] sm:$0x1] %vm3692, %v3760
    %v3764 = vld [vmem:[#allocation3 + $0x30] sm:$0x1]
    %v3765 = vld [vmem:[#allocation3 + $0x31] sm:$0x1]
    %v3766 = vmax.f32 %v3764, %v3765
    %v3767 = vld [vmem:[#allocation3 + $0x3c] sm:$0x1]
    %v3768 = vld [vmem:[#allocation3 + $0x3d] sm:$0x1]
    %v3769 = vmax.f32 %v3767, %v3768
    %v3770 = vmax.f32 %v3766, %v3769
    %s3771 = sadd.s32 %s43, 64
    %s3772 = scalar_lea.vmem [#allocation4], %s3771
    %3773 = vst.msk [vmem:[%s3772] sm:$0x1] %vm3692, %v3770
    %v3774 = vld [vmem:[#allocation3 + $0x32] sm:$0x1]
    %v3775 = vld [vmem:[#allocation3 + $0x33] sm:$0x1]
    %v3776 = vmax.f32 %v3774, %v3775
    %v3777 = vld [vmem:[#allocation3 + $0x3e] sm:$0x1]
    %v3778 = vld [vmem:[#allocation3 + $0x3f] sm:$0x1]
    %v3779 = vmax.f32 %v3777, %v3778
    %v3780 = vmax.f32 %v3776, %v3779
    %s3781 = sadd.s32 %s43, 72
    %s3782 = scalar_lea.vmem [#allocation4], %s3781
    %3783 = vst.msk [vmem:[%s3782] sm:$0x1] %vm3692, %v3780
    %v3784 = vld [vmem:[#allocation3 + $0x34] sm:$0x1]
    %v3785 = vld [vmem:[#allocation3 + $0x35] sm:$0x1]
    %v3786 = vmax.f32 %v3784, %v3785
    %v3787 = vld [vmem:[#allocation3 + $0x40] sm:$0x1]
    %v3788 = vld [vmem:[#allocation3 + $0x41] sm:$0x1]
    %v3789 = vmax.f32 %v3787, %v3788
    %v3790 = vmax.f32 %v3786, %v3789
    %s3791 = sadd.s32 %s43, 80
    %s3792 = scalar_lea.vmem [#allocation4], %s3791
    %3793 = vst.msk [vmem:[%s3792] sm:$0x1] %vm3692, %v3790
    %v3794 = vld [vmem:[#allocation3 + $0x36] sm:$0x1]
    %v3795 = vld [vmem:[#allocation3 + $0x37] sm:$0x1]
    %v3796 = vmax.f32 %v3794, %v3795
    %v3797 = vld [vmem:[#allocation3 + $0x42] sm:$0x1]
    %v3798 = vld [vmem:[#allocation3 + $0x43] sm:$0x1]
    %v3799 = vmax.f32 %v3797, %v3798
    %v3800 = vmax.f32 %v3796, %v3799
    %s3801 = sadd.s32 %s43, 88
    %s3802 = scalar_lea.vmem [#allocation4], %s3801
    %3803 = vst.msk [vmem:[%s3802] sm:$0x1] %vm3692, %v3800
    %v3804 = vld [vmem:[#allocation3 + $0x48] sm:$0x1]
    %v3805 = vld [vmem:[#allocation3 + $0x49] sm:$0x1]
    %v3806 = vmax.f32 %v3804, %v3805
    %v3807 = vld [vmem:[#allocation3 + $0x54] sm:$0x1]
    %v3808 = vld [vmem:[#allocation3 + $0x55] sm:$0x1]
    %v3809 = vmax.f32 %v3807, %v3808
    %v3810 = vmax.f32 %v3806, %v3809
    %s3811 = sadd.s32 %s43, 96
    %s3812 = scalar_lea.vmem [#allocation4], %s3811
    %3813 = vst.msk [vmem:[%s3812] sm:$0x1] %vm3692, %v3810
    %v3814 = vld [vmem:[#allocation3 + $0x4a] sm:$0x1]
    %v3815 = vld [vmem:[#allocation3 + $0x4b] sm:$0x1]
    %v3816 = vmax.f32 %v3814, %v3815
    %v3817 = vld [vmem:[#allocation3 + $0x56] sm:$0x1]
    %v3818 = vld [vmem:[#allocation3 + $0x57] sm:$0x1]
    %v3819 = vmax.f32 %v3817, %v3818
    %v3820 = vmax.f32 %v3816, %v3819
    %s3821 = sadd.s32 %s43, 104
    %s3822 = scalar_lea.vmem [#allocation4], %s3821
    %3823 = vst.msk [vmem:[%s3822] sm:$0x1] %vm3692, %v3820
    %v3824 = vld [vmem:[#allocation3 + $0x4c] sm:$0x1]
    %v3825 = vld [vmem:[#allocation3 + $0x4d] sm:$0x1]
    %v3826 = vmax.f32 %v3824, %v3825
    %v3827 = vld [vmem:[#allocation3 + $0x58] sm:$0x1]
    %v3828 = vld [vmem:[#allocation3 + $0x59] sm:$0x1]
    %v3829 = vmax.f32 %v3827, %v3828
    %v3830 = vmax.f32 %v3826, %v3829
    %s3831 = sadd.s32 %s43, 112
    %s3832 = scalar_lea.vmem [#allocation4], %s3831
    %3833 = vst.msk [vmem:[%s3832] sm:$0x1] %vm3692, %v3830
    %v3834 = vld [vmem:[#allocation3 + $0x4e] sm:$0x1]
    %v3835 = vld [vmem:[#allocation3 + $0x4f] sm:$0x1]
    %v3836 = vmax.f32 %v3834, %v3835
    %v3837 = vld [vmem:[#allocation3 + $0x5a] sm:$0x1]
    %v3838 = vld [vmem:[#allocation3 + $0x5b] sm:$0x1]
    %v3839 = vmax.f32 %v3837, %v3838
    %v3840 = vmax.f32 %v3836, %v3839
    %s3841 = sadd.s32 %s43, 120
    %s3842 = scalar_lea.vmem [#allocation4], %s3841
    %3843 = vst.msk [vmem:[%s3842] sm:$0x1] %vm3692, %v3840
  $region50: #{network_forward.1} parent=0 // loop_footer
    %s47 = sadd.s32 1, %s43
  $region51: #{network_forward.1} parent=0 // loop_footer_branch
    %42 = sbr.rel target = $region47
  $region52: #{network_forward.1} parent=0 // loop_exit
    _
  %v3844 = vld [vmem:[#allocation4] sm:$0xff]
  %v3845 = vpack.c.bf16 %v3844, %v3844
  %v3846 = vld [vmem:[%s5] sm:$0xf]
  %v3847 = vld [vmem:[%s5 + $0x4] sm:$0x3]
  %v3848 = vld [vmem:[#allocation4 + $0x8] sm:$0xff]
  %v3849 = vpack.c.bf16 %v3848, %v3848
  %s3850 = scalar_lea.vmem %s5, 8
  %v3851 = vld [vmem:[%s3850] sm:$0xf]
  %v3852 = vld [vmem:[%s3850 + $0x4] sm:$0x3]
  %v3855 = vunpack.c.l.b16 %v3851
  %v3856 = vunpack.c.l.b16 %v3852
  %v3857 = vpack.c.b16 %v3856, %v3855
  %vm3858 = vcmask 97280
  %v3860 = vsel %vm3858, %v3849, 0
  %vm3862 = vcmask 1045504
  %v3864 = vsel %vm3862, %v3857, 0
  %3866 = vmatprep.subr.bf16.mxu0 0
  %3867 = vmatpush1.bf16.msra.mxu0 %v3864
  %3868 = vmatprep.subr.bf16.mxu0 0
  %3869 = vmatpush1.bf16.msra.mxu0 0
  %3870 = vmatprep.subr.bf16.mxu0 0
  %3871 = vmatpush1.bf16.msra.mxu0 0
  %3872 = vmatprep.subr.bf16.mxu0 0
  %3873 = vmatpush1.bf16.msra.mxu0 0
  %3874 = vmatprep.subr.bf16.mxu0 0
  %3875 = vmatpush1.bf16.msra.mxu0 0
  %3876 = vmatprep.subr.bf16.mxu0 0
  %3877 = vmatpush1.bf16.msra.mxu0 0
  %3878 = vmatprep.subr.bf16.mxu0 0
  %3879 = vmatpush1.bf16.msra.mxu0 0
  %3880 = vmatprep.subr.bf16.mxu0 0
  %3881 = vmatpush1.bf16.msra.mxu0 0
  %3882 = vmatprep.subr.bf16.mxu0 0
  %3883 = vmatpush1.bf16.msra.mxu0 0
  %3884 = vmatprep.subr.bf16.mxu0 0
  %3885 = vmatpush1.bf16.msra.mxu0 0
  %3886 = vmatprep.subr.bf16.mxu0 0
  %3887 = vmatpush1.bf16.msra.mxu0 0
  %3888 = vmatprep.subr.bf16.mxu0 0
  %3889 = vmatpush1.bf16.msra.mxu0 0
  %3890 = vmatprep.subr.bf16.mxu0 0
  %3891 = vmatpush1.bf16.msra.mxu0 0
  %3892 = vmatprep.subr.bf16.mxu0 0
  %3893 = vmatpush1.bf16.msra.mxu0 0
  %3894 = vmatprep.subr.bf16.mxu0 0
  %3895 = vmatpush1.bf16.msra.mxu0 0
  %3896 = vmatprep.subr.bf16.mxu0 0
  %3897 = vmatpush1.bf16.msra.mxu0 0
  %3898 = vmatprep.mubr.bf16.mxu0 0
  %3899 = vmatmul.mubr.bf16.gmra.mrb[0].mxu0 %v3860
  %v3900 = vpop.f32.mrb[0].mxu0
  %v3901 = vadd.f32 0.0, %v3900
  %v3902 = vpop.f32.mrb[0].mxu0
  %v3903 = vpop.f32.mrb[0].mxu0
  %v3904 = vpop.f32.mrb[0].mxu0
  %3905 = vdwg.mxu0
  %v3908 = vunpack.c.l.b16 %v3846
  %v3909 = vunpack.c.l.b16 %v3847
  %v3910 = vpack.c.b16 %v3909, %v3908
  %v3912 = vsel %vm3858, %v3845, 0
  %v3915 = vsel %vm3862, %v3910, 0
  %3917 = vmatprep.subr.bf16.mxu0 0
  %3918 = vmatpush1.bf16.msra.mxu0 %v3915
  %3919 = vmatprep.subr.bf16.mxu0 0
  %3920 = vmatpush1.bf16.msra.mxu0 0
  %3921 = vmatprep.subr.bf16.mxu0 0
  %3922 = vmatpush1.bf16.msra.mxu0 0
  %3923 = vmatprep.subr.bf16.mxu0 0
  %3924 = vmatpush1.bf16.msra.mxu0 0
  %3925 = vmatprep.subr.bf16.mxu0 0
  %3926 = vmatpush1.bf16.msra.mxu0 0
  %3927 = vmatprep.subr.bf16.mxu0 0
  %3928 = vmatpush1.bf16.msra.mxu0 0
  %3929 = vmatprep.subr.bf16.mxu0 0
  %3930 = vmatpush1.bf16.msra.mxu0 0
  %3931 = vmatprep.subr.bf16.mxu0 0
  %3932 = vmatpush1.bf16.msra.mxu0 0
  %3933 = vmatprep.subr.bf16.mxu0 0
  %3934 = vmatpush1.bf16.msra.mxu0 0
  %3935 = vmatprep.subr.bf16.mxu0 0
  %3936 = vmatpush1.bf16.msra.mxu0 0
  %3937 = vmatprep.subr.bf16.mxu0 0
  %3938 = vmatpush1.bf16.msra.mxu0 0
  %3939 = vmatprep.subr.bf16.mxu0 0
  %3940 = vmatpush1.bf16.msra.mxu0 0
  %3941 = vmatprep.subr.bf16.mxu0 0
  %3942 = vmatpush1.bf16.msra.mxu0 0
  %3943 = vmatprep.subr.bf16.mxu0 0
  %3944 = vmatpush1.bf16.msra.mxu0 0
  %3945 = vmatprep.subr.bf16.mxu0 0
  %3946 = vmatpush1.bf16.msra.mxu0 0
  %3947 = vmatprep.subr.bf16.mxu0 0
  %3948 = vmatpush1.bf16.msra.mxu0 0
  %3949 = vmatprep.mubr.bf16.mxu0 0
  %3950 = vmatmul.mubr.bf16.gmra.mrb[0].mxu0 %v3912
  %v3951 = vpop.f32.mrb[0].mxu0
  %v3952 = vadd.f32 %v3901, %v3951
  %v3953 = vpop.f32.mrb[0].mxu0
  %v3954 = vpop.f32.mrb[0].mxu0
  %v3955 = vpop.f32.mrb[0].mxu0
  %3956 = vdwg.mxu0
  %v3957 = vld [vmem:[#allocation4 + $0x10] sm:$0xff]
  %v3958 = vpack.c.bf16 %v3957, %v3957
  %s3959 = scalar_lea.vmem %s5, 16
  %v3960 = vld [vmem:[%s3959] sm:$0xf]
  %v3961 = vld [vmem:[%s3959 + $0x4] sm:$0x3]
  %v3964 = vunpack.c.l.b16 %v3960
  %v3965 = vunpack.c.l.b16 %v3961
  %v3966 = vpack.c.b16 %v3965, %v3964
  %v3968 = vsel %vm3858, %v3958, 0
  %v3971 = vsel %vm3862, %v3966, 0
  %3973 = vmatprep.subr.bf16.mxu0 0
  %3974 = vmatpush1.bf16.msra.mxu0 %v3971
  %3975 = vmatprep.subr.bf16.mxu0 0
  %3976 = vmatpush1.bf16.msra.mxu0 0
  %3977 = vmatprep.subr.bf16.mxu0 0
  %3978 = vmatpush1.bf16.msra.mxu0 0
  %3979 = vmatprep.subr.bf16.mxu0 0
  %3980 = vmatpush1.bf16.msra.mxu0 0
  %3981 = vmatprep.subr.bf16.mxu0 0
  %3982 = vmatpush1.bf16.msra.mxu0 0
  %3983 = vmatprep.subr.bf16.mxu0 0
  %3984 = vmatpush1.bf16.msra.mxu0 0
  %3985 = vmatprep.subr.bf16.mxu0 0
  %3986 = vmatpush1.bf16.msra.mxu0 0
  %3987 = vmatprep.subr.bf16.mxu0 0
  %3988 = vmatpush1.bf16.msra.mxu0 0
  %3989 = vmatprep.subr.bf16.mxu0 0
  %3990 = vmatpush1.bf16.msra.mxu0 0
  %3991 = vmatprep.subr.bf16.mxu0 0
  %3992 = vmatpush1.bf16.msra.mxu0 0
  %3993 = vmatprep.subr.bf16.mxu0 0
  %3994 = vmatpush1.bf16.msra.mxu0 0
  %3995 = vmatprep.subr.bf16.mxu0 0
  %3996 = vmatpush1.bf16.msra.mxu0 0
  %3997 = vmatprep.subr.bf16.mxu0 0
  %3998 = vmatpush1.bf16.msra.mxu0 0
  %3999 = vmatprep.subr.bf16.mxu0 0
  %4000 = vmatpush1.bf16.msra.mxu0 0
  %4001 = vmatprep.subr.bf16.mxu0 0
  %4002 = vmatpush1.bf16.msra.mxu0 0
  %4003 = vmatprep.subr.bf16.mxu0 0
  %4004 = vmatpush1.bf16.msra.mxu0 0
  %4005 = vmatprep.mubr.bf16.mxu0 0
  %4006 = vmatmul.mubr.bf16.gmra.mrb[0].mxu0 %v3968
  %v4007 = vpop.f32.mrb[0].mxu0
  %v4008 = vadd.f32 0.0, %v4007
  %v4009 = vpop.f32.mrb[0].mxu0
  %v4010 = vpop.f32.mrb[0].mxu0
  %v4011 = vpop.f32.mrb[0].mxu0
  %4012 = vdwg.mxu0
  %v4013 = vadd.f32 %v3952, %v4008
  %v4014 = vld [vmem:[#allocation4 + $0x18] sm:$0xff]
  %v4015 = vpack.c.bf16 %v4014, %v4014
  %s4016 = scalar_lea.vmem %s5, 24
  %v4017 = vld [vmem:[%s4016] sm:$0xf]
  %v4018 = vld [vmem:[%s4016 + $0x4] sm:$0x3]
  %v4021 = vunpack.c.l.b16 %v4017
  %v4022 = vunpack.c.l.b16 %v4018
  %v4023 = vpack.c.b16 %v4022, %v4021
  %v4025 = vsel %vm3858, %v4015, 0
  %v4028 = vsel %vm3862, %v4023, 0
  %4030 = vmatprep.subr.bf16.mxu0 0
  %4031 = vmatpush1.bf16.msra.mxu0 %v4028
  %4032 = vmatprep.subr.bf16.mxu0 0
  %4033 = vmatpush1.bf16.msra.mxu0 0
  %4034 = vmatprep.subr.bf16.mxu0 0
  %4035 = vmatpush1.bf16.msra.mxu0 0
  %4036 = vmatprep.subr.bf16.mxu0 0
  %4037 = vmatpush1.bf16.msra.mxu0 0
  %4038 = vmatprep.subr.bf16.mxu0 0
  %4039 = vmatpush1.bf16.msra.mxu0 0
  %4040 = vmatprep.subr.bf16.mxu0 0
  %4041 = vmatpush1.bf16.msra.mxu0 0
  %4042 = vmatprep.subr.bf16.mxu0 0
  %4043 = vmatpush1.bf16.msra.mxu0 0
  %4044 = vmatprep.subr.bf16.mxu0 0
  %4045 = vmatpush1.bf16.msra.mxu0 0
  %4046 = vmatprep.subr.bf16.mxu0 0
  %4047 = vmatpush1.bf16.msra.mxu0 0
  %4048 = vmatprep.subr.bf16.mxu0 0
  %4049 = vmatpush1.bf16.msra.mxu0 0
  %4050 = vmatprep.subr.bf16.mxu0 0
  %4051 = vmatpush1.bf16.msra.mxu0 0
  %4052 = vmatprep.subr.bf16.mxu0 0
  %4053 = vmatpush1.bf16.msra.mxu0 0
  %4054 = vmatprep.subr.bf16.mxu0 0
  %4055 = vmatpush1.bf16.msra.mxu0 0
  %4056 = vmatprep.subr.bf16.mxu0 0
  %4057 = vmatpush1.bf16.msra.mxu0 0
  %4058 = vmatprep.subr.bf16.mxu0 0
  %4059 = vmatpush1.bf16.msra.mxu0 0
  %4060 = vmatprep.subr.bf16.mxu0 0
  %4061 = vmatpush1.bf16.msra.mxu0 0
  %4062 = vmatprep.mubr.bf16.mxu0 0
  %4063 = vmatmul.mubr.bf16.gmra.mrb[0].mxu0 %v4025
  %v4064 = vpop.f32.mrb[0].mxu0
  %v4065 = vadd.f32 0.0, %v4064
  %v4066 = vpop.f32.mrb[0].mxu0
  %v4067 = vpop.f32.mrb[0].mxu0
  %v4068 = vpop.f32.mrb[0].mxu0
  %4069 = vdwg.mxu0
  %v4070 = vadd.f32 %v4013, %v4065
  %v4071 = vld [vmem:[#allocation4 + $0x20] sm:$0xff]
  %v4072 = vpack.c.bf16 %v4071, %v4071
  %s4073 = scalar_lea.vmem %s5, 32
  %v4074 = vld [vmem:[%s4073] sm:$0xf]
  %v4075 = vld [vmem:[%s4073 + $0x4] sm:$0x3]
  %v4078 = vunpack.c.l.b16 %v4074
  %v4079 = vunpack.c.l.b16 %v4075
  %v4080 = vpack.c.b16 %v4079, %v4078
  %v4082 = vsel %vm3858, %v4072, 0
  %v4085 = vsel %vm3862, %v4080, 0
  %4087 = vmatprep.subr.bf16.mxu0 0
  %4088 = vmatpush1.bf16.msra.mxu0 %v4085
  %4089 = vmatprep.subr.bf16.mxu0 0
  %4090 = vmatpush1.bf16.msra.mxu0 0
  %4091 = vmatprep.subr.bf16.mxu0 0
  %4092 = vmatpush1.bf16.msra.mxu0 0
  %4093 = vmatprep.subr.bf16.mxu0 0
  %4094 = vmatpush1.bf16.msra.mxu0 0
  %4095 = vmatprep.subr.bf16.mxu0 0
  %4096 = vmatpush1.bf16.msra.mxu0 0
  %4097 = vmatprep.subr.bf16.mxu0 0
  %4098 = vmatpush1.bf16.msra.mxu0 0
  %4099 = vmatprep.subr.bf16.mxu0 0
  %4100 = vmatpush1.bf16.msra.mxu0 0
  %4101 = vmatprep.subr.bf16.mxu0 0
  %4102 = vmatpush1.bf16.msra.mxu0 0
  %4103 = vmatprep.subr.bf16.mxu0 0
  %4104 = vmatpush1.bf16.msra.mxu0 0
  %4105 = vmatprep.subr.bf16.mxu0 0
  %4106 = vmatpush1.bf16.msra.mxu0 0
  %4107 = vmatprep.subr.bf16.mxu0 0
  %4108 = vmatpush1.bf16.msra.mxu0 0
  %4109 = vmatprep.subr.bf16.mxu0 0
  %4110 = vmatpush1.bf16.msra.mxu0 0
  %4111 = vmatprep.subr.bf16.mxu0 0
  %4112 = vmatpush1.bf16.msra.mxu0 0
  %4113 = vmatprep.subr.bf16.mxu0 0
  %4114 = vmatpush1.bf16.msra.mxu0 0
  %4115 = vmatprep.subr.bf16.mxu0 0
  %4116 = vmatpush1.bf16.msra.mxu0 0
  %4117 = vmatprep.subr.bf16.mxu0 0
  %4118 = vmatpush1.bf16.msra.mxu0 0
  %4119 = vmatprep.mubr.bf16.mxu0 0
  %4120 = vmatmul.mubr.bf16.gmra.mrb[0].mxu0 %v4082
  %v4121 = vpop.f32.mrb[0].mxu0
  %v4122 = vadd.f32 0.0, %v4121
  %v4123 = vpop.f32.mrb[0].mxu0
  %v4124 = vpop.f32.mrb[0].mxu0
  %v4125 = vpop.f32.mrb[0].mxu0
  %4126 = vdwg.mxu0
  %v4127 = vadd.f32 %v4070, %v4122
  %v4128 = vld [vmem:[#allocation4 + $0x28] sm:$0xff]
  %v4129 = vpack.c.bf16 %v4128, %v4128
  %s4130 = scalar_lea.vmem %s5, 40
  %v4131 = vld [vmem:[%s4130] sm:$0xf]
  %v4132 = vld [vmem:[%s4130 + $0x4] sm:$0x3]
  %v4135 = vunpack.c.l.b16 %v4131
  %v4136 = vunpack.c.l.b16 %v4132
  %v4137 = vpack.c.b16 %v4136, %v4135
  %v4139 = vsel %vm3858, %v4129, 0
  %v4142 = vsel %vm3862, %v4137, 0
  %4144 = vmatprep.subr.bf16.mxu0 0
  %4145 = vmatpush1.bf16.msra.mxu0 %v4142
  %4146 = vmatprep.subr.bf16.mxu0 0
  %4147 = vmatpush1.bf16.msra.mxu0 0
  %4148 = vmatprep.subr.bf16.mxu0 0
  %4149 = vmatpush1.bf16.msra.mxu0 0
  %4150 = vmatprep.subr.bf16.mxu0 0
  %4151 = vmatpush1.bf16.msra.mxu0 0
  %4152 = vmatprep.subr.bf16.mxu0 0
  %4153 = vmatpush1.bf16.msra.mxu0 0
  %4154 = vmatprep.subr.bf16.mxu0 0
  %4155 = vmatpush1.bf16.msra.mxu0 0
  %4156 = vmatprep.subr.bf16.mxu0 0
  %4157 = vmatpush1.bf16.msra.mxu0 0
  %4158 = vmatprep.subr.bf16.mxu0 0
  %4159 = vmatpush1.bf16.msra.mxu0 0
  %4160 = vmatprep.subr.bf16.mxu0 0
  %4161 = vmatpush1.bf16.msra.mxu0 0
  %4162 = vmatprep.subr.bf16.mxu0 0
  %4163 = vmatpush1.bf16.msra.mxu0 0
  %4164 = vmatprep.subr.bf16.mxu0 0
  %4165 = vmatpush1.bf16.msra.mxu0 0
  %4166 = vmatprep.subr.bf16.mxu0 0
  %4167 = vmatpush1.bf16.msra.mxu0 0
  %4168 = vmatprep.subr.bf16.mxu0 0
  %4169 = vmatpush1.bf16.msra.mxu0 0
  %4170 = vmatprep.subr.bf16.mxu0 0
  %4171 = vmatpush1.bf16.msra.mxu0 0
  %4172 = vmatprep.subr.bf16.mxu0 0
  %4173 = vmatpush1.bf16.msra.mxu0 0
  %4174 = vmatprep.subr.bf16.mxu0 0
  %4175 = vmatpush1.bf16.msra.mxu0 0
  %4176 = vmatprep.mubr.bf16.mxu0 0
  %4177 = vmatmul.mubr.bf16.gmra.mrb[0].mxu0 %v4139
  %v4178 = vpop.f32.mrb[0].mxu0
  %v4179 = vadd.f32 0.0, %v4178
  %v4180 = vpop.f32.mrb[0].mxu0
  %v4181 = vpop.f32.mrb[0].mxu0
  %v4182 = vpop.f32.mrb[0].mxu0
  %4183 = vdwg.mxu0
  %v4184 = vadd.f32 %v4127, %v4179
  %v4185 = vld [vmem:[#allocation4 + $0x30] sm:$0xff]
  %v4186 = vpack.c.bf16 %v4185, %v4185
  %s4187 = scalar_lea.vmem %s5, 48
  %v4188 = vld [vmem:[%s4187] sm:$0xf]
  %v4189 = vld [vmem:[%s4187 + $0x4] sm:$0x3]
  %v4192 = vunpack.c.l.b16 %v4188
  %v4193 = vunpack.c.l.b16 %v4189
  %v4194 = vpack.c.b16 %v4193, %v4192
  %v4196 = vsel %vm3858, %v4186, 0
  %v4199 = vsel %vm3862, %v4194, 0
  %4201 = vmatprep.subr.bf16.mxu0 0
  %4202 = vmatpush1.bf16.msra.mxu0 %v4199
  %4203 = vmatprep.subr.bf16.mxu0 0
  %4204 = vmatpush1.bf16.msra.mxu0 0
  %4205 = vmatprep.subr.bf16.mxu0 0
  %4206 = vmatpush1.bf16.msra.mxu0 0
  %4207 = vmatprep.subr.bf16.mxu0 0
  %4208 = vmatpush1.bf16.msra.mxu0 0
  %4209 = vmatprep.subr.bf16.mxu0 0
  %4210 = vmatpush1.bf16.msra.mxu0 0
  %4211 = vmatprep.subr.bf16.mxu0 0
  %4212 = vmatpush1.bf16.msra.mxu0 0
  %4213 = vmatprep.subr.bf16.mxu0 0
  %4214 = vmatpush1.bf16.msra.mxu0 0
  %4215 = vmatprep.subr.bf16.mxu0 0
  %4216 = vmatpush1.bf16.msra.mxu0 0
  %4217 = vmatprep.subr.bf16.mxu0 0
  %4218 = vmatpush1.bf16.msra.mxu0 0
  %4219 = vmatprep.subr.bf16.mxu0 0
  %4220 = vmatpush1.bf16.msra.mxu0 0
  %4221 = vmatprep.subr.bf16.mxu0 0
  %4222 = vmatpush1.bf16.msra.mxu0 0
  %4223 = vmatprep.subr.bf16.mxu0 0
  %4224 = vmatpush1.bf16.msra.mxu0 0
  %4225 = vmatprep.subr.bf16.mxu0 0
  %4226 = vmatpush1.bf16.msra.mxu0 0
  %4227 = vmatprep.subr.bf16.mxu0 0
  %4228 = vmatpush1.bf16.msra.mxu0 0
  %4229 = vmatprep.subr.bf16.mxu0 0
  %4230 = vmatpush1.bf16.msra.mxu0 0
  %4231 = vmatprep.subr.bf16.mxu0 0
  %4232 = vmatpush1.bf16.msra.mxu0 0
  %4233 = vmatprep.mubr.bf16.mxu0 0
  %4234 = vmatmul.mubr.bf16.gmra.mrb[0].mxu0 %v4196
  %v4235 = vpop.f32.mrb[0].mxu0
  %v4236 = vadd.f32 0.0, %v4235
  %v4237 = vpop.f32.mrb[0].mxu0
  %v4238 = vpop.f32.mrb[0].mxu0
  %v4239 = vpop.f32.mrb[0].mxu0
  %4240 = vdwg.mxu0
  %v4241 = vadd.f32 %v4184, %v4236
  %v4242 = vld [vmem:[#allocation4 + $0x38] sm:$0xff]
  %v4243 = vpack.c.bf16 %v4242, %v4242
  %s4244 = scalar_lea.vmem %s5, 56
  %v4245 = vld [vmem:[%s4244] sm:$0xf]
  %v4246 = vld [vmem:[%s4244 + $0x4] sm:$0x3]
  %v4249 = vunpack.c.l.b16 %v4245
  %v4250 = vunpack.c.l.b16 %v4246
  %v4251 = vpack.c.b16 %v4250, %v4249
  %v4253 = vsel %vm3858, %v4243, 0
  %v4256 = vsel %vm3862, %v4251, 0
  %4258 = vmatprep.subr.bf16.mxu0 0
  %4259 = vmatpush1.bf16.msra.mxu0 %v4256
  %4260 = vmatprep.subr.bf16.mxu0 0
  %4261 = vmatpush1.bf16.msra.mxu0 0
  %4262 = vmatprep.subr.bf16.mxu0 0
  %4263 = vmatpush1.bf16.msra.mxu0 0
  %4264 = vmatprep.subr.bf16.mxu0 0
  %4265 = vmatpush1.bf16.msra.mxu0 0
  %4266 = vmatprep.subr.bf16.mxu0 0
  %4267 = vmatpush1.bf16.msra.mxu0 0
  %4268 = vmatprep.subr.bf16.mxu0 0
  %4269 = vmatpush1.bf16.msra.mxu0 0
  %4270 = vmatprep.subr.bf16.mxu0 0
  %4271 = vmatpush1.bf16.msra.mxu0 0
  %4272 = vmatprep.subr.bf16.mxu0 0
  %4273 = vmatpush1.bf16.msra.mxu0 0
  %4274 = vmatprep.subr.bf16.mxu0 0
  %4275 = vmatpush1.bf16.msra.mxu0 0
  %4276 = vmatprep.subr.bf16.mxu0 0
  %4277 = vmatpush1.bf16.msra.mxu0 0
  %4278 = vmatprep.subr.bf16.mxu0 0
  %4279 = vmatpush1.bf16.msra.mxu0 0
  %4280 = vmatprep.subr.bf16.mxu0 0
  %4281 = vmatpush1.bf16.msra.mxu0 0
  %4282 = vmatprep.subr.bf16.mxu0 0
  %4283 = vmatpush1.bf16.msra.mxu0 0
  %4284 = vmatprep.subr.bf16.mxu0 0
  %4285 = vmatpush1.bf16.msra.mxu0 0
  %4286 = vmatprep.subr.bf16.mxu0 0
  %4287 = vmatpush1.bf16.msra.mxu0 0
  %4288 = vmatprep.subr.bf16.mxu0 0
  %4289 = vmatpush1.bf16.msra.mxu0 0
  %4290 = vmatprep.mubr.bf16.mxu0 0
  %4291 = vmatmul.mubr.bf16.gmra.mrb[0].mxu0 %v4253
  %v4292 = vpop.f32.mrb[0].mxu0
  %v4293 = vadd.f32 0.0, %v4292
  %v4294 = vpop.f32.mrb[0].mxu0
  %v4295 = vpop.f32.mrb[0].mxu0
  %v4296 = vpop.f32.mrb[0].mxu0
  %4297 = vdwg.mxu0
  %v4298 = vadd.f32 %v4241, %v4293
  %v4299 = vld [vmem:[#allocation4 + $0x40] sm:$0xff]
  %v4300 = vpack.c.bf16 %v4299, %v4299
  %s4301 = scalar_lea.vmem %s5, 64
  %v4302 = vld [vmem:[%s4301] sm:$0xf]
  %v4303 = vld [vmem:[%s4301 + $0x4] sm:$0x3]
  %v4306 = vunpack.c.l.b16 %v4302
  %v4307 = vunpack.c.l.b16 %v4303
  %v4308 = vpack.c.b16 %v4307, %v4306
  %v4310 = vsel %vm3858, %v4300, 0
  %v4313 = vsel %vm3862, %v4308, 0
  %4315 = vmatprep.subr.bf16.mxu0 0
  %4316 = vmatpush1.bf16.msra.mxu0 %v4313
  %4317 = vmatprep.subr.bf16.mxu0 0
  %4318 = vmatpush1.bf16.msra.mxu0 0
  %4319 = vmatprep.subr.bf16.mxu0 0
  %4320 = vmatpush1.bf16.msra.mxu0 0
  %4321 = vmatprep.subr.bf16.mxu0 0
  %4322 = vmatpush1.bf16.msra.mxu0 0
  %4323 = vmatprep.subr.bf16.mxu0 0
  %4324 = vmatpush1.bf16.msra.mxu0 0
  %4325 = vmatprep.subr.bf16.mxu0 0
  %4326 = vmatpush1.bf16.msra.mxu0 0
  %4327 = vmatprep.subr.bf16.mxu0 0
  %4328 = vmatpush1.bf16.msra.mxu0 0
  %4329 = vmatprep.subr.bf16.mxu0 0
  %4330 = vmatpush1.bf16.msra.mxu0 0
  %4331 = vmatprep.subr.bf16.mxu0 0
  %4332 = vmatpush1.bf16.msra.mxu0 0
  %4333 = vmatprep.subr.bf16.mxu0 0
  %4334 = vmatpush1.bf16.msra.mxu0 0
  %4335 = vmatprep.subr.bf16.mxu0 0
  %4336 = vmatpush1.bf16.msra.mxu0 0
  %4337 = vmatprep.subr.bf16.mxu0 0
  %4338 = vmatpush1.bf16.msra.mxu0 0
  %4339 = vmatprep.subr.bf16.mxu0 0
  %4340 = vmatpush1.bf16.msra.mxu0 0
  %4341 = vmatprep.subr.bf16.mxu0 0
  %4342 = vmatpush1.bf16.msra.mxu0 0
  %4343 = vmatprep.subr.bf16.mxu0 0
  %4344 = vmatpush1.bf16.msra.mxu0 0
  %4345 = vmatprep.subr.bf16.mxu0 0
  %4346 = vmatpush1.bf16.msra.mxu0 0
  %4347 = vmatprep.mubr.bf16.mxu0 0
  %4348 = vmatmul.mubr.bf16.gmra.mrb[0].mxu0 %v4310
  %v4349 = vpop.f32.mrb[0].mxu0
  %v4350 = vadd.f32 0.0, %v4349
  %v4351 = vpop.f32.mrb[0].mxu0
  %v4352 = vpop.f32.mrb[0].mxu0
  %v4353 = vpop.f32.mrb[0].mxu0
  %4354 = vdwg.mxu0
  %v4355 = vadd.f32 %v4298, %v4350
  %v4356 = vld [vmem:[#allocation4 + $0x48] sm:$0xff]
  %v4357 = vpack.c.bf16 %v4356, %v4356
  %s4358 = scalar_lea.vmem %s5, 72
  %v4359 = vld [vmem:[%s4358] sm:$0xf]
  %v4360 = vld [vmem:[%s4358 + $0x4] sm:$0x3]
  %v4363 = vunpack.c.l.b16 %v4359
  %v4364 = vunpack.c.l.b16 %v4360
  %v4365 = vpack.c.b16 %v4364, %v4363
  %v4367 = vsel %vm3858, %v4357, 0
  %v4370 = vsel %vm3862, %v4365, 0
  %4372 = vmatprep.subr.bf16.mxu0 0
  %4373 = vmatpush1.bf16.msra.mxu0 %v4370
  %4374 = vmatprep.subr.bf16.mxu0 0
  %4375 = vmatpush1.bf16.msra.mxu0 0
  %4376 = vmatprep.subr.bf16.mxu0 0
  %4377 = vmatpush1.bf16.msra.mxu0 0
  %4378 = vmatprep.subr.bf16.mxu0 0
  %4379 = vmatpush1.bf16.msra.mxu0 0
  %4380 = vmatprep.subr.bf16.mxu0 0
  %4381 = vmatpush1.bf16.msra.mxu0 0
  %4382 = vmatprep.subr.bf16.mxu0 0
  %4383 = vmatpush1.bf16.msra.mxu0 0
  %4384 = vmatprep.subr.bf16.mxu0 0
  %4385 = vmatpush1.bf16.msra.mxu0 0
  %4386 = vmatprep.subr.bf16.mxu0 0
  %4387 = vmatpush1.bf16.msra.mxu0 0
  %4388 = vmatprep.subr.bf16.mxu0 0
  %4389 = vmatpush1.bf16.msra.mxu0 0
  %4390 = vmatprep.subr.bf16.mxu0 0
  %4391 = vmatpush1.bf16.msra.mxu0 0
  %4392 = vmatprep.subr.bf16.mxu0 0
  %4393 = vmatpush1.bf16.msra.mxu0 0
  %4394 = vmatprep.subr.bf16.mxu0 0
  %4395 = vmatpush1.bf16.msra.mxu0 0
  %4396 = vmatprep.subr.bf16.mxu0 0
  %4397 = vmatpush1.bf16.msra.mxu0 0
  %4398 = vmatprep.subr.bf16.mxu0 0
  %4399 = vmatpush1.bf16.msra.mxu0 0
  %4400 = vmatprep.subr.bf16.mxu0 0
  %4401 = vmatpush1.bf16.msra.mxu0 0
  %4402 = vmatprep.subr.bf16.mxu0 0
  %4403 = vmatpush1.bf16.msra.mxu0 0
  %4404 = vmatprep.mubr.bf16.mxu0 0
  %4405 = vmatmul.mubr.bf16.gmra.mrb[0].mxu0 %v4367
  %v4406 = vpop.f32.mrb[0].mxu0
  %v4407 = vadd.f32 0.0, %v4406
  %v4408 = vpop.f32.mrb[0].mxu0
  %v4409 = vpop.f32.mrb[0].mxu0
  %v4410 = vpop.f32.mrb[0].mxu0
  %4411 = vdwg.mxu0
  %v4412 = vadd.f32 %v4355, %v4407
  %v4413 = vld [vmem:[#allocation4 + $0x50] sm:$0xff]
  %v4414 = vpack.c.bf16 %v4413, %v4413
  %s4415 = scalar_lea.vmem %s5, 80
  %v4416 = vld [vmem:[%s4415] sm:$0xf]
  %v4417 = vld [vmem:[%s4415 + $0x4] sm:$0x3]
  %v4420 = vunpack.c.l.b16 %v4416
  %v4421 = vunpack.c.l.b16 %v4417
  %v4422 = vpack.c.b16 %v4421, %v4420
  %v4424 = vsel %vm3858, %v4414, 0
  %v4427 = vsel %vm3862, %v4422, 0
  %4429 = vmatprep.subr.bf16.mxu0 0
  %4430 = vmatpush1.bf16.msra.mxu0 %v4427
  %4431 = vmatprep.subr.bf16.mxu0 0
  %4432 = vmatpush1.bf16.msra.mxu0 0
  %4433 = vmatprep.subr.bf16.mxu0 0
  %4434 = vmatpush1.bf16.msra.mxu0 0
  %4435 = vmatprep.subr.bf16.mxu0 0
  %4436 = vmatpush1.bf16.msra.mxu0 0
  %4437 = vmatprep.subr.bf16.mxu0 0
  %4438 = vmatpush1.bf16.msra.mxu0 0
  %4439 = vmatprep.subr.bf16.mxu0 0
  %4440 = vmatpush1.bf16.msra.mxu0 0
  %4441 = vmatprep.subr.bf16.mxu0 0
  %4442 = vmatpush1.bf16.msra.mxu0 0
  %4443 = vmatprep.subr.bf16.mxu0 0
  %4444 = vmatpush1.bf16.msra.mxu0 0
  %4445 = vmatprep.subr.bf16.mxu0 0
  %4446 = vmatpush1.bf16.msra.mxu0 0
  %4447 = vmatprep.subr.bf16.mxu0 0
  %4448 = vmatpush1.bf16.msra.mxu0 0
  %4449 = vmatprep.subr.bf16.mxu0 0
  %4450 = vmatpush1.bf16.msra.mxu0 0
  %4451 = vmatprep.subr.bf16.mxu0 0
  %4452 = vmatpush1.bf16.msra.mxu0 0
  %4453 = vmatprep.subr.bf16.mxu0 0
  %4454 = vmatpush1.bf16.msra.mxu0 0
  %4455 = vmatprep.subr.bf16.mxu0 0
  %4456 = vmatpush1.bf16.msra.mxu0 0
  %4457 = vmatprep.subr.bf16.mxu0 0
  %4458 = vmatpush1.bf16.msra.mxu0 0
  %4459 = vmatprep.subr.bf16.mxu0 0
  %4460 = vmatpush1.bf16.msra.mxu0 0
  %4461 = vmatprep.mubr.bf16.mxu0 0
  %4462 = vmatmul.mubr.bf16.gmra.mrb[0].mxu0 %v4424
  %v4463 = vpop.f32.mrb[0].mxu0
  %v4464 = vadd.f32 0.0, %v4463
  %v4465 = vpop.f32.mrb[0].mxu0
  %v4466 = vpop.f32.mrb[0].mxu0
  %v4467 = vpop.f32.mrb[0].mxu0
  %4468 = vdwg.mxu0
  %v4469 = vadd.f32 %v4412, %v4464
  %v4470 = vld [vmem:[#allocation4 + $0x58] sm:$0xff]
  %v4471 = vpack.c.bf16 %v4470, %v4470
  %s4472 = scalar_lea.vmem %s5, 88
  %v4473 = vld [vmem:[%s4472] sm:$0xf]
  %v4474 = vld [vmem:[%s4472 + $0x4] sm:$0x3]
  %v4477 = vunpack.c.l.b16 %v4473
  %v4478 = vunpack.c.l.b16 %v4474
  %v4479 = vpack.c.b16 %v4478, %v4477
  %v4481 = vsel %vm3858, %v4471, 0
  %v4484 = vsel %vm3862, %v4479, 0
  %4486 = vmatprep.subr.bf16.mxu0 0
  %4487 = vmatpush1.bf16.msra.mxu0 %v4484
  %4488 = vmatprep.subr.bf16.mxu0 0
  %4489 = vmatpush1.bf16.msra.mxu0 0
  %4490 = vmatprep.subr.bf16.mxu0 0
  %4491 = vmatpush1.bf16.msra.mxu0 0
  %4492 = vmatprep.subr.bf16.mxu0 0
  %4493 = vmatpush1.bf16.msra.mxu0 0
  %4494 = vmatprep.subr.bf16.mxu0 0
  %4495 = vmatpush1.bf16.msra.mxu0 0
  %4496 = vmatprep.subr.bf16.mxu0 0
  %4497 = vmatpush1.bf16.msra.mxu0 0
  %4498 = vmatprep.subr.bf16.mxu0 0
  %4499 = vmatpush1.bf16.msra.mxu0 0
  %4500 = vmatprep.subr.bf16.mxu0 0
  %4501 = vmatpush1.bf16.msra.mxu0 0
  %4502 = vmatprep.subr.bf16.mxu0 0
  %4503 = vmatpush1.bf16.msra.mxu0 0
  %4504 = vmatprep.subr.bf16.mxu0 0
  %4505 = vmatpush1.bf16.msra.mxu0 0
  %4506 = vmatprep.subr.bf16.mxu0 0
  %4507 = vmatpush1.bf16.msra.mxu0 0
  %4508 = vmatprep.subr.bf16.mxu0 0
  %4509 = vmatpush1.bf16.msra.mxu0 0
  %4510 = vmatprep.subr.bf16.mxu0 0
  %4511 = vmatpush1.bf16.msra.mxu0 0
  %4512 = vmatprep.subr.bf16.mxu0 0
  %4513 = vmatpush1.bf16.msra.mxu0 0
  %4514 = vmatprep.subr.bf16.mxu0 0
  %4515 = vmatpush1.bf16.msra.mxu0 0
  %4516 = vmatprep.subr.bf16.mxu0 0
  %4517 = vmatpush1.bf16.msra.mxu0 0
  %4518 = vmatprep.mubr.bf16.mxu0 0
  %4519 = vmatmul.mubr.bf16.gmra.mrb[0].mxu0 %v4481
  %v4520 = vpop.f32.mrb[0].mxu0
  %v4521 = vadd.f32 0.0, %v4520
  %v4522 = vpop.f32.mrb[0].mxu0
  %v4523 = vpop.f32.mrb[0].mxu0
  %v4524 = vpop.f32.mrb[0].mxu0
  %4525 = vdwg.mxu0
  %v4526 = vadd.f32 %v4469, %v4521
  %v4527 = vld [vmem:[#allocation4 + $0x60] sm:$0xff]
  %v4528 = vpack.c.bf16 %v4527, %v4527
  %s4529 = scalar_lea.vmem %s5, 96
  %v4530 = vld [vmem:[%s4529] sm:$0xf]
  %v4531 = vld [vmem:[%s4529 + $0x4] sm:$0x3]
  %v4534 = vunpack.c.l.b16 %v4530
  %v4535 = vunpack.c.l.b16 %v4531
  %v4536 = vpack.c.b16 %v4535, %v4534
  %v4538 = vsel %vm3858, %v4528, 0
  %v4541 = vsel %vm3862, %v4536, 0
  %4543 = vmatprep.subr.bf16.mxu0 0
  %4544 = vmatpush1.bf16.msra.mxu0 %v4541
  %4545 = vmatprep.subr.bf16.mxu0 0
  %4546 = vmatpush1.bf16.msra.mxu0 0
  %4547 = vmatprep.subr.bf16.mxu0 0
  %4548 = vmatpush1.bf16.msra.mxu0 0
  %4549 = vmatprep.subr.bf16.mxu0 0
  %4550 = vmatpush1.bf16.msra.mxu0 0
  %4551 = vmatprep.subr.bf16.mxu0 0
  %4552 = vmatpush1.bf16.msra.mxu0 0
  %4553 = vmatprep.subr.bf16.mxu0 0
  %4554 = vmatpush1.bf16.msra.mxu0 0
  %4555 = vmatprep.subr.bf16.mxu0 0
  %4556 = vmatpush1.bf16.msra.mxu0 0
  %4557 = vmatprep.subr.bf16.mxu0 0
  %4558 = vmatpush1.bf16.msra.mxu0 0
  %4559 = vmatprep.subr.bf16.mxu0 0
  %4560 = vmatpush1.bf16.msra.mxu0 0
  %4561 = vmatprep.subr.bf16.mxu0 0
  %4562 = vmatpush1.bf16.msra.mxu0 0
  %4563 = vmatprep.subr.bf16.mxu0 0
  %4564 = vmatpush1.bf16.msra.mxu0 0
  %4565 = vmatprep.subr.bf16.mxu0 0
  %4566 = vmatpush1.bf16.msra.mxu0 0
  %4567 = vmatprep.subr.bf16.mxu0 0
  %4568 = vmatpush1.bf16.msra.mxu0 0
  %4569 = vmatprep.subr.bf16.mxu0 0
  %4570 = vmatpush1.bf16.msra.mxu0 0
  %4571 = vmatprep.subr.bf16.mxu0 0
  %4572 = vmatpush1.bf16.msra.mxu0 0
  %4573 = vmatprep.subr.bf16.mxu0 0
  %4574 = vmatpush1.bf16.msra.mxu0 0
  %4575 = vmatprep.mubr.bf16.mxu0 0
  %4576 = vmatmul.mubr.bf16.gmra.mrb[0].mxu0 %v4538
  %v4577 = vpop.f32.mrb[0].mxu0
  %v4578 = vadd.f32 0.0, %v4577
  %v4579 = vpop.f32.mrb[0].mxu0
  %v4580 = vpop.f32.mrb[0].mxu0
  %v4581 = vpop.f32.mrb[0].mxu0
  %4582 = vdwg.mxu0
  %v4583 = vadd.f32 %v4526, %v4578
  %v4584 = vld [vmem:[#allocation4 + $0x68] sm:$0xff]
  %v4585 = vpack.c.bf16 %v4584, %v4584
  %s4586 = scalar_lea.vmem %s5, 104
  %v4587 = vld [vmem:[%s4586] sm:$0xf]
  %v4588 = vld [vmem:[%s4586 + $0x4] sm:$0x3]
  %v4591 = vunpack.c.l.b16 %v4587
  %v4592 = vunpack.c.l.b16 %v4588
  %v4593 = vpack.c.b16 %v4592, %v4591
  %v4595 = vsel %vm3858, %v4585, 0
  %v4598 = vsel %vm3862, %v4593, 0
  %4600 = vmatprep.subr.bf16.mxu0 0
  %4601 = vmatpush1.bf16.msra.mxu0 %v4598
  %4602 = vmatprep.subr.bf16.mxu0 0
  %4603 = vmatpush1.bf16.msra.mxu0 0
  %4604 = vmatprep.subr.bf16.mxu0 0
  %4605 = vmatpush1.bf16.msra.mxu0 0
  %4606 = vmatprep.subr.bf16.mxu0 0
  %4607 = vmatpush1.bf16.msra.mxu0 0
  %4608 = vmatprep.subr.bf16.mxu0 0
  %4609 = vmatpush1.bf16.msra.mxu0 0
  %4610 = vmatprep.subr.bf16.mxu0 0
  %4611 = vmatpush1.bf16.msra.mxu0 0
  %4612 = vmatprep.subr.bf16.mxu0 0
  %4613 = vmatpush1.bf16.msra.mxu0 0
  %4614 = vmatprep.subr.bf16.mxu0 0
  %4615 = vmatpush1.bf16.msra.mxu0 0
  %4616 = vmatprep.subr.bf16.mxu0 0
  %4617 = vmatpush1.bf16.msra.mxu0 0
  %4618 = vmatprep.subr.bf16.mxu0 0
  %4619 = vmatpush1.bf16.msra.mxu0 0
  %4620 = vmatprep.subr.bf16.mxu0 0
  %4621 = vmatpush1.bf16.msra.mxu0 0
  %4622 = vmatprep.subr.bf16.mxu0 0
  %4623 = vmatpush1.bf16.msra.mxu0 0
  %4624 = vmatprep.subr.bf16.mxu0 0
  %4625 = vmatpush1.bf16.msra.mxu0 0
  %4626 = vmatprep.subr.bf16.mxu0 0
  %4627 = vmatpush1.bf16.msra.mxu0 0
  %4628 = vmatprep.subr.bf16.mxu0 0
  %4629 = vmatpush1.bf16.msra.mxu0 0
  %4630 = vmatprep.subr.bf16.mxu0 0
  %4631 = vmatpush1.bf16.msra.mxu0 0
  %4632 = vmatprep.mubr.bf16.mxu0 0
  %4633 = vmatmul.mubr.bf16.gmra.mrb[0].mxu0 %v4595
  %v4634 = vpop.f32.mrb[0].mxu0
  %v4635 = vadd.f32 0.0, %v4634
  %v4636 = vpop.f32.mrb[0].mxu0
  %v4637 = vpop.f32.mrb[0].mxu0
  %v4638 = vpop.f32.mrb[0].mxu0
  %4639 = vdwg.mxu0
  %v4640 = vadd.f32 %v4583, %v4635
  %v4641 = vld [vmem:[#allocation4 + $0x70] sm:$0xff]
  %v4642 = vpack.c.bf16 %v4641, %v4641
  %s4643 = scalar_lea.vmem %s5, 112
  %v4644 = vld [vmem:[%s4643] sm:$0xf]
  %v4645 = vld [vmem:[%s4643 + $0x4] sm:$0x3]
  %v4648 = vunpack.c.l.b16 %v4644
  %v4649 = vunpack.c.l.b16 %v4645
  %v4650 = vpack.c.b16 %v4649, %v4648
  %v4652 = vsel %vm3858, %v4642, 0
  %v4655 = vsel %vm3862, %v4650, 0
  %4657 = vmatprep.subr.bf16.mxu0 0
  %4658 = vmatpush1.bf16.msra.mxu0 %v4655
  %4659 = vmatprep.subr.bf16.mxu0 0
  %4660 = vmatpush1.bf16.msra.mxu0 0
  %4661 = vmatprep.subr.bf16.mxu0 0
  %4662 = vmatpush1.bf16.msra.mxu0 0
  %4663 = vmatprep.subr.bf16.mxu0 0
  %4664 = vmatpush1.bf16.msra.mxu0 0
  %4665 = vmatprep.subr.bf16.mxu0 0
  %4666 = vmatpush1.bf16.msra.mxu0 0
  %4667 = vmatprep.subr.bf16.mxu0 0
  %4668 = vmatpush1.bf16.msra.mxu0 0
  %4669 = vmatprep.subr.bf16.mxu0 0
  %4670 = vmatpush1.bf16.msra.mxu0 0
  %4671 = vmatprep.subr.bf16.mxu0 0
  %4672 = vmatpush1.bf16.msra.mxu0 0
  %4673 = vmatprep.subr.bf16.mxu0 0
  %4674 = vmatpush1.bf16.msra.mxu0 0
  %4675 = vmatprep.subr.bf16.mxu0 0
  %4676 = vmatpush1.bf16.msra.mxu0 0
  %4677 = vmatprep.subr.bf16.mxu0 0
  %4678 = vmatpush1.bf16.msra.mxu0 0
  %4679 = vmatprep.subr.bf16.mxu0 0
  %4680 = vmatpush1.bf16.msra.mxu0 0
  %4681 = vmatprep.subr.bf16.mxu0 0
  %4682 = vmatpush1.bf16.msra.mxu0 0
  %4683 = vmatprep.subr.bf16.mxu0 0
  %4684 = vmatpush1.bf16.msra.mxu0 0
  %4685 = vmatprep.subr.bf16.mxu0 0
  %4686 = vmatpush1.bf16.msra.mxu0 0
  %4687 = vmatprep.subr.bf16.mxu0 0
  %4688 = vmatpush1.bf16.msra.mxu0 0
  %4689 = vmatprep.mubr.bf16.mxu0 0
  %4690 = vmatmul.mubr.bf16.gmra.mrb[0].mxu0 %v4652
  %v4691 = vpop.f32.mrb[0].mxu0
  %v4692 = vadd.f32 0.0, %v4691
  %v4693 = vpop.f32.mrb[0].mxu0
  %v4694 = vpop.f32.mrb[0].mxu0
  %v4695 = vpop.f32.mrb[0].mxu0
  %4696 = vdwg.mxu0
  %v4697 = vadd.f32 %v4640, %v4692
  %v4698 = vld [vmem:[#allocation4 + $0x78] sm:$0xff]
  %v4699 = vpack.c.bf16 %v4698, %v4698
  %s4700 = scalar_lea.vmem %s5, 120
  %v4701 = vld [vmem:[%s4700] sm:$0xf]
  %v4702 = vld [vmem:[%s4700 + $0x4] sm:$0x3]
  %v4705 = vunpack.c.l.b16 %v4701
  %v4706 = vunpack.c.l.b16 %v4702
  %v4707 = vpack.c.b16 %v4706, %v4705
  %v4709 = vsel %vm3858, %v4699, 0
  %v4712 = vsel %vm3862, %v4707, 0
  %4714 = vmatprep.subr.bf16.mxu0 0
  %4715 = vmatpush1.bf16.msra.mxu0 %v4712
  %4716 = vmatprep.subr.bf16.mxu0 0
  %4717 = vmatpush1.bf16.msra.mxu0 0
  %4718 = vmatprep.subr.bf16.mxu0 0
  %4719 = vmatpush1.bf16.msra.mxu0 0
  %4720 = vmatprep.subr.bf16.mxu0 0
  %4721 = vmatpush1.bf16.msra.mxu0 0
  %4722 = vmatprep.subr.bf16.mxu0 0
  %4723 = vmatpush1.bf16.msra.mxu0 0
  %4724 = vmatprep.subr.bf16.mxu0 0
  %4725 = vmatpush1.bf16.msra.mxu0 0
  %4726 = vmatprep.subr.bf16.mxu0 0
  %4727 = vmatpush1.bf16.msra.mxu0 0
  %4728 = vmatprep.subr.bf16.mxu0 0
  %4729 = vmatpush1.bf16.msra.mxu0 0
  %4730 = vmatprep.subr.bf16.mxu0 0
  %4731 = vmatpush1.bf16.msra.mxu0 0
  %4732 = vmatprep.subr.bf16.mxu0 0
  %4733 = vmatpush1.bf16.msra.mxu0 0
  %4734 = vmatprep.subr.bf16.mxu0 0
  %4735 = vmatpush1.bf16.msra.mxu0 0
  %4736 = vmatprep.subr.bf16.mxu0 0
  %4737 = vmatpush1.bf16.msra.mxu0 0
  %4738 = vmatprep.subr.bf16.mxu0 0
  %4739 = vmatpush1.bf16.msra.mxu0 0
  %4740 = vmatprep.subr.bf16.mxu0 0
  %4741 = vmatpush1.bf16.msra.mxu0 0
  %4742 = vmatprep.subr.bf16.mxu0 0
  %4743 = vmatpush1.bf16.msra.mxu0 0
  %4744 = vmatprep.subr.bf16.mxu0 0
  %4745 = vmatpush1.bf16.msra.mxu0 0
  %4746 = vmatprep.mubr.bf16.mxu0 0
  %4747 = vmatmul.mubr.bf16.gmra.mrb[0].mxu0 %v4709
  %v4748 = vpop.f32.mrb[0].mxu0
  %v4749 = vadd.f32 0.0, %v4748
  %v4750 = vpop.f32.mrb[0].mxu0
  %v4751 = vpop.f32.mrb[0].mxu0
  %v4752 = vpop.f32.mrb[0].mxu0
  %4753 = vdwg.mxu0
  %v4754 = vadd.f32 %v4697, %v4749
  %v4755 = vld [vmem:[%s6] sm:$0x1]
  %v4757 = vlaneseq
  %v4758 = vshrl.u32 %v4757, 7
  %v4759 = vsub.s32 0, %v4758
  %v4760 = vrot.slane %v4755, %v4759
  %v4762 = vadd.f32 %v4754, %v4760
  %v4763 = vmax.f32 %v4762, 0.0
  %v4764 = vpack.c.bf16 %v4763, %v4763
  %v4765 = vld [vmem:[%s7] sm:$0xf]
  %v4766 = vld [vmem:[%s7 + $0x4] sm:$0xf]
  %v4767 = vld [vmem:[%s7 + $0x8] sm:$0xf]
  %v4768 = vld [vmem:[%s7 + $0xc] sm:$0xf]
  %v4769 = vld [vmem:[%s7 + $0x10] sm:$0xf]
  %v4770 = vld [vmem:[%s7 + $0x14] sm:$0xf]
  %v4771 = vld [vmem:[%s7 + $0x18] sm:$0xf]
  %v4772 = vld [vmem:[%s7 + $0x1c] sm:$0xf]
  %v4773 = vld [vmem:[%s7 + $0x20] sm:$0xf]
  %v4774 = vld [vmem:[%s7 + $0x24] sm:$0xf]
  %v4775 = vld [vmem:[%s7 + $0x28] sm:$0xf]
  %v4776 = vld [vmem:[%s7 + $0x2c] sm:$0xf]
  %v4777 = vld [vmem:[%s7 + $0x30] sm:$0xf]
  %v4778 = vld [vmem:[%s7 + $0x34] sm:$0xf]
  %v4779 = vld [vmem:[%s7 + $0x38] sm:$0xf]
  %v4780 = vld [vmem:[%s8] sm:$0x1]
  %v4782 = vlaneseq
  %v4783 = vshrl.u32 %v4782, 7
  %v4784 = vsub.s32 0, %v4783
  %v4785 = vrot.slane %v4780, %v4784
  %v4802 = vunpack.c.l.b16 %v4765
  %v4803 = vunpack.c.l.b16 %v4766
  %v4804 = vunpack.c.l.b16 %v4767
  %v4805 = vunpack.c.l.b16 %v4768
  %v4806 = vunpack.c.l.b16 %v4769
  %v4807 = vunpack.c.l.b16 %v4770
  %v4808 = vunpack.c.l.b16 %v4771
  %v4809 = vunpack.c.l.b16 %v4772
  %v4810 = vunpack.c.l.b16 %v4773
  %v4811 = vunpack.c.l.b16 %v4774
  %v4812 = vunpack.c.l.b16 %v4775
  %v4813 = vunpack.c.l.b16 %v4776
  %v4814 = vunpack.c.l.b16 %v4777
  %v4815 = vunpack.c.l.b16 %v4778
  %v4816 = vunpack.c.l.b16 %v4779
  %v4817 = vpack.c.b16 %v4803, %v4802
  %v4818 = vpack.c.b16 %v4805, %v4804
  %v4819 = vpack.c.b16 %v4807, %v4806
  %v4820 = vpack.c.b16 %v4809, %v4808
  %v4821 = vpack.c.b16 %v4811, %v4810
  %v4822 = vpack.c.b16 %v4813, %v4812
  %v4823 = vpack.c.b16 %v4815, %v4814
  %v4824 = vpack.c.b16 %v4816, %v4816
  %vm4832 = vcmask 982016
  %v4834 = vsel %vm4832, %v4764, 0
  %vm4836 = vcmask 1043456
  %v4838 = vsel %vm4836, %v4824, 0
  %4840 = vmatprep.subr.bf16.mxu0 0
  %4841 = vmatpush1.bf16.msra.mxu0 %v4817
  %4842 = vmatprep.subr.bf16.mxu0 0
  %4843 = vmatpush1.bf16.msra.mxu0 %v4818
  %4844 = vmatprep.subr.bf16.mxu0 0
  %4845 = vmatpush1.bf16.msra.mxu0 %v4819
  %4846 = vmatprep.subr.bf16.mxu0 0
  %4847 = vmatpush1.bf16.msra.mxu0 %v4820
  %4848 = vmatprep.subr.bf16.mxu0 0
  %4849 = vmatpush1.bf16.msra.mxu0 %v4821
  %4850 = vmatprep.subr.bf16.mxu0 0
  %4851 = vmatpush1.bf16.msra.mxu0 %v4822
  %4852 = vmatprep.subr.bf16.mxu0 0
  %4853 = vmatpush1.bf16.msra.mxu0 %v4823
  %4854 = vmatprep.subr.bf16.mxu0 0
  %4855 = vmatpush1.bf16.msra.mxu0 %v4838
  %4856 = vmatprep.subr.bf16.mxu0 0
  %4857 = vmatpush1.bf16.msra.mxu0 0
  %4858 = vmatprep.subr.bf16.mxu0 0
  %4859 = vmatpush1.bf16.msra.mxu0 0
  %4860 = vmatprep.subr.bf16.mxu0 0
  %4861 = vmatpush1.bf16.msra.mxu0 0
  %4862 = vmatprep.subr.bf16.mxu0 0
  %4863 = vmatpush1.bf16.msra.mxu0 0
  %4864 = vmatprep.subr.bf16.mxu0 0
  %4865 = vmatpush1.bf16.msra.mxu0 0
  %4866 = vmatprep.subr.bf16.mxu0 0
  %4867 = vmatpush1.bf16.msra.mxu0 0
  %4868 = vmatprep.subr.bf16.mxu0 0
  %4869 = vmatpush1.bf16.msra.mxu0 0
  %4870 = vmatprep.subr.bf16.mxu0 0
  %4871 = vmatpush1.bf16.msra.mxu0 0
  %4872 = vmatprep.mubr.bf16.mxu0 0
  %4873 = vmatmul.mubr.bf16.gmra.mrb[0].mxu0 %v4834
  %v4874 = vpop.f32.mrb[0].mxu0
  %v4875 = vadd.f32 %v4785, %v4874
  %v4876 = vpop.f32.mrb[0].mxu0
  %v4877 = vpop.f32.mrb[0].mxu0
  %v4878 = vpop.f32.mrb[0].mxu0
  %4879 = vdwg.mxu0
  %v4880 = vmax.f32 %v4875, 0.0
  %v4881 = vpack.c.bf16 %v4880, %v4880
  %v4882 = vld [vmem:[%s9] sm:$0xf]
  %v4883 = vld [vmem:[%s9 + $0x4] sm:$0xf]
  %v4884 = vld [vmem:[%s9 + $0x8] sm:$0xf]
  %v4885 = vld [vmem:[%s9 + $0xc] sm:$0xf]
  %v4886 = vld [vmem:[%s9 + $0x10] sm:$0xf]
  %v4887 = vld [vmem:[%s9 + $0x14] sm:$0xf]
  %v4888 = vld [vmem:[%s9 + $0x18] sm:$0xf]
  %v4889 = vld [vmem:[%s9 + $0x1c] sm:$0x3]
  %v4890 = vld [vmem:[%s10] sm:$0x1]
  %v4892 = vlaneseq
  %v4893 = vshrl.u32 %v4892, 7
  %v4894 = vsub.s32 0, %v4893
  %v4895 = vrot.slane %v4890, %v4894
  %v4905 = vunpack.c.l.b16 %v4882
  %v4906 = vunpack.c.l.b16 %v4883
  %v4907 = vunpack.c.l.b16 %v4884
  %v4908 = vunpack.c.l.b16 %v4885
  %v4909 = vunpack.c.l.b16 %v4886
  %v4910 = vunpack.c.l.b16 %v4887
  %v4911 = vunpack.c.l.b16 %v4888
  %v4912 = vunpack.c.l.b16 %v4889
  %v4913 = vpack.c.b16 %v4906, %v4905
  %v4914 = vpack.c.b16 %v4908, %v4907
  %v4915 = vpack.c.b16 %v4910, %v4909
  %v4916 = vpack.c.b16 %v4912, %v4911
  %vm4920 = vcmask 490496
  %v4922 = vsel %vm4920, %v4881, 0
  %v4925 = vsel %vm3862, %v4916, 0
  %4927 = vmatprep.subr.bf16.mxu0 0
  %4928 = vmatpush1.bf16.msra.mxu0 %v4913
  %4929 = vmatprep.subr.bf16.mxu0 0
  %4930 = vmatpush1.bf16.msra.mxu0 %v4914
  %4931 = vmatprep.subr.bf16.mxu0 0
  %4932 = vmatpush1.bf16.msra.mxu0 %v4915
  %4933 = vmatprep.subr.bf16.mxu0 0
  %4934 = vmatpush1.bf16.msra.mxu0 %v4925
  %4935 = vmatprep.subr.bf16.mxu0 0
  %4936 = vmatpush1.bf16.msra.mxu0 0
  %4937 = vmatprep.subr.bf16.mxu0 0
  %4938 = vmatpush1.bf16.msra.mxu0 0
  %4939 = vmatprep.subr.bf16.mxu0 0
  %4940 = vmatpush1.bf16.msra.mxu0 0
  %4941 = vmatprep.subr.bf16.mxu0 0
  %4942 = vmatpush1.bf16.msra.mxu0 0
  %4943 = vmatprep.subr.bf16.mxu0 0
  %4944 = vmatpush1.bf16.msra.mxu0 0
  %4945 = vmatprep.subr.bf16.mxu0 0
  %4946 = vmatpush1.bf16.msra.mxu0 0
  %4947 = vmatprep.subr.bf16.mxu0 0
  %4948 = vmatpush1.bf16.msra.mxu0 0
  %4949 = vmatprep.subr.bf16.mxu0 0
  %4950 = vmatpush1.bf16.msra.mxu0 0
  %4951 = vmatprep.subr.bf16.mxu0 0
  %4952 = vmatpush1.bf16.msra.mxu0 0
  %4953 = vmatprep.subr.bf16.mxu0 0
  %4954 = vmatpush1.bf16.msra.mxu0 0
  %4955 = vmatprep.subr.bf16.mxu0 0
  %4956 = vmatpush1.bf16.msra.mxu0 0
  %4957 = vmatprep.subr.bf16.mxu0 0
  %4958 = vmatpush1.bf16.msra.mxu0 0
  %4959 = vmatprep.mubr.bf16.mxu0 0
  %4960 = vmatmul.mubr.bf16.gmra.mrb[0].mxu0 %v4922
  %v4961 = vpop.f32.mrb[0].mxu0
  %v4962 = vadd.f32 %v4895, %v4961
  %v4963 = vpop.f32.mrb[0].mxu0
  %v4964 = vpop.f32.mrb[0].mxu0
  %v4965 = vpop.f32.mrb[0].mxu0
  %4966 = vdwg.mxu0
  %vm4967 = vcmask 80896
  %4968 = vst.msk [vmem:[%s11] sm:$0xff] %vm4967, %v4962
  // Predicated region
  $region53: #{network_forward.1} parent=0 // pred_check
    _
  $region54: #{network_forward.1} parent=0 // pred_check_branch
    %4970 = sbr.rel (0) target = $region56
  $region55: #{network_forward.1} parent=0 // pred_region
    _
  $region56: #{network_forward.1} parent=0 // pred_fallthru
    _
  // Predicated region
  $region57: #{network_forward.1} parent=0 // pred_check
    _
  $region58: #{network_forward.1} parent=0 // pred_check_branch
    %4972 = sbr.rel (0) target = $region60
  $region59: #{network_forward.1} parent=0 // pred_region
    _
  $region60: #{network_forward.1} parent=0 // pred_fallthru
    _

</llo_original>
